<compile_context>
chip_gen: v6e
topology: v6e:2x2x1
jax: 0.10.0
libtpu: 0.0.40
codegen_flags: <defaults>
</compile_context>

<pallas_src>
import functools

import numpy as np

import jax
import jax.numpy as jnp
from jax import lax
from jax.experimental import pallas as pl
from jax.experimental.pallas import tpu as pltpu


# -----------------------------------------------------------------------------
# In-kernel helpers
# -----------------------------------------------------------------------------
def _tap_select(n_out, n_in, k, transposed):
    """Constant 0/1 selection matrix for one tap of a stride-2 / pad-1 (de)conv."""
    r = lax.broadcasted_iota(jnp.int32, (n_out, n_in), 0)
    c = lax.broadcasted_iota(jnp.int32, (n_out, n_in), 1)
    if transposed:
        # ConvTranspose1d: output j receives input l through tap k iff j == 2l + k - 1.
        return (r == 2 * c + (k - 1)).astype(jnp.float32)
    # Conv1d: output l reads input position 2l + k - 1 (out-of-range -> zero pad).
    return (c == 2 * r + (k - 1)).astype(jnp.float32)


def _conv_like(a, w_ref, b_ref, cin, lout, transposed, act):
    """Stride-2 / pad-1 / K=4 Conv1d (or ConvTranspose1d) in (L, C) layout.

    a     : (lin, cin) activation value (VMEM resident)
    w_ref : (4*cin, cout) packed weight ref, rows ordered tap-major / cin-minor
    b_ref : (1, cout) bias ref
    """
    cout = b_ref.shape[1]
    acc = jnp.zeros((lout, cout), jnp.float32)
    for k in range(4):
        sel = _tap_select(lout, a.shape[0], k, transposed)       # (lout, lin) const
        wk = w_ref[k * cin:(k + 1) * cin, :]                     # (cin, cout)
        if cin == 1:
            # Tiny contraction: fold the weight with a VPU broadcast-multiply,
            # then one gather-matmul on the MXU.
            acc = acc + jnp.dot(sel, a * wk, preferred_element_type=jnp.float32)
        else:
            t = jnp.dot(sel, a, preferred_element_type=jnp.float32)       # (lout, cin)
            acc = acc + jnp.dot(t, wk, preferred_element_type=jnp.float32)
    acc = acc + b_ref[...]
    if act == "relu":
        acc = jnp.maximum(acc, 0.0)
    elif act == "tanh":
        acc = jnp.tanh(acc)
    return acc


def _vae_kernel(x_ref, eps_ref,
                w1_ref, b1_ref, w2_ref, b2_ref,
                wlat_ref, blat_ref, wdec_ref, bdec_ref,
                wd1_ref, bd1_ref, wd2_ref, bd2_ref,
                recon_ref, mu_ref, logvar_ref):
    """Entire VAE forward for ONE batch element (grid axis = batch)."""
    x = x_ref[0]                        # (L, 1)   (length, channel) layout
    L = x.shape[0]
    l1, l2 = L // 2, L // 4
    c1 = b1_ref.shape[1]                # 32
    c2 = b2_ref.shape[1]                # 64
    dc1 = bd1_ref.shape[1]              # 32
    latent = eps_ref.shape[2]

    # ---------------- encoder ----------------
    y1 = _conv_like(x, w1_ref, b1_ref, cin=1, lout=l1,
                    transposed=False, act="relu")                 # (L/2, 32)
    y2 = _conv_like(y1, w2_ref, b2_ref, cin=c1, lout=l2,
                    transposed=False, act="relu")                 # (L/4, 64)

    # Flatten (VMEM resident; fc weight columns were pre-permuted to this order).
    h = jnp.concatenate([y2[l:l + 1, :] for l in range(l2)], axis=1)   # (1, 64*L/4)

    # ---------------- fused latent heads + reparameterization ----------------
    mu_lv = jnp.dot(h, wlat_ref[...],
                    preferred_element_type=jnp.float32) + blat_ref[...]   # (1, 2*latent)
    mu = mu_lv[:, :latent]
    logvar = mu_lv[:, latent:]
    z = mu + eps_ref[0] * jnp.exp(0.5 * logvar)                           # (1, latent)

    # ---------------- decoder ----------------
    h2 = jnp.dot(z, wdec_ref[...],
                 preferred_element_type=jnp.float32) + bdec_ref[...]      # (1, 64*L/4)
    h2 = jnp.concatenate([h2[:, l * c2:(l + 1) * c2] for l in range(l2)],
                         axis=0)                                          # (L/4, 64)

    d1 = _conv_like(h2, wd1_ref, bd1_ref, cin=c2, lout=l1,
                    transposed=True, act="relu")                  # (L/2, 32)
    y = _conv_like(d1, wd2_ref, bd2_ref, cin=dc1, lout=L,
                   transposed=True, act="tanh")                   # (L, 1)

    recon_ref[0] = y
    mu_ref[0] = mu
    logvar_ref[0] = logvar


# -----------------------------------------------------------------------------
# Wrapper: single pallas_call, gridded over batch
# -----------------------------------------------------------------------------
def vae_forward(packed, x, eps):
    """x: (B, 1, L) f32, eps: (B, latent) f32 -> (recon (B,1,L), mu, logvar)."""
    B, _, L = x.shape
    latent = eps.shape[-1]
    x_t = jnp.transpose(x, (0, 2, 1))           # (B, L, 1) -> (length, channel) layout
    eps3 = eps.reshape(B, 1, latent)

    weight_names = ("w1", "b1", "w2", "b2", "wlat", "blat",
                    "wdec", "bdec", "wd1", "bd1", "wd2", "bd2")
    weights = [packed[k] for k in weight_names]

    def full2d(arr):
        return pl.BlockSpec(arr.shape, lambda b: (0, 0))

    recon_t, mu3, lv3 = pl.pallas_call(
        _vae_kernel,
        grid=(B,),
        in_specs=[pl.BlockSpec((1, L, 1), lambda b: (b, 0, 0)),
                  pl.BlockSpec((1, 1, latent), lambda b: (b, 0, 0))]
                 + [full2d(w) for w in weights],
        out_specs=[pl.BlockSpec((1, L, 1), lambda b: (b, 0, 0)),
                   pl.BlockSpec((1, 1, latent), lambda b: (b, 0, 0)),
                   pl.BlockSpec((1, 1, latent), lambda b: (b, 0, 0))],
        out_shape=(jax.ShapeDtypeStruct((B, L, 1), jnp.float32),
                   jax.ShapeDtypeStruct((B, 1, latent), jnp.float32),
                   jax.ShapeDtypeStruct((B, 1, latent), jnp.float32)),
        compiler_params=pltpu.CompilerParams(
            dimension_semantics=("parallel",)),
    )(x_t, eps3, *weights)

    recon = jnp.transpose(recon_t, (0, 2, 1))
    return recon, mu3.reshape(B, latent), lv3.reshape(B, latent)


# -----------------------------------------------------------------------------
# Parameters: PyTorch-layout init + one-time packing into kernel layout
# -----------------------------------------------------------------------------
def init_torch_params(key, input_length, latent_dim):
    enc_size = (input_length // 4) * 64
    ks = jax.random.split(key, 14)
    s = 0.05

    def w(k, shape):
        return (s * jax.random.normal(k, shape)).astype(jnp.float32)

    return {
        "conv1_w": w(ks[0], (32, 1, 4)),  "conv1_b": w(ks[1], (32,)),
        "conv2_w": w(ks[2], (64, 32, 4)), "conv2_b": w(ks[3], (64,)),
        "fc_mu_w": w(ks[4], (latent_dim, enc_size)),  "fc_mu_b": w(ks[5], (latent_dim,)),
        "fc_lv_w": w(ks[6], (latent_dim, enc_size)),  "fc_lv_b": w(ks[7], (latent_dim,)),
        "fc_dec_w": w(ks[8], (enc_size, latent_dim)), "fc_dec_b": w(ks[9], (enc_size,)),
        "deconv1_w": w(ks[10], (64, 32, 4)), "deconv1_b": w(ks[11], (32,)),
        "deconv2_w": w(ks[12], (32, 1, 4)),  "deconv2_b": w(ks[13], (1,)),
    }


def pack_params(tp, input_length, latent_dim):
    """One-time re-layout of PyTorch weights into the matmul-ready kernel layout."""
    l4 = input_length // 4
    c2 = 64

    def pack_conv(w):        # (cout, cin, K) -> (K*cin, cout), rows k*cin+ci
        cout, cin, K = w.shape
        return jnp.transpose(w, (2, 1, 0)).reshape(K * cin, cout)

    def pack_deconv(w):      # (cin, cout, K) -> (K*cin, cout), rows k*cin+ci
        cin, cout, K = w.shape
        return jnp.transpose(w, (2, 0, 1)).reshape(K * cin, cout)

    def pack_fc_in(w):       # (out, c2*l4) [cols c*l4+l] -> (l4*c2, out) [rows l*c2+c]
        o = w.shape[0]
        return jnp.transpose(w.reshape(o, c2, l4), (2, 1, 0)).reshape(l4 * c2, o)

    wlat = jnp.concatenate([pack_fc_in(tp["fc_mu_w"]),
                            pack_fc_in(tp["fc_lv_w"])], axis=1)          # (enc, 2*latent)
    blat = jnp.concatenate([tp["fc_mu_b"], tp["fc_lv_b"]]).reshape(1, -1)

    wdec = jnp.transpose(
        jnp.transpose(tp["fc_dec_w"].reshape(c2, l4, latent_dim), (1, 0, 2))
        .reshape(l4 * c2, latent_dim))                                    # (latent, enc), cols l*c2+c
    bdec = jnp.transpose(tp["fc_dec_b"].reshape(c2, l4)).reshape(1, l4 * c2)

    return {
        "w1": pack_conv(tp["conv1_w"]), "b1": tp["conv1_b"].reshape(1, -1),
        "w2": pack_conv(tp["conv2_w"]), "b2": tp["conv2_b"].reshape(1, -1),
        "wlat": wlat, "blat": blat,
        "wdec": wdec, "bdec": bdec,
        "wd1": pack_deconv(tp["deconv1_w"]), "bd1": tp["deconv1_b"].reshape(1, -1),
        "wd2": pack_deconv(tp["deconv2_w"]), "bd2": tp["deconv2_b"].reshape(1, -1),
    }


# -----------------------------------------------------------------------------
# Pure-JAX reference (PyTorch semantics) for a correctness cross-check
# -----------------------------------------------------------------------------
def reference_forward(tp, x, eps, input_length):
    hp = jax.lax.Precision.HIGHEST

    def conv1d(x, w, b):             # x:(B,Cin,L)  w:(Cout,Cin,K)  stride 2, pad 1
        K = w.shape[-1]
        xp = jnp.pad(x, ((0, 0), (0, 0), (1, 1)))
        lout = (x.shape[-1] + 2 - K) // 2 + 1
        cols = [jnp.einsum("bik,oik->bo", xp[:, :, 2 * l:2 * l + K], w, precision=hp)
                for l in range(lout)]
        return jnp.stack(cols, axis=-1) + b[None, :, None]

    def deconv1d(x, w, b):           # x:(B,Cin,L)  w:(Cin,Cout,K)  stride 2, pad 1
        B, Cin, L = x.shape
        K = w.shape[-1]
        full = jnp.zeros((B, w.shape[1], (L - 1) * 2 + K), jnp.float32)
        for l in range(L):
            full = full.at[:, :, 2 * l:2 * l + K].add(
                jnp.einsum("bi,iok->bok", x[:, :, l], w, precision=hp))
        return full[:, :, 1:1 + 2 * L] + b[None, :, None]

    B = x.shape[0]
    h = jax.nn.relu(conv1d(x, tp["conv1_w"], tp["conv1_b"]))
    h = jax.nn.relu(conv1d(h, tp["conv2_w"], tp["conv2_b"]))
    hf = h.reshape(B, -1)
    mu = jnp.dot(hf, tp["fc_mu_w"].T, precision=hp) + tp["fc_mu_b"]
    logvar = jnp.dot(hf, tp["fc_lv_w"].T, precision=hp) + tp["fc_lv_b"]
    z = mu + eps * jnp.exp(0.5 * logvar)
    h2 = jnp.dot(z, tp["fc_dec_w"].T, precision=hp) + tp["fc_dec_b"]
    h2 = h2.reshape(B, 64, input_length // 4)
    d = jax.nn.relu(deconv1d(h2, tp["deconv1_w"], tp["deconv1_b"]))
    recon = jnp.tanh(deconv1d(d, tp["deconv2_w"], tp["deconv2_b"]))
    return recon, mu, logvar


# -----------------------------------------------------------------------------
if __name__ == "__main__":
    INPUT_LENGTH = 16
    LATENT_DIM = 16
    BATCH = 2

    key = jax.random.PRNGKey(0)
    k_params, k_x, k_eps = jax.random.split(key, 3)

    torch_params = init_torch_params(k_params, INPUT_LENGTH, LATENT_DIM)
    packed = pack_params(torch_params, INPUT_LENGTH, LATENT_DIM)

    x = jax.random.normal(k_x, (BATCH, 1, INPUT_LENGTH), dtype=jnp.float32)
    # Reparameterization noise is supplied externally for determinism.
    eps = jax.random.normal(k_eps, (BATCH, LATENT_DIM), dtype=jnp.float32)

    fwd = jax.jit(vae_forward)
    recon, mu, logvar = fwd(packed, x, eps)
    jax.block_until_ready((recon, mu, logvar))

    assert recon.shape == (BATCH, 1, INPUT_LENGTH)
    assert mu.shape == (BATCH, LATENT_DIM)
    assert logvar.shape == (BATCH, LATENT_DIM)

    # Cross-check the fused Pallas kernel against a pure-JAX reference.
    r_ref, mu_r, lv_r = reference_forward(torch_params, x, eps, INPUT_LENGTH)
    np.testing.assert_allclose(np.asarray(mu), np.asarray(mu_r), atol=5e-3, rtol=5e-3)
    np.testing.assert_allclose(np.asarray(logvar), np.asarray(lv_r), atol=5e-3, rtol=5e-3)
    np.testing.assert_allclose(np.asarray(recon), np.asarray(r_ref), atol=5e-3, rtol=5e-3)

    print("KERNEL_OK")
</pallas_src>

<mosaic_0001>
module attributes {stable_mosaic.version = 11 : i64} {
  func.func @_vae_kernel(%arg0: i32, %arg1: memref<1x16x1xf32, #tpu.memory_space<vmem>>, %arg2: memref<1x1x16xf32, #tpu.memory_space<vmem>>, %arg3: memref<4x32xf32, #tpu.memory_space<vmem>>, %arg4: memref<1x32xf32, #tpu.memory_space<vmem>>, %arg5: memref<128x64xf32, #tpu.memory_space<vmem>>, %arg6: memref<1x64xf32, #tpu.memory_space<vmem>>, %arg7: memref<256x32xf32, #tpu.memory_space<vmem>>, %arg8: memref<1x32xf32, #tpu.memory_space<vmem>>, %arg9: memref<16x256xf32, #tpu.memory_space<vmem>>, %arg10: memref<1x256xf32, #tpu.memory_space<vmem>>, %arg11: memref<256x32xf32, #tpu.memory_space<vmem>>, %arg12: memref<1x32xf32, #tpu.memory_space<vmem>>, %arg13: memref<128x1xf32, #tpu.memory_space<vmem>>, %arg14: memref<1x1xf32, #tpu.memory_space<vmem>>, %arg15: memref<1x16x1xf32, #tpu.memory_space<vmem>>, %arg16: memref<1x1x16xf32, #tpu.memory_space<vmem>>, %arg17: memref<1x1x16xf32, #tpu.memory_space<vmem>>) attributes {dimension_semantics = [#tpu.dimension_semantics<parallel>], iteration_bounds = array<i64: 2>, scalar_prefetch = 0 : i64, scratch_operands = 0 : i64, tpu.core_type = #tpu.core_type<tc>, window_params = [{transform_indices = @transform_0, window_bounds = array<i64: 1, 16, 1>}, {transform_indices = @transform_1, window_bounds = array<i64: 1, 1, 16>}, {pipeline_mode = #tpu.pipeline_mode<synchronous>, transform_indices = @transform_2, window_bounds = array<i64: 4, 32>}, {pipeline_mode = #tpu.pipeline_mode<synchronous>, transform_indices = @transform_3, window_bounds = array<i64: 1, 32>}, {pipeline_mode = #tpu.pipeline_mode<synchronous>, transform_indices = @transform_4, window_bounds = array<i64: 128, 64>}, {pipeline_mode = #tpu.pipeline_mode<synchronous>, transform_indices = @transform_5, window_bounds = array<i64: 1, 64>}, {pipeline_mode = #tpu.pipeline_mode<synchronous>, transform_indices = @transform_6, window_bounds = array<i64: 256, 32>}, {pipeline_mode = #tpu.pipeline_mode<synchronous>, transform_indices = @transform_7, window_bounds = array<i64: 1, 32>}, {pipeline_mode = #tpu.pipeline_mode<synchronous>, transform_indices = @transform_8, window_bounds = array<i64: 16, 256>}, {pipeline_mode = #tpu.pipeline_mode<synchronous>, transform_indices = @transform_9, window_bounds = array<i64: 1, 256>}, {pipeline_mode = #tpu.pipeline_mode<synchronous>, transform_indices = @transform_10, window_bounds = array<i64: 256, 32>}, {pipeline_mode = #tpu.pipeline_mode<synchronous>, transform_indices = @transform_11, window_bounds = array<i64: 1, 32>}, {pipeline_mode = #tpu.pipeline_mode<synchronous>, transform_indices = @transform_12, window_bounds = array<i64: 128, 1>}, {pipeline_mode = #tpu.pipeline_mode<synchronous>, transform_indices = @transform_13, window_bounds = array<i64: 1, 1>}, {transform_indices = @transform_14, window_bounds = array<i64: 1, 16, 1>}, {transform_indices = @transform_15, window_bounds = array<i64: 1, 1, 16>}, {transform_indices = @transform_16, window_bounds = array<i64: 1, 1, 16>}]} {
    %c0 = arith.constant 0 : index
    %c0_0 = arith.constant 0 : index
    %c0_1 = arith.constant 0 : index
    %0 = vector.load %arg1[%c0, %c0_0, %c0_1] : memref<1x16x1xf32, #tpu.memory_space<vmem>>, vector<1x16x1xf32>
    %1 = vector.shape_cast %0 : vector<1x16x1xf32> to vector<16x1xf32>
    %cst = arith.constant 0.000000e+00 : f32
    %2 = vector.broadcast %cst : f32 to vector<8x32xf32>
    %3 = tpu.iota {dimensions = array<i32: 0>} : vector<8x16xi32>
    %4 = tpu.iota {dimensions = array<i32: 1>} : vector<8x16xi32>
    %c2_i32 = arith.constant 2 : i32
    %5 = vector.broadcast %c2_i32 : i32 to vector<8x16xi32>
    %6 = arith.muli %5, %3 : vector<8x16xi32>
    %c-1_i32 = arith.constant -1 : i32
    %7 = vector.broadcast %c-1_i32 : i32 to vector<8x16xi32>
    %8 = arith.addi %6, %7 : vector<8x16xi32>
    %9 = arith.cmpi eq, %4, %8 : vector<8x16xi32>
    %10 = arith.extui %9 : vector<8x16xi1> to vector<8x16xi32>
    %11 = arith.sitofp %10 : vector<8x16xi32> to vector<8x16xf32>
    %c0_2 = arith.constant 0 : index
    %c0_3 = arith.constant 0 : index
    %12 = vector.load %arg3[%c0_2, %c0_3] : memref<4x32xf32, #tpu.memory_space<vmem>>, vector<1x32xf32>
    %13 = vector.broadcast %1 : vector<16x1xf32> to vector<16x32xf32>
    %14 = vector.broadcast %12 : vector<1x32xf32> to vector<16x32xf32>
    %15 = arith.mulf %13, %14 : vector<16x32xf32>
    %cst_4 = arith.constant dense<0.000000e+00> : vector<8x32xf32>
    %16 = tpu.matmul %11, %15, %cst_4 {dimension_numbers = #tpu.dot_dimension_numbers<[1], [0], [0], [1], [0, 0, 1, 1], [], []>} : vector<8x16xf32>, vector<16x32xf32>, vector<8x32xf32> -> vector<8x32xf32>
    %17 = arith.addf %2, %16 : vector<8x32xf32>
    %18 = tpu.iota {dimensions = array<i32: 0>} : vector<8x16xi32>
    %19 = tpu.iota {dimensions = array<i32: 1>} : vector<8x16xi32>
    %c2_i32_5 = arith.constant 2 : i32
    %20 = vector.broadcast %c2_i32_5 : i32 to vector<8x16xi32>
    %21 = arith.muli %20, %18 : vector<8x16xi32>
    %c0_i32 = arith.constant 0 : i32
    %22 = vector.broadcast %c0_i32 : i32 to vector<8x16xi32>
    %23 = arith.addi %21, %22 : vector<8x16xi32>
    %24 = arith.cmpi eq, %19, %23 : vector<8x16xi32>
    %25 = arith.extui %24 : vector<8x16xi1> to vector<8x16xi32>
    %26 = arith.sitofp %25 : vector<8x16xi32> to vector<8x16xf32>
    %c1 = arith.constant 1 : index
    %c0_6 = arith.constant 0 : index
    %27 = vector.load %arg3[%c1, %c0_6] : memref<4x32xf32, #tpu.memory_space<vmem>>, vector<1x32xf32>
    %28 = vector.broadcast %1 : vector<16x1xf32> to vector<16x32xf32>
    %29 = vector.broadcast %27 : vector<1x32xf32> to vector<16x32xf32>
    %30 = arith.mulf %28, %29 : vector<16x32xf32>
    %cst_7 = arith.constant dense<0.000000e+00> : vector<8x32xf32>
    %31 = tpu.matmul %26, %30, %cst_7 {dimension_numbers = #tpu.dot_dimension_numbers<[1], [0], [0], [1], [0, 0, 1, 1], [], []>} : vector<8x16xf32>, vector<16x32xf32>, vector<8x32xf32> -> vector<8x32xf32>
    %32 = arith.addf %17, %31 : vector<8x32xf32>
    %33 = tpu.iota {dimensions = array<i32: 0>} : vector<8x16xi32>
    %34 = tpu.iota {dimensions = array<i32: 1>} : vector<8x16xi32>
    %c2_i32_8 = arith.constant 2 : i32
    %35 = vector.broadcast %c2_i32_8 : i32 to vector<8x16xi32>
    %36 = arith.muli %35, %33 : vector<8x16xi32>
    %c1_i32 = arith.constant 1 : i32
    %37 = vector.broadcast %c1_i32 : i32 to vector<8x16xi32>
    %38 = arith.addi %36, %37 : vector<8x16xi32>
    %39 = arith.cmpi eq, %34, %38 : vector<8x16xi32>
    %40 = arith.extui %39 : vector<8x16xi1> to vector<8x16xi32>
    %41 = arith.sitofp %40 : vector<8x16xi32> to vector<8x16xf32>
    %c2 = arith.constant 2 : index
    %c0_9 = arith.constant 0 : index
    %42 = vector.load %arg3[%c2, %c0_9] : memref<4x32xf32, #tpu.memory_space<vmem>>, vector<1x32xf32>
    %43 = vector.broadcast %1 : vector<16x1xf32> to vector<16x32xf32>
    %44 = vector.broadcast %42 : vector<1x32xf32> to vector<16x32xf32>
    %45 = arith.mulf %43, %44 : vector<16x32xf32>
    %cst_10 = arith.constant dense<0.000000e+00> : vector<8x32xf32>
    %46 = tpu.matmul %41, %45, %cst_10 {dimension_numbers = #tpu.dot_dimension_numbers<[1], [0], [0], [1], [0, 0, 1, 1], [], []>} : vector<8x16xf32>, vector<16x32xf32>, vector<8x32xf32> -> vector<8x32xf32>
    %47 = arith.addf %32, %46 : vector<8x32xf32>
    %48 = tpu.iota {dimensions = array<i32: 0>} : vector<8x16xi32>
    %49 = tpu.iota {dimensions = array<i32: 1>} : vector<8x16xi32>
    %c2_i32_11 = arith.constant 2 : i32
    %50 = vector.broadcast %c2_i32_11 : i32 to vector<8x16xi32>
    %51 = arith.muli %50, %48 : vector<8x16xi32>
    %c2_i32_12 = arith.constant 2 : i32
    %52 = vector.broadcast %c2_i32_12 : i32 to vector<8x16xi32>
    %53 = arith.addi %51, %52 : vector<8x16xi32>
    %54 = arith.cmpi eq, %49, %53 : vector<8x16xi32>
    %55 = arith.extui %54 : vector<8x16xi1> to vector<8x16xi32>
    %56 = arith.sitofp %55 : vector<8x16xi32> to vector<8x16xf32>
    %c3 = arith.constant 3 : index
    %c0_13 = arith.constant 0 : index
    %57 = vector.load %arg3[%c3, %c0_13] : memref<4x32xf32, #tpu.memory_space<vmem>>, vector<1x32xf32>
    %58 = vector.broadcast %1 : vector<16x1xf32> to vector<16x32xf32>
    %59 = vector.broadcast %57 : vector<1x32xf32> to vector<16x32xf32>
    %60 = arith.mulf %58, %59 : vector<16x32xf32>
    %cst_14 = arith.constant dense<0.000000e+00> : vector<8x32xf32>
    %61 = tpu.matmul %56, %60, %cst_14 {dimension_numbers = #tpu.dot_dimension_numbers<[1], [0], [0], [1], [0, 0, 1, 1], [], []>} : vector<8x16xf32>, vector<16x32xf32>, vector<8x32xf32> -> vector<8x32xf32>
    %62 = arith.addf %47, %61 : vector<8x32xf32>
    %c0_15 = arith.constant 0 : index
    %c0_16 = arith.constant 0 : index
    %63 = vector.load %arg4[%c0_15, %c0_16] : memref<1x32xf32, #tpu.memory_space<vmem>>, vector<1x32xf32>
    %64 = vector.broadcast %63 : vector<1x32xf32> to vector<8x32xf32>
    %65 = arith.addf %62, %64 : vector<8x32xf32>
    %cst_17 = arith.constant 0.000000e+00 : f32
    %66 = vector.broadcast %cst_17 : f32 to vector<8x32xf32>
    %67 = arith.maximumf %65, %66 : vector<8x32xf32>
    %cst_18 = arith.constant 0.000000e+00 : f32
    %68 = vector.broadcast %cst_18 : f32 to vector<4x64xf32>
    %69 = tpu.iota {dimensions = array<i32: 0>} : vector<4x8xi32>
    %70 = tpu.iota {dimensions = array<i32: 1>} : vector<4x8xi32>
    %c2_i32_19 = arith.constant 2 : i32
    %71 = vector.broadcast %c2_i32_19 : i32 to vector<4x8xi32>
    %72 = arith.muli %71, %69 : vector<4x8xi32>
    %c-1_i32_20 = arith.constant -1 : i32
    %73 = vector.broadcast %c-1_i32_20 : i32 to vector<4x8xi32>
    %74 = arith.addi %72, %73 : vector<4x8xi32>
    %75 = arith.cmpi eq, %70, %74 : vector<4x8xi32>
    %76 = arith.extui %75 : vector<4x8xi1> to vector<4x8xi32>
    %77 = arith.sitofp %76 : vector<4x8xi32> to vector<4x8xf32>
    %c0_21 = arith.constant 0 : index
    %c0_22 = arith.constant 0 : index
    %78 = vector.load %arg5[%c0_21, %c0_22] : memref<128x64xf32, #tpu.memory_space<vmem>>, vector<32x64xf32>
    %cst_23 = arith.constant dense<0.000000e+00> : vector<4x32xf32>
    %79 = tpu.matmul %77, %67, %cst_23 {dimension_numbers = #tpu.dot_dimension_numbers<[1], [0], [0], [1], [0, 0, 1, 1], [], []>} : vector<4x8xf32>, vector<8x32xf32>, vector<4x32xf32> -> vector<4x32xf32>
    %cst_24 = arith.constant dense<0.000000e+00> : vector<4x64xf32>
    %80 = tpu.matmul %79, %78, %cst_24 {dimension_numbers = #tpu.dot_dimension_numbers<[1], [0], [0], [1], [0, 0, 1, 1], [], []>} : vector<4x32xf32>, vector<32x64xf32>, vector<4x64xf32> -> vector<4x64xf32>
    %81 = arith.addf %68, %80 : vector<4x64xf32>
    %82 = tpu.iota {dimensions = array<i32: 0>} : vector<4x8xi32>
    %83 = tpu.iota {dimensions = array<i32: 1>} : vector<4x8xi32>
    %c2_i32_25 = arith.constant 2 : i32
    %84 = vector.broadcast %c2_i32_25 : i32 to vector<4x8xi32>
    %85 = arith.muli %84, %82 : vector<4x8xi32>
    %c0_i32_26 = arith.constant 0 : i32
    %86 = vector.broadcast %c0_i32_26 : i32 to vector<4x8xi32>
    %87 = arith.addi %85, %86 : vector<4x8xi32>
    %88 = arith.cmpi eq, %83, %87 : vector<4x8xi32>
    %89 = arith.extui %88 : vector<4x8xi1> to vector<4x8xi32>
    %90 = arith.sitofp %89 : vector<4x8xi32> to vector<4x8xf32>
    %c32 = arith.constant 32 : index
    %c0_27 = arith.constant 0 : index
    %91 = vector.load %arg5[%c32, %c0_27] : memref<128x64xf32, #tpu.memory_space<vmem>>, vector<32x64xf32>
    %cst_28 = arith.constant dense<0.000000e+00> : vector<4x32xf32>
    %92 = tpu.matmul %90, %67, %cst_28 {dimension_numbers = #tpu.dot_dimension_numbers<[1], [0], [0], [1], [0, 0, 1, 1], [], []>} : vector<4x8xf32>, vector<8x32xf32>, vector<4x32xf32> -> vector<4x32xf32>
    %cst_29 = arith.constant dense<0.000000e+00> : vector<4x64xf32>
    %93 = tpu.matmul %92, %91, %cst_29 {dimension_numbers = #tpu.dot_dimension_numbers<[1], [0], [0], [1], [0, 0, 1, 1], [], []>} : vector<4x32xf32>, vector<32x64xf32>, vector<4x64xf32> -> vector<4x64xf32>
    %94 = arith.addf %81, %93 : vector<4x64xf32>
    %95 = tpu.iota {dimensions = array<i32: 0>} : vector<4x8xi32>
    %96 = tpu.iota {dimensions = array<i32: 1>} : vector<4x8xi32>
    %c2_i32_30 = arith.constant 2 : i32
    %97 = vector.broadcast %c2_i32_30 : i32 to vector<4x8xi32>
    %98 = arith.muli %97, %95 : vector<4x8xi32>
    %c1_i32_31 = arith.constant 1 : i32
    %99 = vector.broadcast %c1_i32_31 : i32 to vector<4x8xi32>
    %100 = arith.addi %98, %99 : vector<4x8xi32>
    %101 = arith.cmpi eq, %96, %100 : vector<4x8xi32>
    %102 = arith.extui %101 : vector<4x8xi1> to vector<4x8xi32>
    %103 = arith.sitofp %102 : vector<4x8xi32> to vector<4x8xf32>
    %c64 = arith.constant 64 : index
    %c0_32 = arith.constant 0 : index
    %104 = vector.load %arg5[%c64, %c0_32] : memref<128x64xf32, #tpu.memory_space<vmem>>, vector<32x64xf32>
    %cst_33 = arith.constant dense<0.000000e+00> : vector<4x32xf32>
    %105 = tpu.matmul %103, %67, %cst_33 {dimension_numbers = #tpu.dot_dimension_numbers<[1], [0], [0], [1], [0, 0, 1, 1], [], []>} : vector<4x8xf32>, vector<8x32xf32>, vector<4x32xf32> -> vector<4x32xf32>
    %cst_34 = arith.constant dense<0.000000e+00> : vector<4x64xf32>
    %106 = tpu.matmul %105, %104, %cst_34 {dimension_numbers = #tpu.dot_dimension_numbers<[1], [0], [0], [1], [0, 0, 1, 1], [], []>} : vector<4x32xf32>, vector<32x64xf32>, vector<4x64xf32> -> vector<4x64xf32>
    %107 = arith.addf %94, %106 : vector<4x64xf32>
    %108 = tpu.iota {dimensions = array<i32: 0>} : vector<4x8xi32>
    %109 = tpu.iota {dimensions = array<i32: 1>} : vector<4x8xi32>
    %c2_i32_35 = arith.constant 2 : i32
    %110 = vector.broadcast %c2_i32_35 : i32 to vector<4x8xi32>
    %111 = arith.muli %110, %108 : vector<4x8xi32>
    %c2_i32_36 = arith.constant 2 : i32
    %112 = vector.broadcast %c2_i32_36 : i32 to vector<4x8xi32>
    %113 = arith.addi %111, %112 : vector<4x8xi32>
    %114 = arith.cmpi eq, %109, %113 : vector<4x8xi32>
    %115 = arith.extui %114 : vector<4x8xi1> to vector<4x8xi32>
    %116 = arith.sitofp %115 : vector<4x8xi32> to vector<4x8xf32>
    %c96 = arith.constant 96 : index
    %c0_37 = arith.constant 0 : index
    %117 = vector.load %arg5[%c96, %c0_37] : memref<128x64xf32, #tpu.memory_space<vmem>>, vector<32x64xf32>
    %cst_38 = arith.constant dense<0.000000e+00> : vector<4x32xf32>
    %118 = tpu.matmul %116, %67, %cst_38 {dimension_numbers = #tpu.dot_dimension_numbers<[1], [0], [0], [1], [0, 0, 1, 1], [], []>} : vector<4x8xf32>, vector<8x32xf32>, vector<4x32xf32> -> vector<4x32xf32>
    %cst_39 = arith.constant dense<0.000000e+00> : vector<4x64xf32>
    %119 = tpu.matmul %118, %117, %cst_39 {dimension_numbers = #tpu.dot_dimension_numbers<[1], [0], [0], [1], [0, 0, 1, 1], [], []>} : vector<4x32xf32>, vector<32x64xf32>, vector<4x64xf32> -> vector<4x64xf32>
    %120 = arith.addf %107, %119 : vector<4x64xf32>
    %c0_40 = arith.constant 0 : index
    %c0_41 = arith.constant 0 : index
    %121 = vector.load %arg6[%c0_40, %c0_41] : memref<1x64xf32, #tpu.memory_space<vmem>>, vector<1x64xf32>
    %122 = vector.broadcast %121 : vector<1x64xf32> to vector<4x64xf32>
    %123 = arith.addf %120, %122 : vector<4x64xf32>
    %cst_42 = arith.constant 0.000000e+00 : f32
    %124 = vector.broadcast %cst_42 : f32 to vector<4x64xf32>
    %125 = arith.maximumf %123, %124 : vector<4x64xf32>
    %126 = vector.extract_strided_slice %125 {offsets = [0, 0], sizes = [1, 64], strides = [1, 1]} : vector<4x64xf32> to vector<1x64xf32>
    %127 = vector.extract_strided_slice %125 {offsets = [1, 0], sizes = [1, 64], strides = [1, 1]} : vector<4x64xf32> to vector<1x64xf32>
    %128 = vector.extract_strided_slice %125 {offsets = [2, 0], sizes = [1, 64], strides = [1, 1]} : vector<4x64xf32> to vector<1x64xf32>
    %129 = vector.extract_strided_slice %125 {offsets = [3, 0], sizes = [1, 64], strides = [1, 1]} : vector<4x64xf32> to vector<1x64xf32>
    %130 = tpu.concatenate %126, %127, %128, %129 in 1 : vector<1x64xf32>, vector<1x64xf32>, vector<1x64xf32>, vector<1x64xf32> -> vector<1x256xf32>
    %c0_43 = arith.constant 0 : index
    %c0_44 = arith.constant 0 : index
    %131 = vector.load %arg7[%c0_43, %c0_44] : memref<256x32xf32, #tpu.memory_space<vmem>>, vector<256x32xf32>
    %cst_45 = arith.constant dense<0.000000e+00> : vector<1x32xf32>
    %132 = tpu.matmul %130, %131, %cst_45 {dimension_numbers = #tpu.dot_dimension_numbers<[1], [0], [0], [1], [0, 0, 1, 1], [], []>} : vector<1x256xf32>, vector<256x32xf32>, vector<1x32xf32> -> vector<1x32xf32>
    %c0_46 = arith.constant 0 : index
    %c0_47 = arith.constant 0 : index
    %133 = vector.load %arg8[%c0_46, %c0_47] : memref<1x32xf32, #tpu.memory_space<vmem>>, vector<1x32xf32>
    %134 = arith.addf %132, %133 : vector<1x32xf32>
    %135 = vector.extract_strided_slice %134 {offsets = [0, 0], sizes = [1, 16], strides = [1, 1]} : vector<1x32xf32> to vector<1x16xf32>
    %136 = vector.extract_strided_slice %134 {offsets = [0, 16], sizes = [1, 16], strides = [1, 1]} : vector<1x32xf32> to vector<1x16xf32>
    %c0_48 = arith.constant 0 : index
    %c0_49 = arith.constant 0 : index
    %c0_50 = arith.constant 0 : index
    %137 = vector.load %arg2[%c0_48, %c0_49, %c0_50] : memref<1x1x16xf32, #tpu.memory_space<vmem>>, vector<1x1x16xf32>
    %138 = vector.shape_cast %137 : vector<1x1x16xf32> to vector<1x16xf32>
    %cst_51 = arith.constant 5.000000e-01 : f32
    %139 = vector.broadcast %cst_51 : f32 to vector<1x16xf32>
    %140 = arith.mulf %139, %136 : vector<1x16xf32>
    %141 = math.exp %140 : vector<1x16xf32>
    %142 = arith.mulf %138, %141 : vector<1x16xf32>
    %143 = arith.addf %135, %142 : vector<1x16xf32>
    %c0_52 = arith.constant 0 : index
    %c0_53 = arith.constant 0 : index
    %144 = vector.load %arg9[%c0_52, %c0_53] : memref<16x256xf32, #tpu.memory_space<vmem>>, vector<16x256xf32>
    %cst_54 = arith.constant dense<0.000000e+00> : vector<1x256xf32>
    %145 = tpu.matmul %143, %144, %cst_54 {dimension_numbers = #tpu.dot_dimension_numbers<[1], [0], [0], [1], [0, 0, 1, 1], [], []>} : vector<1x16xf32>, vector<16x256xf32>, vector<1x256xf32> -> vector<1x256xf32>
    %c0_55 = arith.constant 0 : index
    %c0_56 = arith.constant 0 : index
    %146 = vector.load %arg10[%c0_55, %c0_56] : memref<1x256xf32, #tpu.memory_space<vmem>>, vector<1x256xf32>
    %147 = arith.addf %145, %146 : vector<1x256xf32>
    %148 = vector.extract_strided_slice %147 {offsets = [0, 0], sizes = [1, 64], strides = [1, 1]} : vector<1x256xf32> to vector<1x64xf32>
    %149 = vector.extract_strided_slice %147 {offsets = [0, 64], sizes = [1, 64], strides = [1, 1]} : vector<1x256xf32> to vector<1x64xf32>
    %150 = vector.extract_strided_slice %147 {offsets = [0, 128], sizes = [1, 64], strides = [1, 1]} : vector<1x256xf32> to vector<1x64xf32>
    %151 = vector.extract_strided_slice %147 {offsets = [0, 192], sizes = [1, 64], strides = [1, 1]} : vector<1x256xf32> to vector<1x64xf32>
    %152 = tpu.concatenate %148, %149, %150, %151 in 0 : vector<1x64xf32>, vector<1x64xf32>, vector<1x64xf32>, vector<1x64xf32> -> vector<4x64xf32>
    %cst_57 = arith.constant 0.000000e+00 : f32
    %153 = vector.broadcast %cst_57 : f32 to vector<8x32xf32>
    %154 = tpu.iota {dimensions = array<i32: 0>} : vector<8x4xi32>
    %155 = tpu.iota {dimensions = array<i32: 1>} : vector<8x4xi32>
    %c2_i32_58 = arith.constant 2 : i32
    %156 = vector.broadcast %c2_i32_58 : i32 to vector<8x4xi32>
    %157 = arith.muli %156, %155 : vector<8x4xi32>
    %c-1_i32_59 = arith.constant -1 : i32
    %158 = vector.broadcast %c-1_i32_59 : i32 to vector<8x4xi32>
    %159 = arith.addi %157, %158 : vector<8x4xi32>
    %160 = arith.cmpi eq, %154, %159 : vector<8x4xi32>
    %161 = arith.extui %160 : vector<8x4xi1> to vector<8x4xi32>
    %162 = arith.sitofp %161 : vector<8x4xi32> to vector<8x4xf32>
    %c0_60 = arith.constant 0 : index
    %c0_61 = arith.constant 0 : index
    %163 = vector.load %arg11[%c0_60, %c0_61] : memref<256x32xf32, #tpu.memory_space<vmem>>, vector<64x32xf32>
    %cst_62 = arith.constant dense<0.000000e+00> : vector<8x64xf32>
    %164 = tpu.matmul %162, %152, %cst_62 {dimension_numbers = #tpu.dot_dimension_numbers<[1], [0], [0], [1], [0, 0, 1, 1], [], []>} : vector<8x4xf32>, vector<4x64xf32>, vector<8x64xf32> -> vector<8x64xf32>
    %cst_63 = arith.constant dense<0.000000e+00> : vector<8x32xf32>
    %165 = tpu.matmul %164, %163, %cst_63 {dimension_numbers = #tpu.dot_dimension_numbers<[1], [0], [0], [1], [0, 0, 1, 1], [], []>} : vector<8x64xf32>, vector<64x32xf32>, vector<8x32xf32> -> vector<8x32xf32>
    %166 = arith.addf %153, %165 : vector<8x32xf32>
    %167 = tpu.iota {dimensions = array<i32: 0>} : vector<8x4xi32>
    %168 = tpu.iota {dimensions = array<i32: 1>} : vector<8x4xi32>
    %c2_i32_64 = arith.constant 2 : i32
    %169 = vector.broadcast %c2_i32_64 : i32 to vector<8x4xi32>
    %170 = arith.muli %169, %168 : vector<8x4xi32>
    %c0_i32_65 = arith.constant 0 : i32
    %171 = vector.broadcast %c0_i32_65 : i32 to vector<8x4xi32>
    %172 = arith.addi %170, %171 : vector<8x4xi32>
    %173 = arith.cmpi eq, %167, %172 : vector<8x4xi32>
    %174 = arith.extui %173 : vector<8x4xi1> to vector<8x4xi32>
    %175 = arith.sitofp %174 : vector<8x4xi32> to vector<8x4xf32>
    %c64_66 = arith.constant 64 : index
    %c0_67 = arith.constant 0 : index
    %176 = vector.load %arg11[%c64_66, %c0_67] : memref<256x32xf32, #tpu.memory_space<vmem>>, vector<64x32xf32>
    %cst_68 = arith.constant dense<0.000000e+00> : vector<8x64xf32>
    %177 = tpu.matmul %175, %152, %cst_68 {dimension_numbers = #tpu.dot_dimension_numbers<[1], [0], [0], [1], [0, 0, 1, 1], [], []>} : vector<8x4xf32>, vector<4x64xf32>, vector<8x64xf32> -> vector<8x64xf32>
    %cst_69 = arith.constant dense<0.000000e+00> : vector<8x32xf32>
    %178 = tpu.matmul %177, %176, %cst_69 {dimension_numbers = #tpu.dot_dimension_numbers<[1], [0], [0], [1], [0, 0, 1, 1], [], []>} : vector<8x64xf32>, vector<64x32xf32>, vector<8x32xf32> -> vector<8x32xf32>
    %179 = arith.addf %166, %178 : vector<8x32xf32>
    %180 = tpu.iota {dimensions = array<i32: 0>} : vector<8x4xi32>
    %181 = tpu.iota {dimensions = array<i32: 1>} : vector<8x4xi32>
    %c2_i32_70 = arith.constant 2 : i32
    %182 = vector.broadcast %c2_i32_70 : i32 to vector<8x4xi32>
    %183 = arith.muli %182, %181 : vector<8x4xi32>
    %c1_i32_71 = arith.constant 1 : i32
    %184 = vector.broadcast %c1_i32_71 : i32 to vector<8x4xi32>
    %185 = arith.addi %183, %184 : vector<8x4xi32>
    %186 = arith.cmpi eq, %180, %185 : vector<8x4xi32>
    %187 = arith.extui %186 : vector<8x4xi1> to vector<8x4xi32>
    %188 = arith.sitofp %187 : vector<8x4xi32> to vector<8x4xf32>
    %c128 = arith.constant 128 : index
    %c0_72 = arith.constant 0 : index
    %189 = vector.load %arg11[%c128, %c0_72] : memref<256x32xf32, #tpu.memory_space<vmem>>, vector<64x32xf32>
    %cst_73 = arith.constant dense<0.000000e+00> : vector<8x64xf32>
    %190 = tpu.matmul %188, %152, %cst_73 {dimension_numbers = #tpu.dot_dimension_numbers<[1], [0], [0], [1], [0, 0, 1, 1], [], []>} : vector<8x4xf32>, vector<4x64xf32>, vector<8x64xf32> -> vector<8x64xf32>
    %cst_74 = arith.constant dense<0.000000e+00> : vector<8x32xf32>
    %191 = tpu.matmul %190, %189, %cst_74 {dimension_numbers = #tpu.dot_dimension_numbers<[1], [0], [0], [1], [0, 0, 1, 1], [], []>} : vector<8x64xf32>, vector<64x32xf32>, vector<8x32xf32> -> vector<8x32xf32>
    %192 = arith.addf %179, %191 : vector<8x32xf32>
    %193 = tpu.iota {dimensions = array<i32: 0>} : vector<8x4xi32>
    %194 = tpu.iota {dimensions = array<i32: 1>} : vector<8x4xi32>
    %c2_i32_75 = arith.constant 2 : i32
    %195 = vector.broadcast %c2_i32_75 : i32 to vector<8x4xi32>
    %196 = arith.muli %195, %194 : vector<8x4xi32>
    %c2_i32_76 = arith.constant 2 : i32
    %197 = vector.broadcast %c2_i32_76 : i32 to vector<8x4xi32>
    %198 = arith.addi %196, %197 : vector<8x4xi32>
    %199 = arith.cmpi eq, %193, %198 : vector<8x4xi32>
    %200 = arith.extui %199 : vector<8x4xi1> to vector<8x4xi32>
    %201 = arith.sitofp %200 : vector<8x4xi32> to vector<8x4xf32>
    %c192 = arith.constant 192 : index
    %c0_77 = arith.constant 0 : index
    %202 = vector.load %arg11[%c192, %c0_77] : memref<256x32xf32, #tpu.memory_space<vmem>>, vector<64x32xf32>
    %cst_78 = arith.constant dense<0.000000e+00> : vector<8x64xf32>
    %203 = tpu.matmul %201, %152, %cst_78 {dimension_numbers = #tpu.dot_dimension_numbers<[1], [0], [0], [1], [0, 0, 1, 1], [], []>} : vector<8x4xf32>, vector<4x64xf32>, vector<8x64xf32> -> vector<8x64xf32>
    %cst_79 = arith.constant dense<0.000000e+00> : vector<8x32xf32>
    %204 = tpu.matmul %203, %202, %cst_79 {dimension_numbers = #tpu.dot_dimension_numbers<[1], [0], [0], [1], [0, 0, 1, 1], [], []>} : vector<8x64xf32>, vector<64x32xf32>, vector<8x32xf32> -> vector<8x32xf32>
    %205 = arith.addf %192, %204 : vector<8x32xf32>
    %c0_80 = arith.constant 0 : index
    %c0_81 = arith.constant 0 : index
    %206 = vector.load %arg12[%c0_80, %c0_81] : memref<1x32xf32, #tpu.memory_space<vmem>>, vector<1x32xf32>
    %207 = vector.broadcast %206 : vector<1x32xf32> to vector<8x32xf32>
    %208 = arith.addf %205, %207 : vector<8x32xf32>
    %cst_82 = arith.constant 0.000000e+00 : f32
    %209 = vector.broadcast %cst_82 : f32 to vector<8x32xf32>
    %210 = arith.maximumf %208, %209 : vector<8x32xf32>
    %cst_83 = arith.constant 0.000000e+00 : f32
    %211 = vector.broadcast %cst_83 : f32 to vector<16x1xf32>
    %212 = tpu.iota {dimensions = array<i32: 0>} : vector<16x8xi32>
    %213 = tpu.iota {dimensions = array<i32: 1>} : vector<16x8xi32>
    %c2_i32_84 = arith.constant 2 : i32
    %214 = vector.broadcast %c2_i32_84 : i32 to vector<16x8xi32>
    %215 = arith.muli %214, %213 : vector<16x8xi32>
    %c-1_i32_85 = arith.constant -1 : i32
    %216 = vector.broadcast %c-1_i32_85 : i32 to vector<16x8xi32>
    %217 = arith.addi %215, %216 : vector<16x8xi32>
    %218 = arith.cmpi eq, %212, %217 : vector<16x8xi32>
    %219 = arith.extui %218 : vector<16x8xi1> to vector<16x8xi32>
    %220 = arith.sitofp %219 : vector<16x8xi32> to vector<16x8xf32>
    %c0_86 = arith.constant 0 : index
    %c0_87 = arith.constant 0 : index
    %221 = vector.load %arg13[%c0_86, %c0_87] : memref<128x1xf32, #tpu.memory_space<vmem>>, vector<32x1xf32>
    %cst_88 = arith.constant dense<0.000000e+00> : vector<16x32xf32>
    %222 = tpu.matmul %220, %210, %cst_88 {dimension_numbers = #tpu.dot_dimension_numbers<[1], [0], [0], [1], [0, 0, 1, 1], [], []>} : vector<16x8xf32>, vector<8x32xf32>, vector<16x32xf32> -> vector<16x32xf32>
    %cst_89 = arith.constant dense<0.000000e+00> : vector<16x1xf32>
    %223 = tpu.matmul %222, %221, %cst_89 {dimension_numbers = #tpu.dot_dimension_numbers<[1], [0], [0], [1], [0, 0, 1, 1], [], []>} : vector<16x32xf32>, vector<32x1xf32>, vector<16x1xf32> -> vector<16x1xf32>
    %224 = arith.addf %211, %223 : vector<16x1xf32>
    %225 = tpu.iota {dimensions = array<i32: 0>} : vector<16x8xi32>
    %226 = tpu.iota {dimensions = array<i32: 1>} : vector<16x8xi32>
    %c2_i32_90 = arith.constant 2 : i32
    %227 = vector.broadcast %c2_i32_90 : i32 to vector<16x8xi32>
    %228 = arith.muli %227, %226 : vector<16x8xi32>
    %c0_i32_91 = arith.constant 0 : i32
    %229 = vector.broadcast %c0_i32_91 : i32 to vector<16x8xi32>
    %230 = arith.addi %228, %229 : vector<16x8xi32>
    %231 = arith.cmpi eq, %225, %230 : vector<16x8xi32>
    %232 = arith.extui %231 : vector<16x8xi1> to vector<16x8xi32>
    %233 = arith.sitofp %232 : vector<16x8xi32> to vector<16x8xf32>
    %c32_92 = arith.constant 32 : index
    %c0_93 = arith.constant 0 : index
    %234 = vector.load %arg13[%c32_92, %c0_93] : memref<128x1xf32, #tpu.memory_space<vmem>>, vector<32x1xf32>
    %cst_94 = arith.constant dense<0.000000e+00> : vector<16x32xf32>
    %235 = tpu.matmul %233, %210, %cst_94 {dimension_numbers = #tpu.dot_dimension_numbers<[1], [0], [0], [1], [0, 0, 1, 1], [], []>} : vector<16x8xf32>, vector<8x32xf32>, vector<16x32xf32> -> vector<16x32xf32>
    %cst_95 = arith.constant dense<0.000000e+00> : vector<16x1xf32>
    %236 = tpu.matmul %235, %234, %cst_95 {dimension_numbers = #tpu.dot_dimension_numbers<[1], [0], [0], [1], [0, 0, 1, 1], [], []>} : vector<16x32xf32>, vector<32x1xf32>, vector<16x1xf32> -> vector<16x1xf32>
    %237 = arith.addf %224, %236 : vector<16x1xf32>
    %238 = tpu.iota {dimensions = array<i32: 0>} : vector<16x8xi32>
    %239 = tpu.iota {dimensions = array<i32: 1>} : vector<16x8xi32>
    %c2_i32_96 = arith.constant 2 : i32
    %240 = vector.broadcast %c2_i32_96 : i32 to vector<16x8xi32>
    %241 = arith.muli %240, %239 : vector<16x8xi32>
    %c1_i32_97 = arith.constant 1 : i32
    %242 = vector.broadcast %c1_i32_97 : i32 to vector<16x8xi32>
    %243 = arith.addi %241, %242 : vector<16x8xi32>
    %244 = arith.cmpi eq, %238, %243 : vector<16x8xi32>
    %245 = arith.extui %244 : vector<16x8xi1> to vector<16x8xi32>
    %246 = arith.sitofp %245 : vector<16x8xi32> to vector<16x8xf32>
    %c64_98 = arith.constant 64 : index
    %c0_99 = arith.constant 0 : index
    %247 = vector.load %arg13[%c64_98, %c0_99] : memref<128x1xf32, #tpu.memory_space<vmem>>, vector<32x1xf32>
    %cst_100 = arith.constant dense<0.000000e+00> : vector<16x32xf32>
    %248 = tpu.matmul %246, %210, %cst_100 {dimension_numbers = #tpu.dot_dimension_numbers<[1], [0], [0], [1], [0, 0, 1, 1], [], []>} : vector<16x8xf32>, vector<8x32xf32>, vector<16x32xf32> -> vector<16x32xf32>
    %cst_101 = arith.constant dense<0.000000e+00> : vector<16x1xf32>
    %249 = tpu.matmul %248, %247, %cst_101 {dimension_numbers = #tpu.dot_dimension_numbers<[1], [0], [0], [1], [0, 0, 1, 1], [], []>} : vector<16x32xf32>, vector<32x1xf32>, vector<16x1xf32> -> vector<16x1xf32>
    %250 = arith.addf %237, %249 : vector<16x1xf32>
    %251 = tpu.iota {dimensions = array<i32: 0>} : vector<16x8xi32>
    %252 = tpu.iota {dimensions = array<i32: 1>} : vector<16x8xi32>
    %c2_i32_102 = arith.constant 2 : i32
    %253 = vector.broadcast %c2_i32_102 : i32 to vector<16x8xi32>
    %254 = arith.muli %253, %252 : vector<16x8xi32>
    %c2_i32_103 = arith.constant 2 : i32
    %255 = vector.broadcast %c2_i32_103 : i32 to vector<16x8xi32>
    %256 = arith.addi %254, %255 : vector<16x8xi32>
    %257 = arith.cmpi eq, %251, %256 : vector<16x8xi32>
    %258 = arith.extui %257 : vector<16x8xi1> to vector<16x8xi32>
    %259 = arith.sitofp %258 : vector<16x8xi32> to vector<16x8xf32>
    %c96_104 = arith.constant 96 : index
    %c0_105 = arith.constant 0 : index
    %260 = vector.load %arg13[%c96_104, %c0_105] : memref<128x1xf32, #tpu.memory_space<vmem>>, vector<32x1xf32>
    %cst_106 = arith.constant dense<0.000000e+00> : vector<16x32xf32>
    %261 = tpu.matmul %259, %210, %cst_106 {dimension_numbers = #tpu.dot_dimension_numbers<[1], [0], [0], [1], [0, 0, 1, 1], [], []>} : vector<16x8xf32>, vector<8x32xf32>, vector<16x32xf32> -> vector<16x32xf32>
    %cst_107 = arith.constant dense<0.000000e+00> : vector<16x1xf32>
    %262 = tpu.matmul %261, %260, %cst_107 {dimension_numbers = #tpu.dot_dimension_numbers<[1], [0], [0], [1], [0, 0, 1, 1], [], []>} : vector<16x32xf32>, vector<32x1xf32>, vector<16x1xf32> -> vector<16x1xf32>
    %263 = arith.addf %250, %262 : vector<16x1xf32>
    %c0_108 = arith.constant 0 : index
    %c0_109 = arith.constant 0 : index
    %264 = vector.load %arg14[%c0_108, %c0_109] : memref<1x1xf32, #tpu.memory_space<vmem>>, vector<1x1xf32>
    %265 = vector.broadcast %264 : vector<1x1xf32> to vector<16x1xf32>
    %266 = arith.addf %263, %265 : vector<16x1xf32>
    %267 = math.tanh %266 : vector<16x1xf32>
    %c0_110 = arith.constant 0 : index
    %c0_111 = arith.constant 0 : index
    %c0_112 = arith.constant 0 : index
    %268 = vector.load %arg15[%c0_110, %c0_111, %c0_112] : memref<1x16x1xf32, #tpu.memory_space<vmem>>, vector<1x16x1xf32>
    %269 = vector.shape_cast %268 : vector<1x16x1xf32> to vector<16x1xf32>
    %270 = vector.shape_cast %267 : vector<16x1xf32> to vector<1x16x1xf32>
    tpu.vector_store %arg15[%c0_110, %c0_111, %c0_112], %270 {strides = array<i32>} : memref<1x16x1xf32, #tpu.memory_space<vmem>>, vector<1x16x1xf32>,
    %c0_113 = arith.constant 0 : index
    %c0_114 = arith.constant 0 : index
    %c0_115 = arith.constant 0 : index
    %271 = vector.load %arg16[%c0_113, %c0_114, %c0_115] : memref<1x1x16xf32, #tpu.memory_space<vmem>>, vector<1x1x16xf32>
    %272 = vector.shape_cast %271 : vector<1x1x16xf32> to vector<1x16xf32>
    %273 = vector.shape_cast %135 : vector<1x16xf32> to vector<1x1x16xf32>
    tpu.vector_store %arg16[%c0_113, %c0_114, %c0_115], %273 {strides = array<i32>} : memref<1x1x16xf32, #tpu.memory_space<vmem>>, vector<1x1x16xf32>,
    %c0_116 = arith.constant 0 : index
    %c0_117 = arith.constant 0 : index
    %c0_118 = arith.constant 0 : index
    %274 = vector.load %arg17[%c0_116, %c0_117, %c0_118] : memref<1x1x16xf32, #tpu.memory_space<vmem>>, vector<1x1x16xf32>
    %275 = vector.shape_cast %274 : vector<1x1x16xf32> to vector<1x16xf32>
    %276 = vector.shape_cast %136 : vector<1x16xf32> to vector<1x1x16xf32>
    tpu.vector_store %arg17[%c0_116, %c0_117, %c0_118], %276 {strides = array<i32>} : memref<1x1x16xf32, #tpu.memory_space<vmem>>, vector<1x1x16xf32>,
    return
  }
  func.func @transform_0(%arg0: i32) -> (i32, i32, i32) {
    %c0_i32 = arith.constant 0 : i32
    %c0_i32_0 = arith.constant 0 : i32
    %c0_i32_1 = arith.constant 0 : i32
    return %arg0, %c0_i32, %c0_i32_0 : i32, i32, i32
  }
  func.func @transform_1(%arg0: i32) -> (i32, i32, i32) {
    %c0_i32 = arith.constant 0 : i32
    %c0_i32_0 = arith.constant 0 : i32
    %c0_i32_1 = arith.constant 0 : i32
    return %arg0, %c0_i32, %c0_i32_0 : i32, i32, i32
  }
  func.func @transform_2(%arg0: i32) -> (i32, i32) {
    %c0_i32 = arith.constant 0 : i32
    %c0_i32_0 = arith.constant 0 : i32
    %c0_i32_1 = arith.constant 0 : i32
    return %c0_i32, %c0_i32_0 : i32, i32
  }
  func.func @transform_3(%arg0: i32) -> (i32, i32) {
    %c0_i32 = arith.constant 0 : i32
    %c0_i32_0 = arith.constant 0 : i32
    %c0_i32_1 = arith.constant 0 : i32
    return %c0_i32, %c0_i32_0 : i32, i32
  }
  func.func @transform_4(%arg0: i32) -> (i32, i32) {
    %c0_i32 = arith.constant 0 : i32
    %c0_i32_0 = arith.constant 0 : i32
    %c0_i32_1 = arith.constant 0 : i32
    return %c0_i32, %c0_i32_0 : i32, i32
  }
  func.func @transform_5(%arg0: i32) -> (i32, i32) {
    %c0_i32 = arith.constant 0 : i32
    %c0_i32_0 = arith.constant 0 : i32
    %c0_i32_1 = arith.constant 0 : i32
    return %c0_i32, %c0_i32_0 : i32, i32
  }
  func.func @transform_6(%arg0: i32) -> (i32, i32) {
    %c0_i32 = arith.constant 0 : i32
    %c0_i32_0 = arith.constant 0 : i32
    %c0_i32_1 = arith.constant 0 : i32
    return %c0_i32, %c0_i32_0 : i32, i32
  }
  func.func @transform_7(%arg0: i32) -> (i32, i32) {
    %c0_i32 = arith.constant 0 : i32
    %c0_i32_0 = arith.constant 0 : i32
    %c0_i32_1 = arith.constant 0 : i32
    return %c0_i32, %c0_i32_0 : i32, i32
  }
  func.func @transform_8(%arg0: i32) -> (i32, i32) {
    %c0_i32 = arith.constant 0 : i32
    %c0_i32_0 = arith.constant 0 : i32
    %c0_i32_1 = arith.constant 0 : i32
    return %c0_i32, %c0_i32_0 : i32, i32
  }
  func.func @transform_9(%arg0: i32) -> (i32, i32) {
    %c0_i32 = arith.constant 0 : i32
    %c0_i32_0 = arith.constant 0 : i32
    %c0_i32_1 = arith.constant 0 : i32
    return %c0_i32, %c0_i32_0 : i32, i32
  }
  func.func @transform_10(%arg0: i32) -> (i32, i32) {
    %c0_i32 = arith.constant 0 : i32
    %c0_i32_0 = arith.constant 0 : i32
    %c0_i32_1 = arith.constant 0 : i32
    return %c0_i32, %c0_i32_0 : i32, i32
  }
  func.func @transform_11(%arg0: i32) -> (i32, i32) {
    %c0_i32 = arith.constant 0 : i32
    %c0_i32_0 = arith.constant 0 : i32
    %c0_i32_1 = arith.constant 0 : i32
    return %c0_i32, %c0_i32_0 : i32, i32
  }
  func.func @transform_12(%arg0: i32) -> (i32, i32) {
    %c0_i32 = arith.constant 0 : i32
    %c0_i32_0 = arith.constant 0 : i32
    %c0_i32_1 = arith.constant 0 : i32
    return %c0_i32, %c0_i32_0 : i32, i32
  }
  func.func @transform_13(%arg0: i32) -> (i32, i32) {
    %c0_i32 = arith.constant 0 : i32
    %c0_i32_0 = arith.constant 0 : i32
    %c0_i32_1 = arith.constant 0 : i32
    return %c0_i32, %c0_i32_0 : i32, i32
  }
  func.func @transform_14(%arg0: i32) -> (i32, i32, i32) {
    %c0_i32 = arith.constant 0 : i32
    %c0_i32_0 = arith.constant 0 : i32
    %c0_i32_1 = arith.constant 0 : i32
    return %arg0, %c0_i32, %c0_i32_0 : i32, i32, i32
  }
  func.func @transform_15(%arg0: i32) -> (i32, i32, i32) {
    %c0_i32 = arith.constant 0 : i32
    %c0_i32_0 = arith.constant 0 : i32
    %c0_i32_1 = arith.constant 0 : i32
    return %arg0, %c0_i32, %c0_i32_0 : i32, i32, i32
  }
  func.func @transform_16(%arg0: i32) -> (i32, i32, i32) {
    %c0_i32 = arith.constant 0 : i32
    %c0_i32_0 = arith.constant 0 : i32
    %c0_i32_1 = arith.constant 0 : i32
    return %arg0, %c0_i32, %c0_i32_0 : i32, i32, i32
  }
}

</mosaic_0001>

<llo_original>
// kernel: vae_forward.1
$region0: #{vae_forward.1}
  #allocation0 [shape = 'u32[]', space=smem, size = 0x4, offset = 0x4, fixed_abs, tag = 'smem constant byte address 0x4 - core index']
  #allocation1 [shape = 'u32[144,128]{1,0:T(1,128)}', space=vmem, size = 0x12000, scoped, tag = 'internal scratch']
  #allocation2 [shape = 'f32[1,1]{1,0:T(1,128)S(1)}', space=vmem, size = 0x200, scoped, tag = 'scoped memory for vae_forward.1']
  %s0 = inlined_call_operand.vmem [shape: f32[2,16,1], index: 0, kind: input, shape index: {}]
  %s1 = inlined_call_operand.vmem [shape: f32[2,1,16], index: 1, kind: input, shape index: {}]
  %s2 = inlined_call_operand.vmem [shape: f32[4,32], index: 2, kind: input, shape index: {}]
  %s3 = inlined_call_operand.vmem [shape: f32[1,32], index: 3, kind: input, shape index: {}]
  %s4 = inlined_call_operand.vmem [shape: f32[128,64], index: 4, kind: input, shape index: {}]
  %s5 = inlined_call_operand.vmem [shape: f32[1,64], index: 5, kind: input, shape index: {}]
  %s6 = inlined_call_operand.vmem [shape: f32[256,32], index: 6, kind: input, shape index: {}]
  %s7 = inlined_call_operand.vmem [shape: f32[1,32], index: 7, kind: input, shape index: {}]
  %s8 = inlined_call_operand.vmem [shape: f32[16,256], index: 8, kind: input, shape index: {}]
  %s9 = inlined_call_operand.vmem [shape: f32[1,256], index: 9, kind: input, shape index: {}]
  %s10 = inlined_call_operand.vmem [shape: f32[256,32], index: 10, kind: input, shape index: {}]
  %s11 = inlined_call_operand.vmem [shape: f32[1,32], index: 11, kind: input, shape index: {}]
  %s12 = inlined_call_operand.vmem [shape: f32[128,1], index: 12, kind: input, shape index: {}]
  %s13 = inlined_call_operand.<no memory space> [shape: f32[1,1], index: 13, kind: input, shape index: {}]
  %s14 = inlined_call_operand.vmem [shape: f32[2,16,1], index: 14, kind: output, shape index: {0}]
  %s15 = inlined_call_operand.hbm [shape: f32[2,1,16], index: 15, kind: output, shape index: {1}]
  %s16 = inlined_call_operand.hbm [shape: f32[2,1,16], index: 16, kind: output, shape index: {2}]
  %17 = xla_tuple %s14, %s15, %s16
  %s18 = sld [smem:[#allocation0]]
  $region105: #{vae_forward.1} parent=0
    _
  %s20 = ssub.s32 1, %s18
  %s21 = scalar_select 0, %s20, %s18
  %v22 = vstv %s13
  %23 = vst [vmem:[#allocation2] sm:$0x1] %v22
  $region1: #{vae_forward.1} parent=0
    #allocation3 [shape = 'u8[1024]{0}', space=vmem, size = 0x400, scoped, tag = 'output window, operand 1']
    #allocation4 [shape = 's32[2]{0}', space=sflag, size = 0x8, scoped, tag = 'scoped memory for vae_forward.1']
    #allocation5 [shape = 'u8[1024]{0}', space=vmem, size = 0x400, scoped, tag = 'output window, operand 2']
    #allocation6 [shape = 's32[2]{0}', space=sflag, size = 0x8, scoped, tag = 'scoped memory for vae_forward.1']
    %24 = vsyncpa [#allocation4], 0
    %s25 = scalar_lea.sflag [#allocation4], 1
    %26 = vsyncpa %s25, 0
    %27 = vsyncpa [#allocation6], 0
    %s28 = scalar_lea.sflag [#allocation6], 1
    %29 = vsyncpa %s28, 0
    loop: start=0, step=1, limit=4
    $region2: #{vae_forward.1} parent=1 // loop_pre_header
      _
    $region3: #{vae_forward.1} parent=1 // loop_header
      %s31 = sphi 0, %s35
      %p32 = scmp.ge.s32.totalorder %s31, 4
      %s41 = sphi 0, %s43
      %s44 = sphi 0, %s41
      %s45 = sphi 0, %s44
      %s61 = sphi 0, %s45
      %s67 = sphi 0, %s69
      %s70 = sphi 0, %s67
      %s71 = sphi 0, %s70
      %s87 = sphi 0, %s71
      %s91 = sphi 0, %s91
      %s93 = sphi 0, %s91
      %s94 = sphi 0, %s93
      %s108 = sphi 0, %s94
      %s112 = sphi 0, %s112
      %s114 = sphi 0, %s112
      %s115 = sphi 0, %s114
      %s129 = sphi 0, %s115
      %s133 = sphi 0, %s133
      %s135 = sphi 0, %s133
      %s136 = sphi 0, %s135
      %s150 = sphi 0, %s136
      %s154 = sphi 0, %s154
      %s156 = sphi 0, %s154
      %s157 = sphi 0, %s156
      %s171 = sphi 0, %s157
      %s175 = sphi 0, %s175
      %s177 = sphi 0, %s175
      %s178 = sphi 0, %s177
      %s192 = sphi 0, %s178
      %s196 = sphi 0, %s196
      %s198 = sphi 0, %s196
      %s199 = sphi 0, %s198
      %s213 = sphi 0, %s199
      %s217 = sphi 0, %s217
      %s219 = sphi 0, %s217
      %s220 = sphi 0, %s219
      %s234 = sphi 0, %s220
      %s238 = sphi 0, %s238
      %s240 = sphi 0, %s238
      %s241 = sphi 0, %s240
      %s255 = sphi 0, %s241
      %s259 = sphi 0, %s259
      %s261 = sphi 0, %s259
      %s262 = sphi 0, %s261
      %s276 = sphi 0, %s262
      %s280 = sphi 0, %s280
      %s282 = sphi 0, %s280
      %s283 = sphi 0, %s282
      %s297 = sphi 0, %s283
      %s301 = sphi 0, %s301
      %s303 = sphi 0, %s301
      %s304 = sphi 0, %s303
      %s318 = sphi 0, %s304
      %s322 = sphi 0, %s322
      %s324 = sphi 0, %s322
      %s325 = sphi 0, %s324
      %s339 = sphi 0, %s325
      %s345 = sphi 0, %s347
      %s348 = sphi 0, %s345
      %s349 = sphi 0, %s348
      %s365 = sphi 0, %s349
      %s371 = sphi 0, %s373
      %s374 = sphi 0, %s371
      %s375 = sphi 0, %s374
      %s391 = sphi 0, %s375
      %s397 = sphi 0, %s399
      %s400 = sphi 0, %s397
      %s401 = sphi 0, %s400
      %s417 = sphi 0, %s401
    $region4: #{vae_forward.1} parent=1 // loop_header_branch
      %34 = sbr.rel (%p32) target = $region8
    $region5: #{vae_forward.1} parent=1 // loop_body
      %s36 = ssub.s32 %s31, 1
      %s37 = ssub.s32 %s31, 2
      %s38 = sadd.s32 %s31, 1
      %s39 = ssub.s32 %s31, %s38
      %p40 = scmp.eq.s32.totalorder %s39, 0
      %s42 = sadd.s32 %s41, 1
      %s43 = scalar_select %p40, %s41, %s42
      %p46 = pneg %p40
      %p47 = scmp.eq.s32.totalorder %s31, 1
      %p48 = por %p46, %p47
      %p49 = scmp.ne.s32.totalorder %s41, %s44
      %p50 = scmp.eq.s32.totalorder %s31, 0
      %p51 = por %p49, %p50
      %p52 = scmp.ne.s32.totalorder %s41, %s44
      %p53 = scmp.eq.s32.totalorder %s36, 1
      %p54 = por %p52, %p53
      %p55 = scmp.ne.s32.totalorder %s44, %s45
      %p56 = scmp.eq.s32.totalorder %s36, 0
      %p57 = por %p55, %p56
      %p58 = scmp.ne.s32.totalorder %s44, %s45
      %p59 = scmp.eq.s32.totalorder %s37, 1
      %p60 = por %p58, %p59
      %p62 = scmp.ne.s32.totalorder %s45, %s61
      %p63 = scmp.eq.s32.totalorder %s37, 0
      %p64 = por %p62, %p63
      %s65 = ssub.s32 %s31, %s38
      %p66 = scmp.eq.s32.totalorder %s65, 0
      %s68 = sadd.s32 %s67, 1
      %s69 = scalar_select %p66, %s67, %s68
      %p72 = pneg %p66
      %p73 = scmp.eq.s32.totalorder %s31, 1
      %p74 = por %p72, %p73
      %p75 = scmp.ne.s32.totalorder %s67, %s70
      %p76 = scmp.eq.s32.totalorder %s31, 0
      %p77 = por %p75, %p76
      %p78 = scmp.ne.s32.totalorder %s67, %s70
      %p79 = scmp.eq.s32.totalorder %s36, 1
      %p80 = por %p78, %p79
      %p81 = scmp.ne.s32.totalorder %s70, %s71
      %p82 = scmp.eq.s32.totalorder %s36, 0
      %p83 = por %p81, %p82
      %p84 = scmp.ne.s32.totalorder %s70, %s71
      %p85 = scmp.eq.s32.totalorder %s37, 1
      %p86 = por %p84, %p85
      %p88 = scmp.ne.s32.totalorder %s71, %s87
      %p89 = scmp.eq.s32.totalorder %s37, 0
      %p90 = por %p88, %p89
      %s92 = sadd.s32 %s91, 1
      %p95 = scmp.eq.s32.totalorder %s31, 1
      %p96 = scmp.ne.s32.totalorder %s91, %s93
      %p97 = scmp.eq.s32.totalorder %s31, 0
      %p98 = por %p96, %p97
      %p99 = scmp.ne.s32.totalorder %s91, %s93
      %p100 = scmp.eq.s32.totalorder %s36, 1
      %p101 = por %p99, %p100
      %p102 = scmp.ne.s32.totalorder %s93, %s94
      %p103 = scmp.eq.s32.totalorder %s36, 0
      %p104 = por %p102, %p103
      %p105 = scmp.ne.s32.totalorder %s93, %s94
      %p106 = scmp.eq.s32.totalorder %s37, 1
      %p107 = por %p105, %p106
      %p109 = scmp.ne.s32.totalorder %s94, %s108
      %p110 = scmp.eq.s32.totalorder %s37, 0
      %p111 = por %p109, %p110
      %s113 = sadd.s32 %s112, 1
      %p116 = scmp.eq.s32.totalorder %s31, 1
      %p117 = scmp.ne.s32.totalorder %s112, %s114
      %p118 = scmp.eq.s32.totalorder %s31, 0
      %p119 = por %p117, %p118
      %p120 = scmp.ne.s32.totalorder %s112, %s114
      %p121 = scmp.eq.s32.totalorder %s36, 1
      %p122 = por %p120, %p121
      %p123 = scmp.ne.s32.totalorder %s114, %s115
      %p124 = scmp.eq.s32.totalorder %s36, 0
      %p125 = por %p123, %p124
      %p126 = scmp.ne.s32.totalorder %s114, %s115
      %p127 = scmp.eq.s32.totalorder %s37, 1
      %p128 = por %p126, %p127
      %p130 = scmp.ne.s32.totalorder %s115, %s129
      %p131 = scmp.eq.s32.totalorder %s37, 0
      %p132 = por %p130, %p131
      %s134 = sadd.s32 %s133, 1
      %p137 = scmp.eq.s32.totalorder %s31, 1
      %p138 = scmp.ne.s32.totalorder %s133, %s135
      %p139 = scmp.eq.s32.totalorder %s31, 0
      %p140 = por %p138, %p139
      %p141 = scmp.ne.s32.totalorder %s133, %s135
      %p142 = scmp.eq.s32.totalorder %s36, 1
      %p143 = por %p141, %p142
      %p144 = scmp.ne.s32.totalorder %s135, %s136
      %p145 = scmp.eq.s32.totalorder %s36, 0
      %p146 = por %p144, %p145
      %p147 = scmp.ne.s32.totalorder %s135, %s136
      %p148 = scmp.eq.s32.totalorder %s37, 1
      %p149 = por %p147, %p148
      %p151 = scmp.ne.s32.totalorder %s136, %s150
      %p152 = scmp.eq.s32.totalorder %s37, 0
      %p153 = por %p151, %p152
      %s155 = sadd.s32 %s154, 1
      %p158 = scmp.eq.s32.totalorder %s31, 1
      %p159 = scmp.ne.s32.totalorder %s154, %s156
      %p160 = scmp.eq.s32.totalorder %s31, 0
      %p161 = por %p159, %p160
      %p162 = scmp.ne.s32.totalorder %s154, %s156
      %p163 = scmp.eq.s32.totalorder %s36, 1
      %p164 = por %p162, %p163
      %p165 = scmp.ne.s32.totalorder %s156, %s157
      %p166 = scmp.eq.s32.totalorder %s36, 0
      %p167 = por %p165, %p166
      %p168 = scmp.ne.s32.totalorder %s156, %s157
      %p169 = scmp.eq.s32.totalorder %s37, 1
      %p170 = por %p168, %p169
      %p172 = scmp.ne.s32.totalorder %s157, %s171
      %p173 = scmp.eq.s32.totalorder %s37, 0
      %p174 = por %p172, %p173
      %s176 = sadd.s32 %s175, 1
      %p179 = scmp.eq.s32.totalorder %s31, 1
      %p180 = scmp.ne.s32.totalorder %s175, %s177
      %p181 = scmp.eq.s32.totalorder %s31, 0
      %p182 = por %p180, %p181
      %p183 = scmp.ne.s32.totalorder %s175, %s177
      %p184 = scmp.eq.s32.totalorder %s36, 1
      %p185 = por %p183, %p184
      %p186 = scmp.ne.s32.totalorder %s177, %s178
      %p187 = scmp.eq.s32.totalorder %s36, 0
      %p188 = por %p186, %p187
      %p189 = scmp.ne.s32.totalorder %s177, %s178
      %p190 = scmp.eq.s32.totalorder %s37, 1
      %p191 = por %p189, %p190
      %p193 = scmp.ne.s32.totalorder %s178, %s192
      %p194 = scmp.eq.s32.totalorder %s37, 0
      %p195 = por %p193, %p194
      %s197 = sadd.s32 %s196, 1
      %p200 = scmp.eq.s32.totalorder %s31, 1
      %p201 = scmp.ne.s32.totalorder %s196, %s198
      %p202 = scmp.eq.s32.totalorder %s31, 0
      %p203 = por %p201, %p202
      %p204 = scmp.ne.s32.totalorder %s196, %s198
      %p205 = scmp.eq.s32.totalorder %s36, 1
      %p206 = por %p204, %p205
      %p207 = scmp.ne.s32.totalorder %s198, %s199
      %p208 = scmp.eq.s32.totalorder %s36, 0
      %p209 = por %p207, %p208
      %p210 = scmp.ne.s32.totalorder %s198, %s199
      %p211 = scmp.eq.s32.totalorder %s37, 1
      %p212 = por %p210, %p211
      %p214 = scmp.ne.s32.totalorder %s199, %s213
      %p215 = scmp.eq.s32.totalorder %s37, 0
      %p216 = por %p214, %p215
      %s218 = sadd.s32 %s217, 1
      %p221 = scmp.eq.s32.totalorder %s31, 1
      %p222 = scmp.ne.s32.totalorder %s217, %s219
      %p223 = scmp.eq.s32.totalorder %s31, 0
      %p224 = por %p222, %p223
      %p225 = scmp.ne.s32.totalorder %s217, %s219
      %p226 = scmp.eq.s32.totalorder %s36, 1
      %p227 = por %p225, %p226
      %p228 = scmp.ne.s32.totalorder %s219, %s220
      %p229 = scmp.eq.s32.totalorder %s36, 0
      %p230 = por %p228, %p229
      %p231 = scmp.ne.s32.totalorder %s219, %s220
      %p232 = scmp.eq.s32.totalorder %s37, 1
      %p233 = por %p231, %p232
      %p235 = scmp.ne.s32.totalorder %s220, %s234
      %p236 = scmp.eq.s32.totalorder %s37, 0
      %p237 = por %p235, %p236
      %s239 = sadd.s32 %s238, 1
      %p242 = scmp.eq.s32.totalorder %s31, 1
      %p243 = scmp.ne.s32.totalorder %s238, %s240
      %p244 = scmp.eq.s32.totalorder %s31, 0
      %p245 = por %p243, %p244
      %p246 = scmp.ne.s32.totalorder %s238, %s240
      %p247 = scmp.eq.s32.totalorder %s36, 1
      %p248 = por %p246, %p247
      %p249 = scmp.ne.s32.totalorder %s240, %s241
      %p250 = scmp.eq.s32.totalorder %s36, 0
      %p251 = por %p249, %p250
      %p252 = scmp.ne.s32.totalorder %s240, %s241
      %p253 = scmp.eq.s32.totalorder %s37, 1
      %p254 = por %p252, %p253
      %p256 = scmp.ne.s32.totalorder %s241, %s255
      %p257 = scmp.eq.s32.totalorder %s37, 0
      %p258 = por %p256, %p257
      %s260 = sadd.s32 %s259, 1
      %p263 = scmp.eq.s32.totalorder %s31, 1
      %p264 = scmp.ne.s32.totalorder %s259, %s261
      %p265 = scmp.eq.s32.totalorder %s31, 0
      %p266 = por %p264, %p265
      %p267 = scmp.ne.s32.totalorder %s259, %s261
      %p268 = scmp.eq.s32.totalorder %s36, 1
      %p269 = por %p267, %p268
      %p270 = scmp.ne.s32.totalorder %s261, %s262
      %p271 = scmp.eq.s32.totalorder %s36, 0
      %p272 = por %p270, %p271
      %p273 = scmp.ne.s32.totalorder %s261, %s262
      %p274 = scmp.eq.s32.totalorder %s37, 1
      %p275 = por %p273, %p274
      %p277 = scmp.ne.s32.totalorder %s262, %s276
      %p278 = scmp.eq.s32.totalorder %s37, 0
      %p279 = por %p277, %p278
      %s281 = sadd.s32 %s280, 1
      %p284 = scmp.eq.s32.totalorder %s31, 1
      %p285 = scmp.ne.s32.totalorder %s280, %s282
      %p286 = scmp.eq.s32.totalorder %s31, 0
      %p287 = por %p285, %p286
      %p288 = scmp.ne.s32.totalorder %s280, %s282
      %p289 = scmp.eq.s32.totalorder %s36, 1
      %p290 = por %p288, %p289
      %p291 = scmp.ne.s32.totalorder %s282, %s283
      %p292 = scmp.eq.s32.totalorder %s36, 0
      %p293 = por %p291, %p292
      %p294 = scmp.ne.s32.totalorder %s282, %s283
      %p295 = scmp.eq.s32.totalorder %s37, 1
      %p296 = por %p294, %p295
      %p298 = scmp.ne.s32.totalorder %s283, %s297
      %p299 = scmp.eq.s32.totalorder %s37, 0
      %p300 = por %p298, %p299
      %s302 = sadd.s32 %s301, 1
      %p305 = scmp.eq.s32.totalorder %s31, 1
      %p306 = scmp.ne.s32.totalorder %s301, %s303
      %p307 = scmp.eq.s32.totalorder %s31, 0
      %p308 = por %p306, %p307
      %p309 = scmp.ne.s32.totalorder %s301, %s303
      %p310 = scmp.eq.s32.totalorder %s36, 1
      %p311 = por %p309, %p310
      %p312 = scmp.ne.s32.totalorder %s303, %s304
      %p313 = scmp.eq.s32.totalorder %s36, 0
      %p314 = por %p312, %p313
      %p315 = scmp.ne.s32.totalorder %s303, %s304
      %p316 = scmp.eq.s32.totalorder %s37, 1
      %p317 = por %p315, %p316
      %p319 = scmp.ne.s32.totalorder %s304, %s318
      %p320 = scmp.eq.s32.totalorder %s37, 0
      %p321 = por %p319, %p320
      %s323 = sadd.s32 %s322, 1
      %p326 = scmp.eq.s32.totalorder %s31, 1
      %p327 = scmp.ne.s32.totalorder %s322, %s324
      %p328 = scmp.eq.s32.totalorder %s31, 0
      %p329 = por %p327, %p328
      %p330 = scmp.ne.s32.totalorder %s322, %s324
      %p331 = scmp.eq.s32.totalorder %s36, 1
      %p332 = por %p330, %p331
      %p333 = scmp.ne.s32.totalorder %s324, %s325
      %p334 = scmp.eq.s32.totalorder %s36, 0
      %p335 = por %p333, %p334
      %p336 = scmp.ne.s32.totalorder %s324, %s325
      %p337 = scmp.eq.s32.totalorder %s37, 1
      %p338 = por %p336, %p337
      %p340 = scmp.ne.s32.totalorder %s325, %s339
      %p341 = scmp.eq.s32.totalorder %s37, 0
      %p342 = por %p340, %p341
      %s343 = ssub.s32 %s31, %s38
      %p344 = scmp.eq.s32.totalorder %s343, 0
      %s346 = sadd.s32 %s345, 1
      %s347 = scalar_select %p344, %s345, %s346
      %p350 = pneg %p344
      %p351 = scmp.eq.s32.totalorder %s31, 1
      %p352 = por %p350, %p351
      %p353 = scmp.ne.s32.totalorder %s345, %s348
      %p354 = scmp.eq.s32.totalorder %s31, 0
      %p355 = por %p353, %p354
      %p356 = scmp.ne.s32.totalorder %s345, %s348
      %p357 = scmp.eq.s32.totalorder %s36, 1
      %p358 = por %p356, %p357
      %p359 = scmp.ne.s32.totalorder %s348, %s349
      %p360 = scmp.eq.s32.totalorder %s36, 0
      %p361 = por %p359, %p360
      %p362 = scmp.ne.s32.totalorder %s348, %s349
      %p363 = scmp.eq.s32.totalorder %s37, 1
      %p364 = por %p362, %p363
      %p366 = scmp.ne.s32.totalorder %s349, %s365
      %p367 = scmp.eq.s32.totalorder %s37, 0
      %p368 = por %p366, %p367
      %s369 = ssub.s32 %s31, %s38
      %p370 = scmp.eq.s32.totalorder %s369, 0
      %s372 = sadd.s32 %s371, 1
      %s373 = scalar_select %p370, %s371, %s372
      %p376 = pneg %p370
      %p377 = scmp.eq.s32.totalorder %s31, 1
      %p378 = por %p376, %p377
      %p379 = scmp.ne.s32.totalorder %s371, %s374
      %p380 = scmp.eq.s32.totalorder %s31, 0
      %p381 = por %p379, %p380
      %p382 = scmp.ne.s32.totalorder %s371, %s374
      %p383 = scmp.eq.s32.totalorder %s36, 1
      %p384 = por %p382, %p383
      %p385 = scmp.ne.s32.totalorder %s374, %s375
      %p386 = scmp.eq.s32.totalorder %s36, 0
      %p387 = por %p385, %p386
      %p388 = scmp.ne.s32.totalorder %s374, %s375
      %p389 = scmp.eq.s32.totalorder %s37, 1
      %p390 = por %p388, %p389
      %p392 = scmp.ne.s32.totalorder %s375, %s391
      %p393 = scmp.eq.s32.totalorder %s37, 0
      %p394 = por %p392, %p393
      %s395 = ssub.s32 %s31, %s38
      %p396 = scmp.eq.s32.totalorder %s395, 0
      %s398 = sadd.s32 %s397, 1
      %s399 = scalar_select %p396, %s397, %s398
      %p402 = pneg %p396
      %p403 = scmp.eq.s32.totalorder %s31, 1
      %p404 = por %p402, %p403
      %p405 = scmp.ne.s32.totalorder %s397, %s400
      %p406 = scmp.eq.s32.totalorder %s31, 0
      %p407 = por %p405, %p406
      %p408 = scmp.ne.s32.totalorder %s397, %s400
      %p409 = scmp.eq.s32.totalorder %s36, 1
      %p410 = por %p408, %p409
      %p411 = scmp.ne.s32.totalorder %s400, %s401
      %p412 = scmp.eq.s32.totalorder %s36, 0
      %p413 = por %p411, %p412
      %p414 = scmp.ne.s32.totalorder %s400, %s401
      %p415 = scmp.eq.s32.totalorder %s37, 1
      %p416 = por %p414, %p415
      %p418 = scmp.ne.s32.totalorder %s401, %s417
      %p419 = scmp.eq.s32.totalorder %s37, 0
      %p420 = por %p418, %p419
      %p421 = scmp.le.s32.totalorder 1, %s31
      %p422 = scmp.lt.s32.totalorder %s31, 3
      %p423 = pnand %p421, %p422
      %p424 = pneg %p423
      // Predicated region
      $region9: #{vae_forward.1} parent=5 // pred_check
        _
      $region10: #{vae_forward.1} parent=5 // pred_check_branch
        %426 = sbr.rel (%p423) target = $region12
      $region11: #{vae_forward.1} parent=5 // pred_region
        %s427 = ssub.s32 %s31, 1
        // Predicated region
        $region13: #{vae_forward.1} parent=11 // pred_check
          %p428 = pneg %p104
        $region14: #{vae_forward.1} parent=11 // pred_check_branch
          %430 = sbr.rel (%p428) target = $region16
        $region15: #{vae_forward.1} parent=11 // pred_region
          _
        $region16: #{vae_forward.1} parent=11 // pred_fallthru
          _
        // Predicated region
        $region17: #{vae_forward.1} parent=11 // pred_check
          %p431 = pneg %p125
        $region18: #{vae_forward.1} parent=11 // pred_check_branch
          %433 = sbr.rel (%p431) target = $region20
        $region19: #{vae_forward.1} parent=11 // pred_region
          _
        $region20: #{vae_forward.1} parent=11 // pred_fallthru
          _
        // Predicated region
        $region21: #{vae_forward.1} parent=11 // pred_check
          %p434 = pneg %p146
        $region22: #{vae_forward.1} parent=11 // pred_check_branch
          %436 = sbr.rel (%p434) target = $region24
        $region23: #{vae_forward.1} parent=11 // pred_region
          _
        $region24: #{vae_forward.1} parent=11 // pred_fallthru
          _
        // Predicated region
        $region25: #{vae_forward.1} parent=11 // pred_check
          %p437 = pneg %p167
        $region26: #{vae_forward.1} parent=11 // pred_check_branch
          %439 = sbr.rel (%p437) target = $region28
        $region27: #{vae_forward.1} parent=11 // pred_region
          _
        $region28: #{vae_forward.1} parent=11 // pred_fallthru
          _
        // Predicated region
        $region29: #{vae_forward.1} parent=11 // pred_check
          %p440 = pneg %p188
        $region30: #{vae_forward.1} parent=11 // pred_check_branch
          %442 = sbr.rel (%p440) target = $region32
        $region31: #{vae_forward.1} parent=11 // pred_region
          _
        $region32: #{vae_forward.1} parent=11 // pred_fallthru
          _
        // Predicated region
        $region33: #{vae_forward.1} parent=11 // pred_check
          %p443 = pneg %p209
        $region34: #{vae_forward.1} parent=11 // pred_check_branch
          %445 = sbr.rel (%p443) target = $region36
        $region35: #{vae_forward.1} parent=11 // pred_region
          _
        $region36: #{vae_forward.1} parent=11 // pred_fallthru
          _
        // Predicated region
        $region37: #{vae_forward.1} parent=11 // pred_check
          %p446 = pneg %p230
        $region38: #{vae_forward.1} parent=11 // pred_check_branch
          %448 = sbr.rel (%p446) target = $region40
        $region39: #{vae_forward.1} parent=11 // pred_region
          _
        $region40: #{vae_forward.1} parent=11 // pred_fallthru
          _
        // Predicated region
        $region41: #{vae_forward.1} parent=11 // pred_check
          %p449 = pneg %p251
        $region42: #{vae_forward.1} parent=11 // pred_check_branch
          %451 = sbr.rel (%p449) target = $region44
        $region43: #{vae_forward.1} parent=11 // pred_region
          _
        $region44: #{vae_forward.1} parent=11 // pred_fallthru
          _
        // Predicated region
        $region45: #{vae_forward.1} parent=11 // pred_check
          %p452 = pneg %p272
        $region46: #{vae_forward.1} parent=11 // pred_check_branch
          %454 = sbr.rel (%p452) target = $region48
        $region47: #{vae_forward.1} parent=11 // pred_region
          _
        $region48: #{vae_forward.1} parent=11 // pred_fallthru
          _
        // Predicated region
        $region49: #{vae_forward.1} parent=11 // pred_check
          %p455 = pneg %p293
        $region50: #{vae_forward.1} parent=11 // pred_check_branch
          %457 = sbr.rel (%p455) target = $region52
        $region51: #{vae_forward.1} parent=11 // pred_region
          _
        $region52: #{vae_forward.1} parent=11 // pred_fallthru
          _
        // Predicated region
        $region53: #{vae_forward.1} parent=11 // pred_check
          %p458 = pneg %p314
        $region54: #{vae_forward.1} parent=11 // pred_check_branch
          %460 = sbr.rel (%p458) target = $region56
        $region55: #{vae_forward.1} parent=11 // pred_region
          _
        $region56: #{vae_forward.1} parent=11 // pred_fallthru
          _
        // Predicated region
        $region57: #{vae_forward.1} parent=11 // pred_check
          %p461 = pneg %p335
        $region58: #{vae_forward.1} parent=11 // pred_check_branch
          %463 = sbr.rel (%p461) target = $region60
        $region59: #{vae_forward.1} parent=11 // pred_region
          _
        $region60: #{vae_forward.1} parent=11 // pred_fallthru
          _
      $region12: #{vae_forward.1} parent=5 // pred_fallthru
        _
      %p464 = scmp.lt.s32.totalorder %s31, 2
      // Predicated region
      $region61: #{vae_forward.1} parent=5 // pred_check
        %p465 = pneg %p464
      $region62: #{vae_forward.1} parent=5 // pred_check_branch
        %467 = sbr.rel (%p465) target = $region64
      $region63: #{vae_forward.1} parent=5 // pred_region
        // Predicated region
        $region65: #{vae_forward.1} parent=63 // pred_check
          %p468 = pneg %p51
        $region66: #{vae_forward.1} parent=63 // pred_check_branch
          %470 = sbr.rel (%p468) target = $region68
        $region67: #{vae_forward.1} parent=63 // pred_region
          %p471 = scmp.lt.s32.totalorder %s31, 1
          %s472 = scalar_select %p471, %s31, 1
          %s473 = smul.addr %s472, 2
          %s474 = smul.addr %s473, 8
          %s475 = scalar_lea.vmem %s0, %s474
        $region68: #{vae_forward.1} parent=63 // pred_fallthru
          _
        // Predicated region
        $region69: #{vae_forward.1} parent=63 // pred_check
          %p476 = pneg %p77
        $region70: #{vae_forward.1} parent=63 // pred_check_branch
          %478 = sbr.rel (%p476) target = $region72
        $region71: #{vae_forward.1} parent=63 // pred_region
          %p479 = scmp.lt.s32.totalorder %s31, 1
          %s480 = scalar_select %p479, %s31, 1
          %s481 = scalar_lea.vmem %s1, %s480
        $region72: #{vae_forward.1} parent=63 // pred_fallthru
          _
      $region64: #{vae_forward.1} parent=5 // pred_fallthru
        _
      %p482 = scmp.le.s32.totalorder 1, %s31
      %p483 = scmp.lt.s32.totalorder %s31, 3
      %p484 = pnand %p482, %p483
      %p485 = pneg %p484
      // Predicated region
      $region73: #{vae_forward.1} parent=5 // pred_check
        _
      $region74: #{vae_forward.1} parent=5 // pred_check_branch
        %487 = sbr.rel (%p484) target = $region76
      $region75: #{vae_forward.1} parent=5 // pred_region
        %s488 = ssub.s32 %s31, 1
        %p489 = scmp.lt.s32.totalorder %s36, 1
        %s490 = scalar_select %p489, %s36, 1
        %s491 = smul.addr %s490, 2
        %s492 = smul.addr %s491, 8
        %s493 = scalar_lea.vmem %s0, %s492
        %p494 = pneg %p57
        %p495 = pneg %p54
        %p496 = scmp.lt.s32.totalorder %s36, 1
        %s497 = scalar_select %p496, %s36, 1
        %s498 = scalar_lea.vmem %s1, %s497
        %p499 = pneg %p83
        %p500 = pneg %p80
        %p501 = pneg %p104
        %p502 = pneg %p101
        %p503 = pneg %p125
        %p504 = pneg %p122
        %p505 = pneg %p146
        %p506 = pneg %p143
        %p507 = pneg %p167
        %p508 = pneg %p164
        %p509 = pneg %p188
        %p510 = pneg %p185
        %p511 = pneg %p209
        %p512 = pneg %p206
        %p513 = pneg %p230
        %p514 = pneg %p227
        %p515 = pneg %p251
        %p516 = pneg %p248
        %p517 = pneg %p272
        %p518 = pneg %p269
        %p519 = pneg %p293
        %p520 = pneg %p290
        %p521 = pneg %p314
        %p522 = pneg %p311
        %p523 = pneg %p335
        %p524 = pneg %p332
        %p525 = pneg %p361
        %p526 = pneg %p358
        %p527 = scmp.lt.s32.totalorder %s36, 1
        %s528 = scalar_select %p527, %s36, 1
        %s529 = smul.addr %s528, 2
        %s530 = smul.addr %s529, 8
        %s531 = scalar_lea.vmem %s14, %s530
        %p532 = pneg %p387
        %p533 = pneg %p384
        %s534 = sand.u32 %s374, 1
        %s535 = scalar_lea.sflag [#allocation4], %s534
        %s536 = sand.u32 %s374, 1
        %s537 = scalar_lea.vmem [#allocation3], %s536
        %p538 = pneg %p413
        %p539 = pneg %p410
        %s540 = sand.u32 %s400, 1
        %s541 = scalar_lea.sflag [#allocation6], %s540
        %s542 = sand.u32 %s400, 1
        %s543 = scalar_lea.vmem [#allocation5], %s542
        %p544 = scmp.lt.s32.totalorder %s36, 1
        %s545 = scalar_select %p544, %s36, 1
        %s546 = smul.addr %s545, 2
        %s547 = smul.addr %s546, 8
        %s548 = scalar_lea.vmem %s0, %s547
        %p549 = scmp.lt.s32.totalorder %s36, 1
        %s550 = scalar_select %p549, %s36, 1
        %s551 = scalar_lea.vmem %s1, %s550
        %p552 = scmp.lt.s32.totalorder %s36, 1
        %s553 = scalar_select %p552, %s36, 1
        %s554 = smul.addr %s553, 2
        %s555 = smul.addr %s554, 8
        %s556 = scalar_lea.vmem %s14, %s555
        %v557 = vld [vmem:[%s548] sm:$0xff]
        %v558 = vld [vmem:[%s548 + $0x8] sm:$0xff]
        %v559 = vlaneseq
        %v560 = vshrl.u32 %v559, 7
        %v561 = vlaneseq
        %v562 = vand.u32 %v561, 127
        %v563 = vmul.u32 %v560, 2
        %v564 = vadd.s32 %v563, 4294967295
        %vm565 = vcmp.eq.s32.totalorder %v562, %v564
        %v566 = vsel %vm565, 1, 0
        %v567 = vcvt.s32.f32 %v566
        %v568 = vld [vmem:[%s2] sm:$0x1]
        %570 = vset.pattern.permute.xlu0 0
        %571 = vperm.xlu0 %570, %v557
        %v572 = vpop.permute.xlu0 %571
        %575 = vset.pattern.permute.xlu0 0
        %576 = vperm.xlu0 %575, %v558
        %v577 = vpop.permute.xlu0 %576
        %v579 = vlaneseq
        %v580 = vshrl.u32 %v579, 7
        %v581 = vsub.s32 0, %v580
        %v582 = vrot.slane %v568, %v581
        %v583 = vmul.f32 %v572, %v582
        %v584 = vmul.f32 %v577, %v582
        %vm585 = vcmp.eq.s32.totalorder %v562, %v563
        %v586 = vsel %vm585, 1, 0
        %v587 = vcvt.s32.f32 %v586
        %v588 = vld [vmem:[%s2 + $0x1] sm:$0x1]
        %v589 = vlaneseq
        %v590 = vshrl.u32 %v589, 7
        %v591 = vsub.s32 0, %v590
        %v592 = vrot.slane %v588, %v591
        %v593 = vmul.f32 %v572, %v592
        %v594 = vmul.f32 %v577, %v592
        %vm595 = vcmask 130048
        %v597 = vsel %vm595, %v587, 0
        %599 = vmatprep.subr.mxu0 0.0
        %600 = vmatpush1.msra.mxu0 0.0
        %601 = vmatprep.subr.mxu0 0.0
        %602 = vmatpush1.msra.mxu0 0.0
        %603 = vmatprep.subr.mxu0 0.0
        %604 = vmatpush1.msra.mxu0 0.0
        %605 = vmatprep.subr.mxu0 0.0
        %606 = vmatpush1.msra.mxu0 0.0
        %607 = vmatprep.subr.mxu0 0.0
        %608 = vmatpush1.msra.mxu0 0.0
        %609 = vmatprep.subr.mxu0 0.0
        %610 = vmatpush1.msra.mxu0 0.0
        %611 = vmatprep.subr.mxu0 0.0
        %612 = vmatpush1.msra.mxu0 0.0
        %613 = vmatprep.subr.mxu0 0.0
        %614 = vmatpush1.msra.mxu0 0.0
        %615 = vmatprep.subr.mxu0 0.0
        %616 = vmatpush1.msra.mxu0 0.0
        %617 = vmatprep.subr.mxu0 0.0
        %618 = vmatpush1.msra.mxu0 0.0
        %619 = vmatprep.subr.mxu0 0.0
        %620 = vmatpush1.msra.mxu0 0.0
        %621 = vmatprep.subr.mxu0 0.0
        %622 = vmatpush1.msra.mxu0 0.0
        %623 = vmatprep.subr.mxu0 0.0
        %624 = vmatpush1.msra.mxu0 0.0
        %625 = vmatprep.subr.mxu0 0.0
        %626 = vmatpush1.msra.mxu0 0.0
        %627 = vmatprep.subr.mxu0 0.0
        %628 = vmatpush1.msra.mxu0 %v594
        %629 = vmatprep.subr.mxu0 0.0
        %630 = vmatpush1.msra.mxu0 %v593
        %631 = vmatprep.subr.mxu0 0.0
        %632 = vmatpush2.msra.mxu0 0.0
        %633 = vmatprep.subr.mxu0 0.0
        %634 = vmatpush2.msra.mxu0 0.0
        %635 = vmatprep.subr.mxu0 0.0
        %636 = vmatpush2.msra.mxu0 0.0
        %637 = vmatprep.subr.mxu0 0.0
        %638 = vmatpush2.msra.mxu0 0.0
        %639 = vmatprep.subr.mxu0 0.0
        %640 = vmatpush2.msra.mxu0 0.0
        %641 = vmatprep.subr.mxu0 0.0
        %642 = vmatpush2.msra.mxu0 0.0
        %643 = vmatprep.subr.mxu0 0.0
        %644 = vmatpush2.msra.mxu0 0.0
        %645 = vmatprep.subr.mxu0 0.0
        %646 = vmatpush2.msra.mxu0 0.0
        %647 = vmatprep.subr.mxu0 0.0
        %648 = vmatpush2.msra.mxu0 0.0
        %649 = vmatprep.subr.mxu0 0.0
        %650 = vmatpush2.msra.mxu0 0.0
        %651 = vmatprep.subr.mxu0 0.0
        %652 = vmatpush2.msra.mxu0 0.0
        %653 = vmatprep.subr.mxu0 0.0
        %654 = vmatpush2.msra.mxu0 0.0
        %655 = vmatprep.subr.mxu0 0.0
        %656 = vmatpush2.msra.mxu0 0.0
        %657 = vmatprep.subr.mxu0 0.0
        %658 = vmatpush2.msra.mxu0 0.0
        %659 = vmatprep.subr.mxu0 0.0
        %660 = vmatpush2.msra.mxu0 0.0
        %661 = vmatprep.subr.mxu0 0.0
        %662 = vmatpush2.msra.mxu0 0.0
        %663 = vmatprep.mubr.f32.mxu0 0.0
        %664 = vmatmul.mubr.f32.gmra.mxu0 %v597
        %v665 = vpop.f32.mrf.mxu0
        %v666 = vadd.f32 0.0, %v665
        %v667 = vpop.f32.mrf.mxu0
        %668 = vdwg.mxu0
        %v670 = vsel %vm595, %v567, 0
        %672 = vmatprep.subr.mxu0 0.0
        %673 = vmatpush1.msra.mxu0 0.0
        %674 = vmatprep.subr.mxu0 0.0
        %675 = vmatpush1.msra.mxu0 0.0
        %676 = vmatprep.subr.mxu0 0.0
        %677 = vmatpush1.msra.mxu0 0.0
        %678 = vmatprep.subr.mxu0 0.0
        %679 = vmatpush1.msra.mxu0 0.0
        %680 = vmatprep.subr.mxu0 0.0
        %681 = vmatpush1.msra.mxu0 0.0
        %682 = vmatprep.subr.mxu0 0.0
        %683 = vmatpush1.msra.mxu0 0.0
        %684 = vmatprep.subr.mxu0 0.0
        %685 = vmatpush1.msra.mxu0 0.0
        %686 = vmatprep.subr.mxu0 0.0
        %687 = vmatpush1.msra.mxu0 0.0
        %688 = vmatprep.subr.mxu0 0.0
        %689 = vmatpush1.msra.mxu0 0.0
        %690 = vmatprep.subr.mxu0 0.0
        %691 = vmatpush1.msra.mxu0 0.0
        %692 = vmatprep.subr.mxu0 0.0
        %693 = vmatpush1.msra.mxu0 0.0
        %694 = vmatprep.subr.mxu0 0.0
        %695 = vmatpush1.msra.mxu0 0.0
        %696 = vmatprep.subr.mxu0 0.0
        %697 = vmatpush1.msra.mxu0 0.0
        %698 = vmatprep.subr.mxu0 0.0
        %699 = vmatpush1.msra.mxu0 0.0
        %700 = vmatprep.subr.mxu0 0.0
        %701 = vmatpush1.msra.mxu0 %v584
        %702 = vmatprep.subr.mxu0 0.0
        %703 = vmatpush1.msra.mxu0 %v583
        %704 = vmatprep.subr.mxu0 0.0
        %705 = vmatpush2.msra.mxu0 0.0
        %706 = vmatprep.subr.mxu0 0.0
        %707 = vmatpush2.msra.mxu0 0.0
        %708 = vmatprep.subr.mxu0 0.0
        %709 = vmatpush2.msra.mxu0 0.0
        %710 = vmatprep.subr.mxu0 0.0
        %711 = vmatpush2.msra.mxu0 0.0
        %712 = vmatprep.subr.mxu0 0.0
        %713 = vmatpush2.msra.mxu0 0.0
        %714 = vmatprep.subr.mxu0 0.0
        %715 = vmatpush2.msra.mxu0 0.0
        %716 = vmatprep.subr.mxu0 0.0
        %717 = vmatpush2.msra.mxu0 0.0
        %718 = vmatprep.subr.mxu0 0.0
        %719 = vmatpush2.msra.mxu0 0.0
        %720 = vmatprep.subr.mxu0 0.0
        %721 = vmatpush2.msra.mxu0 0.0
        %722 = vmatprep.subr.mxu0 0.0
        %723 = vmatpush2.msra.mxu0 0.0
        %724 = vmatprep.subr.mxu0 0.0
        %725 = vmatpush2.msra.mxu0 0.0
        %726 = vmatprep.subr.mxu0 0.0
        %727 = vmatpush2.msra.mxu0 0.0
        %728 = vmatprep.subr.mxu0 0.0
        %729 = vmatpush2.msra.mxu0 0.0
        %730 = vmatprep.subr.mxu0 0.0
        %731 = vmatpush2.msra.mxu0 0.0
        %732 = vmatprep.subr.mxu0 0.0
        %733 = vmatpush2.msra.mxu0 0.0
        %734 = vmatprep.subr.mxu0 0.0
        %735 = vmatpush2.msra.mxu0 0.0
        %736 = vmatprep.mubr.f32.mxu0 0.0
        %737 = vmatmul.mubr.f32.gmra.mxu0 %v670
        %v738 = vpop.f32.mrf.mxu0
        %v739 = vadd.f32 %v666, %v738
        %v740 = vpop.f32.mrf.mxu0
        %741 = vdwg.mxu0
        %v742 = vadd.s32 %v563, 1
        %vm743 = vcmp.eq.s32.totalorder %v562, %v742
        %v744 = vsel %vm743, 1, 0
        %v745 = vcvt.s32.f32 %v744
        %v746 = vld [vmem:[%s2 + $0x2] sm:$0x1]
        %v747 = vlaneseq
        %v748 = vshrl.u32 %v747, 7
        %v749 = vsub.s32 0, %v748
        %v750 = vrot.slane %v746, %v749
        %v751 = vmul.f32 %v572, %v750
        %v752 = vmul.f32 %v577, %v750
        %v754 = vsel %vm595, %v745, 0
        %756 = vmatprep.subr.mxu0 0.0
        %757 = vmatpush1.msra.mxu0 0.0
        %758 = vmatprep.subr.mxu0 0.0
        %759 = vmatpush1.msra.mxu0 0.0
        %760 = vmatprep.subr.mxu0 0.0
        %761 = vmatpush1.msra.mxu0 0.0
        %762 = vmatprep.subr.mxu0 0.0
        %763 = vmatpush1.msra.mxu0 0.0
        %764 = vmatprep.subr.mxu0 0.0
        %765 = vmatpush1.msra.mxu0 0.0
        %766 = vmatprep.subr.mxu0 0.0
        %767 = vmatpush1.msra.mxu0 0.0
        %768 = vmatprep.subr.mxu0 0.0
        %769 = vmatpush1.msra.mxu0 0.0
        %770 = vmatprep.subr.mxu0 0.0
        %771 = vmatpush1.msra.mxu0 0.0
        %772 = vmatprep.subr.mxu0 0.0
        %773 = vmatpush1.msra.mxu0 0.0
        %774 = vmatprep.subr.mxu0 0.0
        %775 = vmatpush1.msra.mxu0 0.0
        %776 = vmatprep.subr.mxu0 0.0
        %777 = vmatpush1.msra.mxu0 0.0
        %778 = vmatprep.subr.mxu0 0.0
        %779 = vmatpush1.msra.mxu0 0.0
        %780 = vmatprep.subr.mxu0 0.0
        %781 = vmatpush1.msra.mxu0 0.0
        %782 = vmatprep.subr.mxu0 0.0
        %783 = vmatpush1.msra.mxu0 0.0
        %784 = vmatprep.subr.mxu0 0.0
        %785 = vmatpush1.msra.mxu0 %v752
        %786 = vmatprep.subr.mxu0 0.0
        %787 = vmatpush1.msra.mxu0 %v751
        %788 = vmatprep.subr.mxu0 0.0
        %789 = vmatpush2.msra.mxu0 0.0
        %790 = vmatprep.subr.mxu0 0.0
        %791 = vmatpush2.msra.mxu0 0.0
        %792 = vmatprep.subr.mxu0 0.0
        %793 = vmatpush2.msra.mxu0 0.0
        %794 = vmatprep.subr.mxu0 0.0
        %795 = vmatpush2.msra.mxu0 0.0
        %796 = vmatprep.subr.mxu0 0.0
        %797 = vmatpush2.msra.mxu0 0.0
        %798 = vmatprep.subr.mxu0 0.0
        %799 = vmatpush2.msra.mxu0 0.0
        %800 = vmatprep.subr.mxu0 0.0
        %801 = vmatpush2.msra.mxu0 0.0
        %802 = vmatprep.subr.mxu0 0.0
        %803 = vmatpush2.msra.mxu0 0.0
        %804 = vmatprep.subr.mxu0 0.0
        %805 = vmatpush2.msra.mxu0 0.0
        %806 = vmatprep.subr.mxu0 0.0
        %807 = vmatpush2.msra.mxu0 0.0
        %808 = vmatprep.subr.mxu0 0.0
        %809 = vmatpush2.msra.mxu0 0.0
        %810 = vmatprep.subr.mxu0 0.0
        %811 = vmatpush2.msra.mxu0 0.0
        %812 = vmatprep.subr.mxu0 0.0
        %813 = vmatpush2.msra.mxu0 0.0
        %814 = vmatprep.subr.mxu0 0.0
        %815 = vmatpush2.msra.mxu0 0.0
        %816 = vmatprep.subr.mxu0 0.0
        %817 = vmatpush2.msra.mxu0 0.0
        %818 = vmatprep.subr.mxu0 0.0
        %819 = vmatpush2.msra.mxu0 0.0
        %820 = vmatprep.mubr.f32.mxu0 0.0
        %821 = vmatmul.mubr.f32.gmra.mxu0 %v754
        %v822 = vpop.f32.mrf.mxu0
        %v823 = vadd.f32 0.0, %v822
        %v824 = vpop.f32.mrf.mxu0
        %825 = vdwg.mxu0
        %v826 = vadd.f32 %v739, %v823
        %v827 = vadd.s32 %v563, 2
        %vm828 = vcmp.eq.s32.totalorder %v562, %v827
        %v829 = vsel %vm828, 1, 0
        %v830 = vcvt.s32.f32 %v829
        %v831 = vld [vmem:[%s2 + $0x3] sm:$0x1]
        %v832 = vlaneseq
        %v833 = vshrl.u32 %v832, 7
        %v834 = vsub.s32 0, %v833
        %v835 = vrot.slane %v831, %v834
        %v836 = vmul.f32 %v572, %v835
        %v837 = vmul.f32 %v577, %v835
        %v839 = vsel %vm595, %v830, 0
        %841 = vmatprep.subr.mxu0 0.0
        %842 = vmatpush1.msra.mxu0 0.0
        %843 = vmatprep.subr.mxu0 0.0
        %844 = vmatpush1.msra.mxu0 0.0
        %845 = vmatprep.subr.mxu0 0.0
        %846 = vmatpush1.msra.mxu0 0.0
        %847 = vmatprep.subr.mxu0 0.0
        %848 = vmatpush1.msra.mxu0 0.0
        %849 = vmatprep.subr.mxu0 0.0
        %850 = vmatpush1.msra.mxu0 0.0
        %851 = vmatprep.subr.mxu0 0.0
        %852 = vmatpush1.msra.mxu0 0.0
        %853 = vmatprep.subr.mxu0 0.0
        %854 = vmatpush1.msra.mxu0 0.0
        %855 = vmatprep.subr.mxu0 0.0
        %856 = vmatpush1.msra.mxu0 0.0
        %857 = vmatprep.subr.mxu0 0.0
        %858 = vmatpush1.msra.mxu0 0.0
        %859 = vmatprep.subr.mxu0 0.0
        %860 = vmatpush1.msra.mxu0 0.0
        %861 = vmatprep.subr.mxu0 0.0
        %862 = vmatpush1.msra.mxu0 0.0
        %863 = vmatprep.subr.mxu0 0.0
        %864 = vmatpush1.msra.mxu0 0.0
        %865 = vmatprep.subr.mxu0 0.0
        %866 = vmatpush1.msra.mxu0 0.0
        %867 = vmatprep.subr.mxu0 0.0
        %868 = vmatpush1.msra.mxu0 0.0
        %869 = vmatprep.subr.mxu0 0.0
        %870 = vmatpush1.msra.mxu0 %v837
        %871 = vmatprep.subr.mxu0 0.0
        %872 = vmatpush1.msra.mxu0 %v836
        %873 = vmatprep.subr.mxu0 0.0
        %874 = vmatpush2.msra.mxu0 0.0
        %875 = vmatprep.subr.mxu0 0.0
        %876 = vmatpush2.msra.mxu0 0.0
        %877 = vmatprep.subr.mxu0 0.0
        %878 = vmatpush2.msra.mxu0 0.0
        %879 = vmatprep.subr.mxu0 0.0
        %880 = vmatpush2.msra.mxu0 0.0
        %881 = vmatprep.subr.mxu0 0.0
        %882 = vmatpush2.msra.mxu0 0.0
        %883 = vmatprep.subr.mxu0 0.0
        %884 = vmatpush2.msra.mxu0 0.0
        %885 = vmatprep.subr.mxu0 0.0
        %886 = vmatpush2.msra.mxu0 0.0
        %887 = vmatprep.subr.mxu0 0.0
        %888 = vmatpush2.msra.mxu0 0.0
        %889 = vmatprep.subr.mxu0 0.0
        %890 = vmatpush2.msra.mxu0 0.0
        %891 = vmatprep.subr.mxu0 0.0
        %892 = vmatpush2.msra.mxu0 0.0
        %893 = vmatprep.subr.mxu0 0.0
        %894 = vmatpush2.msra.mxu0 0.0
        %895 = vmatprep.subr.mxu0 0.0
        %896 = vmatpush2.msra.mxu0 0.0
        %897 = vmatprep.subr.mxu0 0.0
        %898 = vmatpush2.msra.mxu0 0.0
        %899 = vmatprep.subr.mxu0 0.0
        %900 = vmatpush2.msra.mxu0 0.0
        %901 = vmatprep.subr.mxu0 0.0
        %902 = vmatpush2.msra.mxu0 0.0
        %903 = vmatprep.subr.mxu0 0.0
        %904 = vmatpush2.msra.mxu0 0.0
        %905 = vmatprep.mubr.f32.mxu0 0.0
        %906 = vmatmul.mubr.f32.gmra.mxu0 %v839
        %v907 = vpop.f32.mrf.mxu0
        %v908 = vadd.f32 0.0, %v907
        %v909 = vpop.f32.mrf.mxu0
        %910 = vdwg.mxu0
        %v911 = vadd.f32 %v826, %v908
        %v912 = vld [vmem:[%s3] sm:$0x1]
        %v914 = vlaneseq
        %v915 = vshrl.u32 %v914, 7
        %v916 = vsub.s32 0, %v915
        %v917 = vrot.slane %v912, %v916
        %v919 = vadd.f32 %v911, %v917
        %v920 = vmax.f32 %v919, 0.0
        %v921 = vld [vmem:[%s4] sm:$0xff]
        %v922 = vld [vmem:[%s4 + $0x8] sm:$0xff]
        %v923 = vld [vmem:[%s4 + $0x10] sm:$0xff]
        %v924 = vld [vmem:[%s4 + $0x18] sm:$0xff]
        %vm925 = vcmask 64512
        %v926 = vsel %vm925, %v567, 0
        %928 = vmatprep.subr.mxu0 0.0
        %929 = vmatpush1.msra.mxu0 0.0
        %930 = vmatprep.subr.mxu0 0.0
        %931 = vmatpush1.msra.mxu0 0.0
        %932 = vmatprep.subr.mxu0 0.0
        %933 = vmatpush1.msra.mxu0 0.0
        %934 = vmatprep.subr.mxu0 0.0
        %935 = vmatpush1.msra.mxu0 0.0
        %936 = vmatprep.subr.mxu0 0.0
        %937 = vmatpush1.msra.mxu0 0.0
        %938 = vmatprep.subr.mxu0 0.0
        %939 = vmatpush1.msra.mxu0 0.0
        %940 = vmatprep.subr.mxu0 0.0
        %941 = vmatpush1.msra.mxu0 0.0
        %942 = vmatprep.subr.mxu0 0.0
        %943 = vmatpush1.msra.mxu0 0.0
        %944 = vmatprep.subr.mxu0 0.0
        %945 = vmatpush1.msra.mxu0 0.0
        %946 = vmatprep.subr.mxu0 0.0
        %947 = vmatpush1.msra.mxu0 0.0
        %948 = vmatprep.subr.mxu0 0.0
        %949 = vmatpush1.msra.mxu0 0.0
        %950 = vmatprep.subr.mxu0 0.0
        %951 = vmatpush1.msra.mxu0 0.0
        %952 = vmatprep.subr.mxu0 0.0
        %953 = vmatpush1.msra.mxu0 0.0
        %954 = vmatprep.subr.mxu0 0.0
        %955 = vmatpush1.msra.mxu0 0.0
        %956 = vmatprep.subr.mxu0 0.0
        %957 = vmatpush1.msra.mxu0 0.0
        %958 = vmatprep.subr.mxu0 0.0
        %959 = vmatpush1.msra.mxu0 %v920
        %960 = vmatprep.subr.mxu0 0.0
        %961 = vmatpush2.msra.mxu0 0.0
        %962 = vmatprep.subr.mxu0 0.0
        %963 = vmatpush2.msra.mxu0 0.0
        %964 = vmatprep.subr.mxu0 0.0
        %965 = vmatpush2.msra.mxu0 0.0
        %966 = vmatprep.subr.mxu0 0.0
        %967 = vmatpush2.msra.mxu0 0.0
        %968 = vmatprep.subr.mxu0 0.0
        %969 = vmatpush2.msra.mxu0 0.0
        %970 = vmatprep.subr.mxu0 0.0
        %971 = vmatpush2.msra.mxu0 0.0
        %972 = vmatprep.subr.mxu0 0.0
        %973 = vmatpush2.msra.mxu0 0.0
        %974 = vmatprep.subr.mxu0 0.0
        %975 = vmatpush2.msra.mxu0 0.0
        %976 = vmatprep.subr.mxu0 0.0
        %977 = vmatpush2.msra.mxu0 0.0
        %978 = vmatprep.subr.mxu0 0.0
        %979 = vmatpush2.msra.mxu0 0.0
        %980 = vmatprep.subr.mxu0 0.0
        %981 = vmatpush2.msra.mxu0 0.0
        %982 = vmatprep.subr.mxu0 0.0
        %983 = vmatpush2.msra.mxu0 0.0
        %984 = vmatprep.subr.mxu0 0.0
        %985 = vmatpush2.msra.mxu0 0.0
        %986 = vmatprep.subr.mxu0 0.0
        %987 = vmatpush2.msra.mxu0 0.0
        %988 = vmatprep.subr.mxu0 0.0
        %989 = vmatpush2.msra.mxu0 0.0
        %990 = vmatprep.subr.mxu0 0.0
        %991 = vmatpush2.msra.mxu0 0.0
        %992 = vmatprep.mubr.f32.mxu0 0.0
        %993 = vmatmul.mubr.f32.gmra.mxu0 %v926
        %v994 = vpop.f32.mrf.mxu0
        %v995 = vadd.f32 0.0, %v994
        %v996 = vpop.f32.mrf.mxu0
        %997 = vdwg.mxu0
        %v998 = vld [vmem:[%s4 + $0x20] sm:$0xff]
        %v999 = vld [vmem:[%s4 + $0x28] sm:$0xff]
        %v1000 = vld [vmem:[%s4 + $0x30] sm:$0xff]
        %v1001 = vld [vmem:[%s4 + $0x38] sm:$0xff]
        %v1002 = vsel %vm925, %v587, 0
        %1004 = vmatprep.subr.mxu0 0.0
        %1005 = vmatpush1.msra.mxu0 0.0
        %1006 = vmatprep.subr.mxu0 0.0
        %1007 = vmatpush1.msra.mxu0 0.0
        %1008 = vmatprep.subr.mxu0 0.0
        %1009 = vmatpush1.msra.mxu0 0.0
        %1010 = vmatprep.subr.mxu0 0.0
        %1011 = vmatpush1.msra.mxu0 0.0
        %1012 = vmatprep.subr.mxu0 0.0
        %1013 = vmatpush1.msra.mxu0 0.0
        %1014 = vmatprep.subr.mxu0 0.0
        %1015 = vmatpush1.msra.mxu0 0.0
        %1016 = vmatprep.subr.mxu0 0.0
        %1017 = vmatpush1.msra.mxu0 0.0
        %1018 = vmatprep.subr.mxu0 0.0
        %1019 = vmatpush1.msra.mxu0 0.0
        %1020 = vmatprep.subr.mxu0 0.0
        %1021 = vmatpush1.msra.mxu0 0.0
        %1022 = vmatprep.subr.mxu0 0.0
        %1023 = vmatpush1.msra.mxu0 0.0
        %1024 = vmatprep.subr.mxu0 0.0
        %1025 = vmatpush1.msra.mxu0 0.0
        %1026 = vmatprep.subr.mxu0 0.0
        %1027 = vmatpush1.msra.mxu0 0.0
        %1028 = vmatprep.subr.mxu0 0.0
        %1029 = vmatpush1.msra.mxu0 0.0
        %1030 = vmatprep.subr.mxu0 0.0
        %1031 = vmatpush1.msra.mxu0 0.0
        %1032 = vmatprep.subr.mxu0 0.0
        %1033 = vmatpush1.msra.mxu0 0.0
        %1034 = vmatprep.subr.mxu0 0.0
        %1035 = vmatpush1.msra.mxu0 %v920
        %1036 = vmatprep.subr.mxu0 0.0
        %1037 = vmatpush2.msra.mxu0 0.0
        %1038 = vmatprep.subr.mxu0 0.0
        %1039 = vmatpush2.msra.mxu0 0.0
        %1040 = vmatprep.subr.mxu0 0.0
        %1041 = vmatpush2.msra.mxu0 0.0
        %1042 = vmatprep.subr.mxu0 0.0
        %1043 = vmatpush2.msra.mxu0 0.0
        %1044 = vmatprep.subr.mxu0 0.0
        %1045 = vmatpush2.msra.mxu0 0.0
        %1046 = vmatprep.subr.mxu0 0.0
        %1047 = vmatpush2.msra.mxu0 0.0
        %1048 = vmatprep.subr.mxu0 0.0
        %1049 = vmatpush2.msra.mxu0 0.0
        %1050 = vmatprep.subr.mxu0 0.0
        %1051 = vmatpush2.msra.mxu0 0.0
        %1052 = vmatprep.subr.mxu0 0.0
        %1053 = vmatpush2.msra.mxu0 0.0
        %1054 = vmatprep.subr.mxu0 0.0
        %1055 = vmatpush2.msra.mxu0 0.0
        %1056 = vmatprep.subr.mxu0 0.0
        %1057 = vmatpush2.msra.mxu0 0.0
        %1058 = vmatprep.subr.mxu0 0.0
        %1059 = vmatpush2.msra.mxu0 0.0
        %1060 = vmatprep.subr.mxu0 0.0
        %1061 = vmatpush2.msra.mxu0 0.0
        %1062 = vmatprep.subr.mxu0 0.0
        %1063 = vmatpush2.msra.mxu0 0.0
        %1064 = vmatprep.subr.mxu0 0.0
        %1065 = vmatpush2.msra.mxu0 0.0
        %1066 = vmatprep.subr.mxu0 0.0
        %1067 = vmatpush2.msra.mxu0 0.0
        %1068 = vmatprep.mubr.f32.mxu0 0.0
        %1069 = vmatmul.mubr.f32.gmra.mxu0 %v1002
        %v1070 = vpop.f32.mrf.mxu0
        %v1071 = vadd.f32 0.0, %v1070
        %v1072 = vpop.f32.mrf.mxu0
        %1073 = vdwg.mxu0
        %vm1074 = vcmask 261120
        %v1076 = vsel %vm1074, %v1071, 0
        %1078 = vmatprep.subr.mxu0 0.0
        %1079 = vmatpush1.msra.mxu0 0.0
        %1080 = vmatprep.subr.mxu0 0.0
        %1081 = vmatpush1.msra.mxu0 0.0
        %1082 = vmatprep.subr.mxu0 0.0
        %1083 = vmatpush1.msra.mxu0 0.0
        %1084 = vmatprep.subr.mxu0 0.0
        %1085 = vmatpush1.msra.mxu0 0.0
        %1086 = vmatprep.subr.mxu0 0.0
        %1087 = vmatpush1.msra.mxu0 0.0
        %1088 = vmatprep.subr.mxu0 0.0
        %1089 = vmatpush1.msra.mxu0 0.0
        %1090 = vmatprep.subr.mxu0 0.0
        %1091 = vmatpush1.msra.mxu0 0.0
        %1092 = vmatprep.subr.mxu0 0.0
        %1093 = vmatpush1.msra.mxu0 0.0
        %1094 = vmatprep.subr.mxu0 0.0
        %1095 = vmatpush1.msra.mxu0 0.0
        %1096 = vmatprep.subr.mxu0 0.0
        %1097 = vmatpush1.msra.mxu0 0.0
        %1098 = vmatprep.subr.mxu0 0.0
        %1099 = vmatpush1.msra.mxu0 0.0
        %1100 = vmatprep.subr.mxu0 0.0
        %1101 = vmatpush1.msra.mxu0 0.0
        %1102 = vmatprep.subr.mxu0 0.0
        %1103 = vmatpush1.msra.mxu0 %v1001
        %1104 = vmatprep.subr.mxu0 0.0
        %1105 = vmatpush1.msra.mxu0 %v1000
        %1106 = vmatprep.subr.mxu0 0.0
        %1107 = vmatpush1.msra.mxu0 %v999
        %1108 = vmatprep.subr.mxu0 0.0
        %1109 = vmatpush1.msra.mxu0 %v998
        %1110 = vmatprep.subr.mxu0 0.0
        %1111 = vmatpush2.msra.mxu0 0.0
        %1112 = vmatprep.subr.mxu0 0.0
        %1113 = vmatpush2.msra.mxu0 0.0
        %1114 = vmatprep.subr.mxu0 0.0
        %1115 = vmatpush2.msra.mxu0 0.0
        %1116 = vmatprep.subr.mxu0 0.0
        %1117 = vmatpush2.msra.mxu0 0.0
        %1118 = vmatprep.subr.mxu0 0.0
        %1119 = vmatpush2.msra.mxu0 0.0
        %1120 = vmatprep.subr.mxu0 0.0
        %1121 = vmatpush2.msra.mxu0 0.0
        %1122 = vmatprep.subr.mxu0 0.0
        %1123 = vmatpush2.msra.mxu0 0.0
        %1124 = vmatprep.subr.mxu0 0.0
        %1125 = vmatpush2.msra.mxu0 0.0
        %1126 = vmatprep.subr.mxu0 0.0
        %1127 = vmatpush2.msra.mxu0 0.0
        %1128 = vmatprep.subr.mxu0 0.0
        %1129 = vmatpush2.msra.mxu0 0.0
        %1130 = vmatprep.subr.mxu0 0.0
        %1131 = vmatpush2.msra.mxu0 0.0
        %1132 = vmatprep.subr.mxu0 0.0
        %1133 = vmatpush2.msra.mxu0 0.0
        %1134 = vmatprep.subr.mxu0 0.0
        %1135 = vmatpush2.msra.mxu0 0.0
        %1136 = vmatprep.subr.mxu0 0.0
        %1137 = vmatpush2.msra.mxu0 0.0
        %1138 = vmatprep.subr.mxu0 0.0
        %1139 = vmatpush2.msra.mxu0 0.0
        %1140 = vmatprep.subr.mxu0 0.0
        %1141 = vmatpush2.msra.mxu0 0.0
        %1142 = vmatprep.mubr.f32.mxu0 0.0
        %1143 = vmatmul.mubr.f32.gmra.mxu0 %v1076
        %v1144 = vpop.f32.mrf.mxu0
        %v1145 = vadd.f32 0.0, %v1144
        %v1146 = vpop.f32.mrf.mxu0
        %1147 = vdwg.mxu0
        %v1149 = vsel %vm1074, %v995, 0
        %1151 = vmatprep.subr.mxu0 0.0
        %1152 = vmatpush1.msra.mxu0 0.0
        %1153 = vmatprep.subr.mxu0 0.0
        %1154 = vmatpush1.msra.mxu0 0.0
        %1155 = vmatprep.subr.mxu0 0.0
        %1156 = vmatpush1.msra.mxu0 0.0
        %1157 = vmatprep.subr.mxu0 0.0
        %1158 = vmatpush1.msra.mxu0 0.0
        %1159 = vmatprep.subr.mxu0 0.0
        %1160 = vmatpush1.msra.mxu0 0.0
        %1161 = vmatprep.subr.mxu0 0.0
        %1162 = vmatpush1.msra.mxu0 0.0
        %1163 = vmatprep.subr.mxu0 0.0
        %1164 = vmatpush1.msra.mxu0 0.0
        %1165 = vmatprep.subr.mxu0 0.0
        %1166 = vmatpush1.msra.mxu0 0.0
        %1167 = vmatprep.subr.mxu0 0.0
        %1168 = vmatpush1.msra.mxu0 0.0
        %1169 = vmatprep.subr.mxu0 0.0
        %1170 = vmatpush1.msra.mxu0 0.0
        %1171 = vmatprep.subr.mxu0 0.0
        %1172 = vmatpush1.msra.mxu0 0.0
        %1173 = vmatprep.subr.mxu0 0.0
        %1174 = vmatpush1.msra.mxu0 0.0
        %1175 = vmatprep.subr.mxu0 0.0
        %1176 = vmatpush1.msra.mxu0 %v924
        %1177 = vmatprep.subr.mxu0 0.0
        %1178 = vmatpush1.msra.mxu0 %v923
        %1179 = vmatprep.subr.mxu0 0.0
        %1180 = vmatpush1.msra.mxu0 %v922
        %1181 = vmatprep.subr.mxu0 0.0
        %1182 = vmatpush1.msra.mxu0 %v921
        %1183 = vmatprep.subr.mxu0 0.0
        %1184 = vmatpush2.msra.mxu0 0.0
        %1185 = vmatprep.subr.mxu0 0.0
        %1186 = vmatpush2.msra.mxu0 0.0
        %1187 = vmatprep.subr.mxu0 0.0
        %1188 = vmatpush2.msra.mxu0 0.0
        %1189 = vmatprep.subr.mxu0 0.0
        %1190 = vmatpush2.msra.mxu0 0.0
        %1191 = vmatprep.subr.mxu0 0.0
        %1192 = vmatpush2.msra.mxu0 0.0
        %1193 = vmatprep.subr.mxu0 0.0
        %1194 = vmatpush2.msra.mxu0 0.0
        %1195 = vmatprep.subr.mxu0 0.0
        %1196 = vmatpush2.msra.mxu0 0.0
        %1197 = vmatprep.subr.mxu0 0.0
        %1198 = vmatpush2.msra.mxu0 0.0
        %1199 = vmatprep.subr.mxu0 0.0
        %1200 = vmatpush2.msra.mxu0 0.0
        %1201 = vmatprep.subr.mxu0 0.0
        %1202 = vmatpush2.msra.mxu0 0.0
        %1203 = vmatprep.subr.mxu0 0.0
        %1204 = vmatpush2.msra.mxu0 0.0
        %1205 = vmatprep.subr.mxu0 0.0
        %1206 = vmatpush2.msra.mxu0 0.0
        %1207 = vmatprep.subr.mxu0 0.0
        %1208 = vmatpush2.msra.mxu0 0.0
        %1209 = vmatprep.subr.mxu0 0.0
        %1210 = vmatpush2.msra.mxu0 0.0
        %1211 = vmatprep.subr.mxu0 0.0
        %1212 = vmatpush2.msra.mxu0 0.0
        %1213 = vmatprep.subr.mxu0 0.0
        %1214 = vmatpush2.msra.mxu0 0.0
        %1215 = vmatprep.mubr.f32.mxu0 0.0
        %1216 = vmatmul.mubr.f32.gmra.mxu0 %v1149
        %v1217 = vpop.f32.mrf.mxu0
        %v1218 = vadd.f32 %v1145, %v1217
        %v1219 = vpop.f32.mrf.mxu0
        %1220 = vdwg.mxu0
        %v1221 = vld [vmem:[%s4 + $0x40] sm:$0xff]
        %v1222 = vld [vmem:[%s4 + $0x48] sm:$0xff]
        %v1223 = vld [vmem:[%s4 + $0x50] sm:$0xff]
        %v1224 = vld [vmem:[%s4 + $0x58] sm:$0xff]
        %v1225 = vsel %vm925, %v745, 0
        %1227 = vmatprep.subr.mxu0 0.0
        %1228 = vmatpush1.msra.mxu0 0.0
        %1229 = vmatprep.subr.mxu0 0.0
        %1230 = vmatpush1.msra.mxu0 0.0
        %1231 = vmatprep.subr.mxu0 0.0
        %1232 = vmatpush1.msra.mxu0 0.0
        %1233 = vmatprep.subr.mxu0 0.0
        %1234 = vmatpush1.msra.mxu0 0.0
        %1235 = vmatprep.subr.mxu0 0.0
        %1236 = vmatpush1.msra.mxu0 0.0
        %1237 = vmatprep.subr.mxu0 0.0
        %1238 = vmatpush1.msra.mxu0 0.0
        %1239 = vmatprep.subr.mxu0 0.0
        %1240 = vmatpush1.msra.mxu0 0.0
        %1241 = vmatprep.subr.mxu0 0.0
        %1242 = vmatpush1.msra.mxu0 0.0
        %1243 = vmatprep.subr.mxu0 0.0
        %1244 = vmatpush1.msra.mxu0 0.0
        %1245 = vmatprep.subr.mxu0 0.0
        %1246 = vmatpush1.msra.mxu0 0.0
        %1247 = vmatprep.subr.mxu0 0.0
        %1248 = vmatpush1.msra.mxu0 0.0
        %1249 = vmatprep.subr.mxu0 0.0
        %1250 = vmatpush1.msra.mxu0 0.0
        %1251 = vmatprep.subr.mxu0 0.0
        %1252 = vmatpush1.msra.mxu0 0.0
        %1253 = vmatprep.subr.mxu0 0.0
        %1254 = vmatpush1.msra.mxu0 0.0
        %1255 = vmatprep.subr.mxu0 0.0
        %1256 = vmatpush1.msra.mxu0 0.0
        %1257 = vmatprep.subr.mxu0 0.0
        %1258 = vmatpush1.msra.mxu0 %v920
        %1259 = vmatprep.subr.mxu0 0.0
        %1260 = vmatpush2.msra.mxu0 0.0
        %1261 = vmatprep.subr.mxu0 0.0
        %1262 = vmatpush2.msra.mxu0 0.0
        %1263 = vmatprep.subr.mxu0 0.0
        %1264 = vmatpush2.msra.mxu0 0.0
        %1265 = vmatprep.subr.mxu0 0.0
        %1266 = vmatpush2.msra.mxu0 0.0
        %1267 = vmatprep.subr.mxu0 0.0
        %1268 = vmatpush2.msra.mxu0 0.0
        %1269 = vmatprep.subr.mxu0 0.0
        %1270 = vmatpush2.msra.mxu0 0.0
        %1271 = vmatprep.subr.mxu0 0.0
        %1272 = vmatpush2.msra.mxu0 0.0
        %1273 = vmatprep.subr.mxu0 0.0
        %1274 = vmatpush2.msra.mxu0 0.0
        %1275 = vmatprep.subr.mxu0 0.0
        %1276 = vmatpush2.msra.mxu0 0.0
        %1277 = vmatprep.subr.mxu0 0.0
        %1278 = vmatpush2.msra.mxu0 0.0
        %1279 = vmatprep.subr.mxu0 0.0
        %1280 = vmatpush2.msra.mxu0 0.0
        %1281 = vmatprep.subr.mxu0 0.0
        %1282 = vmatpush2.msra.mxu0 0.0
        %1283 = vmatprep.subr.mxu0 0.0
        %1284 = vmatpush2.msra.mxu0 0.0
        %1285 = vmatprep.subr.mxu0 0.0
        %1286 = vmatpush2.msra.mxu0 0.0
        %1287 = vmatprep.subr.mxu0 0.0
        %1288 = vmatpush2.msra.mxu0 0.0
        %1289 = vmatprep.subr.mxu0 0.0
        %1290 = vmatpush2.msra.mxu0 0.0
        %1291 = vmatprep.mubr.f32.mxu0 0.0
        %1292 = vmatmul.mubr.f32.gmra.mxu0 %v1225
        %v1293 = vpop.f32.mrf.mxu0
        %v1294 = vadd.f32 0.0, %v1293
        %v1295 = vpop.f32.mrf.mxu0
        %1296 = vdwg.mxu0
        %v1298 = vsel %vm1074, %v1294, 0
        %1300 = vmatprep.subr.mxu0 0.0
        %1301 = vmatpush1.msra.mxu0 0.0
        %1302 = vmatprep.subr.mxu0 0.0
        %1303 = vmatpush1.msra.mxu0 0.0
        %1304 = vmatprep.subr.mxu0 0.0
        %1305 = vmatpush1.msra.mxu0 0.0
        %1306 = vmatprep.subr.mxu0 0.0
        %1307 = vmatpush1.msra.mxu0 0.0
        %1308 = vmatprep.subr.mxu0 0.0
        %1309 = vmatpush1.msra.mxu0 0.0
        %1310 = vmatprep.subr.mxu0 0.0
        %1311 = vmatpush1.msra.mxu0 0.0
        %1312 = vmatprep.subr.mxu0 0.0
        %1313 = vmatpush1.msra.mxu0 0.0
        %1314 = vmatprep.subr.mxu0 0.0
        %1315 = vmatpush1.msra.mxu0 0.0
        %1316 = vmatprep.subr.mxu0 0.0
        %1317 = vmatpush1.msra.mxu0 0.0
        %1318 = vmatprep.subr.mxu0 0.0
        %1319 = vmatpush1.msra.mxu0 0.0
        %1320 = vmatprep.subr.mxu0 0.0
        %1321 = vmatpush1.msra.mxu0 0.0
        %1322 = vmatprep.subr.mxu0 0.0
        %1323 = vmatpush1.msra.mxu0 0.0
        %1324 = vmatprep.subr.mxu0 0.0
        %1325 = vmatpush1.msra.mxu0 %v1224
        %1326 = vmatprep.subr.mxu0 0.0
        %1327 = vmatpush1.msra.mxu0 %v1223
        %1328 = vmatprep.subr.mxu0 0.0
        %1329 = vmatpush1.msra.mxu0 %v1222
        %1330 = vmatprep.subr.mxu0 0.0
        %1331 = vmatpush1.msra.mxu0 %v1221
        %1332 = vmatprep.subr.mxu0 0.0
        %1333 = vmatpush2.msra.mxu0 0.0
        %1334 = vmatprep.subr.mxu0 0.0
        %1335 = vmatpush2.msra.mxu0 0.0
        %1336 = vmatprep.subr.mxu0 0.0
        %1337 = vmatpush2.msra.mxu0 0.0
        %1338 = vmatprep.subr.mxu0 0.0
        %1339 = vmatpush2.msra.mxu0 0.0
        %1340 = vmatprep.subr.mxu0 0.0
        %1341 = vmatpush2.msra.mxu0 0.0
        %1342 = vmatprep.subr.mxu0 0.0
        %1343 = vmatpush2.msra.mxu0 0.0
        %1344 = vmatprep.subr.mxu0 0.0
        %1345 = vmatpush2.msra.mxu0 0.0
        %1346 = vmatprep.subr.mxu0 0.0
        %1347 = vmatpush2.msra.mxu0 0.0
        %1348 = vmatprep.subr.mxu0 0.0
        %1349 = vmatpush2.msra.mxu0 0.0
        %1350 = vmatprep.subr.mxu0 0.0
        %1351 = vmatpush2.msra.mxu0 0.0
        %1352 = vmatprep.subr.mxu0 0.0
        %1353 = vmatpush2.msra.mxu0 0.0
        %1354 = vmatprep.subr.mxu0 0.0
        %1355 = vmatpush2.msra.mxu0 0.0
        %1356 = vmatprep.subr.mxu0 0.0
        %1357 = vmatpush2.msra.mxu0 0.0
        %1358 = vmatprep.subr.mxu0 0.0
        %1359 = vmatpush2.msra.mxu0 0.0
        %1360 = vmatprep.subr.mxu0 0.0
        %1361 = vmatpush2.msra.mxu0 0.0
        %1362 = vmatprep.subr.mxu0 0.0
        %1363 = vmatpush2.msra.mxu0 0.0
        %1364 = vmatprep.mubr.f32.mxu0 0.0
        %1365 = vmatmul.mubr.f32.gmra.mxu0 %v1298
        %v1366 = vpop.f32.mrf.mxu0
        %v1367 = vadd.f32 0.0, %v1366
        %v1368 = vpop.f32.mrf.mxu0
        %1369 = vdwg.mxu0
        %v1370 = vadd.f32 %v1218, %v1367
        %v1371 = vld [vmem:[%s4 + $0x60] sm:$0xff]
        %v1372 = vld [vmem:[%s4 + $0x68] sm:$0xff]
        %v1373 = vld [vmem:[%s4 + $0x70] sm:$0xff]
        %v1374 = vld [vmem:[%s4 + $0x78] sm:$0xff]
        %v1375 = vsel %vm925, %v830, 0
        %1377 = vmatprep.subr.mxu0 0.0
        %1378 = vmatpush1.msra.mxu0 0.0
        %1379 = vmatprep.subr.mxu0 0.0
        %1380 = vmatpush1.msra.mxu0 0.0
        %1381 = vmatprep.subr.mxu0 0.0
        %1382 = vmatpush1.msra.mxu0 0.0
        %1383 = vmatprep.subr.mxu0 0.0
        %1384 = vmatpush1.msra.mxu0 0.0
        %1385 = vmatprep.subr.mxu0 0.0
        %1386 = vmatpush1.msra.mxu0 0.0
        %1387 = vmatprep.subr.mxu0 0.0
        %1388 = vmatpush1.msra.mxu0 0.0
        %1389 = vmatprep.subr.mxu0 0.0
        %1390 = vmatpush1.msra.mxu0 0.0
        %1391 = vmatprep.subr.mxu0 0.0
        %1392 = vmatpush1.msra.mxu0 0.0
        %1393 = vmatprep.subr.mxu0 0.0
        %1394 = vmatpush1.msra.mxu0 0.0
        %1395 = vmatprep.subr.mxu0 0.0
        %1396 = vmatpush1.msra.mxu0 0.0
        %1397 = vmatprep.subr.mxu0 0.0
        %1398 = vmatpush1.msra.mxu0 0.0
        %1399 = vmatprep.subr.mxu0 0.0
        %1400 = vmatpush1.msra.mxu0 0.0
        %1401 = vmatprep.subr.mxu0 0.0
        %1402 = vmatpush1.msra.mxu0 0.0
        %1403 = vmatprep.subr.mxu0 0.0
        %1404 = vmatpush1.msra.mxu0 0.0
        %1405 = vmatprep.subr.mxu0 0.0
        %1406 = vmatpush1.msra.mxu0 0.0
        %1407 = vmatprep.subr.mxu0 0.0
        %1408 = vmatpush1.msra.mxu0 %v920
        %1409 = vmatprep.subr.mxu0 0.0
        %1410 = vmatpush2.msra.mxu0 0.0
        %1411 = vmatprep.subr.mxu0 0.0
        %1412 = vmatpush2.msra.mxu0 0.0
        %1413 = vmatprep.subr.mxu0 0.0
        %1414 = vmatpush2.msra.mxu0 0.0
        %1415 = vmatprep.subr.mxu0 0.0
        %1416 = vmatpush2.msra.mxu0 0.0
        %1417 = vmatprep.subr.mxu0 0.0
        %1418 = vmatpush2.msra.mxu0 0.0
        %1419 = vmatprep.subr.mxu0 0.0
        %1420 = vmatpush2.msra.mxu0 0.0
        %1421 = vmatprep.subr.mxu0 0.0
        %1422 = vmatpush2.msra.mxu0 0.0
        %1423 = vmatprep.subr.mxu0 0.0
        %1424 = vmatpush2.msra.mxu0 0.0
        %1425 = vmatprep.subr.mxu0 0.0
        %1426 = vmatpush2.msra.mxu0 0.0
        %1427 = vmatprep.subr.mxu0 0.0
        %1428 = vmatpush2.msra.mxu0 0.0
        %1429 = vmatprep.subr.mxu0 0.0
        %1430 = vmatpush2.msra.mxu0 0.0
        %1431 = vmatprep.subr.mxu0 0.0
        %1432 = vmatpush2.msra.mxu0 0.0
        %1433 = vmatprep.subr.mxu0 0.0
        %1434 = vmatpush2.msra.mxu0 0.0
        %1435 = vmatprep.subr.mxu0 0.0
        %1436 = vmatpush2.msra.mxu0 0.0
        %1437 = vmatprep.subr.mxu0 0.0
        %1438 = vmatpush2.msra.mxu0 0.0
        %1439 = vmatprep.subr.mxu0 0.0
        %1440 = vmatpush2.msra.mxu0 0.0
        %1441 = vmatprep.mubr.f32.mxu0 0.0
        %1442 = vmatmul.mubr.f32.gmra.mxu0 %v1375
        %v1443 = vpop.f32.mrf.mxu0
        %v1444 = vadd.f32 0.0, %v1443
        %v1445 = vpop.f32.mrf.mxu0
        %1446 = vdwg.mxu0
        %v1448 = vsel %vm1074, %v1444, 0
        %1450 = vmatprep.subr.mxu0 0.0
        %1451 = vmatpush1.msra.mxu0 0.0
        %1452 = vmatprep.subr.mxu0 0.0
        %1453 = vmatpush1.msra.mxu0 0.0
        %1454 = vmatprep.subr.mxu0 0.0
        %1455 = vmatpush1.msra.mxu0 0.0
        %1456 = vmatprep.subr.mxu0 0.0
        %1457 = vmatpush1.msra.mxu0 0.0
        %1458 = vmatprep.subr.mxu0 0.0
        %1459 = vmatpush1.msra.mxu0 0.0
        %1460 = vmatprep.subr.mxu0 0.0
        %1461 = vmatpush1.msra.mxu0 0.0
        %1462 = vmatprep.subr.mxu0 0.0
        %1463 = vmatpush1.msra.mxu0 0.0
        %1464 = vmatprep.subr.mxu0 0.0
        %1465 = vmatpush1.msra.mxu0 0.0
        %1466 = vmatprep.subr.mxu0 0.0
        %1467 = vmatpush1.msra.mxu0 0.0
        %1468 = vmatprep.subr.mxu0 0.0
        %1469 = vmatpush1.msra.mxu0 0.0
        %1470 = vmatprep.subr.mxu0 0.0
        %1471 = vmatpush1.msra.mxu0 0.0
        %1472 = vmatprep.subr.mxu0 0.0
        %1473 = vmatpush1.msra.mxu0 0.0
        %1474 = vmatprep.subr.mxu0 0.0
        %1475 = vmatpush1.msra.mxu0 %v1374
        %1476 = vmatprep.subr.mxu0 0.0
        %1477 = vmatpush1.msra.mxu0 %v1373
        %1478 = vmatprep.subr.mxu0 0.0
        %1479 = vmatpush1.msra.mxu0 %v1372
        %1480 = vmatprep.subr.mxu0 0.0
        %1481 = vmatpush1.msra.mxu0 %v1371
        %1482 = vmatprep.subr.mxu0 0.0
        %1483 = vmatpush2.msra.mxu0 0.0
        %1484 = vmatprep.subr.mxu0 0.0
        %1485 = vmatpush2.msra.mxu0 0.0
        %1486 = vmatprep.subr.mxu0 0.0
        %1487 = vmatpush2.msra.mxu0 0.0
        %1488 = vmatprep.subr.mxu0 0.0
        %1489 = vmatpush2.msra.mxu0 0.0
        %1490 = vmatprep.subr.mxu0 0.0
        %1491 = vmatpush2.msra.mxu0 0.0
        %1492 = vmatprep.subr.mxu0 0.0
        %1493 = vmatpush2.msra.mxu0 0.0
        %1494 = vmatprep.subr.mxu0 0.0
        %1495 = vmatpush2.msra.mxu0 0.0
        %1496 = vmatprep.subr.mxu0 0.0
        %1497 = vmatpush2.msra.mxu0 0.0
        %1498 = vmatprep.subr.mxu0 0.0
        %1499 = vmatpush2.msra.mxu0 0.0
        %1500 = vmatprep.subr.mxu0 0.0
        %1501 = vmatpush2.msra.mxu0 0.0
        %1502 = vmatprep.subr.mxu0 0.0
        %1503 = vmatpush2.msra.mxu0 0.0
        %1504 = vmatprep.subr.mxu0 0.0
        %1505 = vmatpush2.msra.mxu0 0.0
        %1506 = vmatprep.subr.mxu0 0.0
        %1507 = vmatpush2.msra.mxu0 0.0
        %1508 = vmatprep.subr.mxu0 0.0
        %1509 = vmatpush2.msra.mxu0 0.0
        %1510 = vmatprep.subr.mxu0 0.0
        %1511 = vmatpush2.msra.mxu0 0.0
        %1512 = vmatprep.subr.mxu0 0.0
        %1513 = vmatpush2.msra.mxu0 0.0
        %1514 = vmatprep.mubr.f32.mxu0 0.0
        %1515 = vmatmul.mubr.f32.gmra.mxu0 %v1448
        %v1516 = vpop.f32.mrf.mxu0
        %v1517 = vadd.f32 0.0, %v1516
        %v1518 = vpop.f32.mrf.mxu0
        %1519 = vdwg.mxu0
        %v1520 = vadd.f32 %v1370, %v1517
        %v1521 = vld [vmem:[%s5] sm:$0x1]
        %v1523 = vlaneseq
        %v1524 = vshrl.u32 %v1523, 7
        %v1525 = vsub.s32 0, %v1524
        %v1526 = vrot.slane %v1521, %v1525
        %v1528 = vadd.f32 %v1520, %v1526
        %v1529 = vmax.f32 %v1528, 0.0
        %v1531 = vrot.slane %v1529, 1
        %1532 = vrot.lane.b32.xlu0 %v1531, 64
        %v1533 = vpop.permute.xlu0 %1532
        %v1535 = vrot.slane %v1529, 2
        %v1537 = vrot.slane %v1529, 3
        %1538 = vrot.lane.b32.xlu0 %v1537, 64
        %v1539 = vpop.permute.xlu0 %1538
        %vm1541 = vcmask 523264
        %v1542 = vsel %vm1541, %v1529, %v1533
        %v1543 = vsel %vm1541, %v1535, %v1539
        %v1544 = vld [vmem:[%s6] sm:$0xff]
        %v1545 = vld [vmem:[%s6 + $0x8] sm:$0xff]
        %v1546 = vld [vmem:[%s6 + $0x10] sm:$0xff]
        %v1547 = vld [vmem:[%s6 + $0x18] sm:$0xff]
        %v1548 = vld [vmem:[%s6 + $0x20] sm:$0xff]
        %v1549 = vld [vmem:[%s6 + $0x28] sm:$0xff]
        %v1550 = vld [vmem:[%s6 + $0x30] sm:$0xff]
        %v1551 = vld [vmem:[%s6 + $0x38] sm:$0xff]
        %v1552 = vld [vmem:[%s6 + $0x40] sm:$0xff]
        %v1553 = vld [vmem:[%s6 + $0x48] sm:$0xff]
        %v1554 = vld [vmem:[%s6 + $0x50] sm:$0xff]
        %v1555 = vld [vmem:[%s6 + $0x58] sm:$0xff]
        %v1556 = vld [vmem:[%s6 + $0x60] sm:$0xff]
        %v1557 = vld [vmem:[%s6 + $0x68] sm:$0xff]
        %v1558 = vld [vmem:[%s6 + $0x70] sm:$0xff]
        %v1559 = vld [vmem:[%s6 + $0x78] sm:$0xff]
        %v1560 = vld [vmem:[%s6 + $0x80] sm:$0xff]
        %v1561 = vld [vmem:[%s6 + $0x88] sm:$0xff]
        %v1562 = vld [vmem:[%s6 + $0x90] sm:$0xff]
        %v1563 = vld [vmem:[%s6 + $0x98] sm:$0xff]
        %v1564 = vld [vmem:[%s6 + $0xa0] sm:$0xff]
        %v1565 = vld [vmem:[%s6 + $0xa8] sm:$0xff]
        %v1566 = vld [vmem:[%s6 + $0xb0] sm:$0xff]
        %v1567 = vld [vmem:[%s6 + $0xb8] sm:$0xff]
        %v1568 = vld [vmem:[%s6 + $0xc0] sm:$0xff]
        %v1569 = vld [vmem:[%s6 + $0xc8] sm:$0xff]
        %v1570 = vld [vmem:[%s6 + $0xd0] sm:$0xff]
        %v1571 = vld [vmem:[%s6 + $0xd8] sm:$0xff]
        %v1572 = vld [vmem:[%s6 + $0xe0] sm:$0xff]
        %v1573 = vld [vmem:[%s6 + $0xe8] sm:$0xff]
        %v1574 = vld [vmem:[%s6 + $0xf0] sm:$0xff]
        %v1575 = vld [vmem:[%s6 + $0xf8] sm:$0xff]
        %v1576 = vld [vmem:[%s7] sm:$0x1]
        %1577 = vmatprep.subr.mxu0 0.0
        %1578 = vmatpush1.msra.mxu0 %v1559
        %1579 = vmatprep.subr.mxu0 0.0
        %1580 = vmatpush1.msra.mxu0 %v1558
        %1581 = vmatprep.subr.mxu0 0.0
        %1582 = vmatpush1.msra.mxu0 %v1557
        %1583 = vmatprep.subr.mxu0 0.0
        %1584 = vmatpush1.msra.mxu0 %v1556
        %1585 = vmatprep.subr.mxu0 0.0
        %1586 = vmatpush1.msra.mxu0 %v1555
        %1587 = vmatprep.subr.mxu0 0.0
        %1588 = vmatpush1.msra.mxu0 %v1554
        %1589 = vmatprep.subr.mxu0 0.0
        %1590 = vmatpush1.msra.mxu0 %v1553
        %1591 = vmatprep.subr.mxu0 0.0
        %1592 = vmatpush1.msra.mxu0 %v1552
        %1593 = vmatprep.subr.mxu0 0.0
        %1594 = vmatpush1.msra.mxu0 %v1551
        %1595 = vmatprep.subr.mxu0 0.0
        %1596 = vmatpush1.msra.mxu0 %v1550
        %1597 = vmatprep.subr.mxu0 0.0
        %1598 = vmatpush1.msra.mxu0 %v1549
        %1599 = vmatprep.subr.mxu0 0.0
        %1600 = vmatpush1.msra.mxu0 %v1548
        %1601 = vmatprep.subr.mxu0 0.0
        %1602 = vmatpush1.msra.mxu0 %v1547
        %1603 = vmatprep.subr.mxu0 0.0
        %1604 = vmatpush1.msra.mxu0 %v1546
        %1605 = vmatprep.subr.mxu0 0.0
        %1606 = vmatpush1.msra.mxu0 %v1545
        %1607 = vmatprep.subr.mxu0 0.0
        %1608 = vmatpush1.msra.mxu0 %v1544
        %1609 = vmatprep.subr.mxu0 0.0
        %1610 = vmatpush2.msra.mxu0 %v1575
        %1611 = vmatprep.subr.mxu0 0.0
        %1612 = vmatpush2.msra.mxu0 %v1574
        %1613 = vmatprep.subr.mxu0 0.0
        %1614 = vmatpush2.msra.mxu0 %v1573
        %1615 = vmatprep.subr.mxu0 0.0
        %1616 = vmatpush2.msra.mxu0 %v1572
        %1617 = vmatprep.subr.mxu0 0.0
        %1618 = vmatpush2.msra.mxu0 %v1571
        %1619 = vmatprep.subr.mxu0 0.0
        %1620 = vmatpush2.msra.mxu0 %v1570
        %1621 = vmatprep.subr.mxu0 0.0
        %1622 = vmatpush2.msra.mxu0 %v1569
        %1623 = vmatprep.subr.mxu0 0.0
        %1624 = vmatpush2.msra.mxu0 %v1568
        %1625 = vmatprep.subr.mxu0 0.0
        %1626 = vmatpush2.msra.mxu0 %v1567
        %1627 = vmatprep.subr.mxu0 0.0
        %1628 = vmatpush2.msra.mxu0 %v1566
        %1629 = vmatprep.subr.mxu0 0.0
        %1630 = vmatpush2.msra.mxu0 %v1565
        %1631 = vmatprep.subr.mxu0 0.0
        %1632 = vmatpush2.msra.mxu0 %v1564
        %1633 = vmatprep.subr.mxu0 0.0
        %1634 = vmatpush2.msra.mxu0 %v1563
        %1635 = vmatprep.subr.mxu0 0.0
        %1636 = vmatpush2.msra.mxu0 %v1562
        %1637 = vmatprep.subr.mxu0 0.0
        %1638 = vmatpush2.msra.mxu0 %v1561
        %1639 = vmatprep.subr.mxu0 0.0
        %1640 = vmatpush2.msra.mxu0 %v1560
        %1641 = vmatprep.mubr.f32.mxu0 %v1543
        %1642 = vmatmul.mubr.f32.gmra.mxu0 %v1542
        %v1643 = vpop.f32.mrf.mxu0
        %v1644 = vadd.f32 %v1576, %v1643
        %v1645 = vpop.f32.mrf.mxu0
        %1646 = vdwg.mxu0
        %v1647 = vld [vmem:[%s551] sm:$0x1]
        %v1648 = vmul.f32 %v1644, 0.5
        %v1649 = vmul.f32 %v1648, 1.442695
        %v1650 = vpow.pop %v1649
        %v1653 = vunpack.c.l.s4 1966171168
        %v1654 = vunpack.c.0.s8 %v1653
        %v1655 = vlaneseq
        %v1656 = vshrl.u32 %v1655, 7
        %v1657 = vsub.s32 %v1654, %v1656
        %v1658 = vrot.slane %v1650, %v1657
        %v1660 = vunpack.c.l.s4 1966171168
        %v1661 = vunpack.c.0.s8 %v1660
        %v1662 = vlaneseq
        %v1663 = vshrl.u32 %v1662, 7
        %v1664 = vsub.s32 %v1661, %v1663
        %v1665 = vrot.slane %v1658, %v1664
        %1666 = vrot.lane.b32.xlu0 %v1665, 112
        %v1667 = vpop.permute.xlu0 %1666
        %v1669 = vmul.f32 %v1647, %v1667
        %v1670 = vadd.f32 %v1644, %v1669
        %v1671 = vld [vmem:[%s8] sm:$0xff]
        %v1672 = vld [vmem:[%s8 + $0x8] sm:$0xff]
        %v1673 = vld [vmem:[%s8 + $0x10] sm:$0xff]
        %v1674 = vld [vmem:[%s8 + $0x18] sm:$0xff]
        %v1675 = vld [vmem:[%s9] sm:$0x3]
        %v1677 = vlaneseq
        %v1678 = vshrl.u32 %v1677, 7
        %v1679 = vsub.s32 0, %v1678
        %v1680 = vrot.slane %v1675, %v1679
        %v1681 = vlaneseq
        %v1682 = vshrl.u32 %v1681, 7
        %v1683 = vsub.s32 1, %v1682
        %v1684 = vrot.slane %v1675, %v1683
        %v1688 = vsel %vm595, %v1670, 0
        %1690 = vmatprep.subr.mxu0 0.0
        %1691 = vmatpush1.msra.mxu0 0.0
        %1692 = vmatprep.subr.mxu0 0.0
        %1693 = vmatpush1.msra.mxu0 0.0
        %1694 = vmatprep.subr.mxu0 0.0
        %1695 = vmatpush1.msra.mxu0 0.0
        %1696 = vmatprep.subr.mxu0 0.0
        %1697 = vmatpush1.msra.mxu0 0.0
        %1698 = vmatprep.subr.mxu0 0.0
        %1699 = vmatpush1.msra.mxu0 0.0
        %1700 = vmatprep.subr.mxu0 0.0
        %1701 = vmatpush1.msra.mxu0 0.0
        %1702 = vmatprep.subr.mxu0 0.0
        %1703 = vmatpush1.msra.mxu0 0.0
        %1704 = vmatprep.subr.mxu0 0.0
        %1705 = vmatpush1.msra.mxu0 0.0
        %1706 = vmatprep.subr.mxu0 0.0
        %1707 = vmatpush1.msra.mxu0 0.0
        %1708 = vmatprep.subr.mxu0 0.0
        %1709 = vmatpush1.msra.mxu0 0.0
        %1710 = vmatprep.subr.mxu0 0.0
        %1711 = vmatpush1.msra.mxu0 0.0
        %1712 = vmatprep.subr.mxu0 0.0
        %1713 = vmatpush1.msra.mxu0 0.0
        %1714 = vmatprep.subr.mxu0 0.0
        %1715 = vmatpush1.msra.mxu0 0.0
        %1716 = vmatprep.subr.mxu0 0.0
        %1717 = vmatpush1.msra.mxu0 0.0
        %1718 = vmatprep.subr.mxu0 %v1674
        %1719 = vmatpush1.msra.mxu0 %v1673
        %1720 = vmatprep.subr.mxu0 %v1672
        %1721 = vmatpush1.msra.mxu0 %v1671
        %1722 = vmatprep.subr.mxu0 0.0
        %1723 = vmatpush2.msra.mxu0 0.0
        %1724 = vmatprep.subr.mxu0 0.0
        %1725 = vmatpush2.msra.mxu0 0.0
        %1726 = vmatprep.subr.mxu0 0.0
        %1727 = vmatpush2.msra.mxu0 0.0
        %1728 = vmatprep.subr.mxu0 0.0
        %1729 = vmatpush2.msra.mxu0 0.0
        %1730 = vmatprep.subr.mxu0 0.0
        %1731 = vmatpush2.msra.mxu0 0.0
        %1732 = vmatprep.subr.mxu0 0.0
        %1733 = vmatpush2.msra.mxu0 0.0
        %1734 = vmatprep.subr.mxu0 0.0
        %1735 = vmatpush2.msra.mxu0 0.0
        %1736 = vmatprep.subr.mxu0 0.0
        %1737 = vmatpush2.msra.mxu0 0.0
        %1738 = vmatprep.subr.mxu0 0.0
        %1739 = vmatpush2.msra.mxu0 0.0
        %1740 = vmatprep.subr.mxu0 0.0
        %1741 = vmatpush2.msra.mxu0 0.0
        %1742 = vmatprep.subr.mxu0 0.0
        %1743 = vmatpush2.msra.mxu0 0.0
        %1744 = vmatprep.subr.mxu0 0.0
        %1745 = vmatpush2.msra.mxu0 0.0
        %1746 = vmatprep.subr.mxu0 0.0
        %1747 = vmatpush2.msra.mxu0 0.0
        %1748 = vmatprep.subr.mxu0 0.0
        %1749 = vmatpush2.msra.mxu0 0.0
        %1750 = vmatprep.subr.mxu0 0.0
        %1751 = vmatpush2.msra.mxu0 0.0
        %1752 = vmatprep.subr.mxu0 0.0
        %1753 = vmatpush2.msra.mxu0 0.0
        %1754 = vmatprep.mubr.f32.mxu0 0.0
        %1755 = vmatmul.mubr.f32.gmra.mxu0 %v1688
        %v1756 = vpop.f32.mrf.mxu0
        %v1757 = vadd.f32 %v1680, %v1756
        %v1758 = vpop.f32.mrf.mxu0
        %v1759 = vadd.f32 %v1684, %v1758
        %1760 = vdwg.mxu0
        %v1762 = vrot.slane %v1757, 7
        %1763 = vrot.lane.b32.xlu0 %v1762, 64
        %v1764 = vpop.permute.xlu0 %1763
        %v1767 = vrot.slane %v1759, 6
        %v1769 = vrot.slane %v1759, 5
        %1770 = vrot.lane.b32.xlu0 %v1769, 64
        %v1771 = vpop.permute.xlu0 %1770
        %vm1773 = vcmask 1040384
        %v1774 = vsel %vm1773, %v1757, %v1764
        %vm1775 = vcmask 1041408
        %v1776 = vsel %vm1775, %v1774, %v1767
        %vm1777 = vcmask 1042432
        %v1778 = vsel %vm1777, %v1776, %v1771
        %v1779 = vmul.u32 %v562, 2
        %v1780 = vadd.s32 %v1779, 4294967295
        %vm1781 = vcmp.eq.s32.totalorder %v560, %v1780
        %v1782 = vsel %vm1781, 1, 0
        %v1783 = vcvt.s32.f32 %v1782
        %v1784 = vld [vmem:[%s10] sm:$0xff]
        %v1785 = vld [vmem:[%s10 + $0x8] sm:$0xff]
        %v1786 = vld [vmem:[%s10 + $0x10] sm:$0xff]
        %v1787 = vld [vmem:[%s10 + $0x18] sm:$0xff]
        %v1788 = vld [vmem:[%s10 + $0x20] sm:$0xff]
        %v1789 = vld [vmem:[%s10 + $0x28] sm:$0xff]
        %v1790 = vld [vmem:[%s10 + $0x30] sm:$0xff]
        %v1791 = vld [vmem:[%s10 + $0x38] sm:$0xff]
        %vm1792 = vcmask 31744
        %v1794 = vsel %vm1792, %v1783, 0
        %vm1796 = vcmask 1043456
        %v1798 = vsel %vm1796, %v1778, 0
        %1800 = vmatprep.subr.mxu0 0.0
        %1801 = vmatpush1.msra.mxu0 0.0
        %1802 = vmatprep.subr.mxu0 0.0
        %1803 = vmatpush1.msra.mxu0 0.0
        %1804 = vmatprep.subr.mxu0 0.0
        %1805 = vmatpush1.msra.mxu0 0.0
        %1806 = vmatprep.subr.mxu0 0.0
        %1807 = vmatpush1.msra.mxu0 0.0
        %1808 = vmatprep.subr.mxu0 0.0
        %1809 = vmatpush1.msra.mxu0 0.0
        %1810 = vmatprep.subr.mxu0 0.0
        %1811 = vmatpush1.msra.mxu0 0.0
        %1812 = vmatprep.subr.mxu0 0.0
        %1813 = vmatpush1.msra.mxu0 0.0
        %1814 = vmatprep.subr.mxu0 0.0
        %1815 = vmatpush1.msra.mxu0 0.0
        %1816 = vmatprep.subr.mxu0 0.0
        %1817 = vmatpush1.msra.mxu0 0.0
        %1818 = vmatprep.subr.mxu0 0.0
        %1819 = vmatpush1.msra.mxu0 0.0
        %1820 = vmatprep.subr.mxu0 0.0
        %1821 = vmatpush1.msra.mxu0 0.0
        %1822 = vmatprep.subr.mxu0 0.0
        %1823 = vmatpush1.msra.mxu0 0.0
        %1824 = vmatprep.subr.mxu0 0.0
        %1825 = vmatpush1.msra.mxu0 0.0
        %1826 = vmatprep.subr.mxu0 0.0
        %1827 = vmatpush1.msra.mxu0 0.0
        %1828 = vmatprep.subr.mxu0 0.0
        %1829 = vmatpush1.msra.mxu0 0.0
        %1830 = vmatprep.subr.mxu0 0.0
        %1831 = vmatpush1.msra.mxu0 %v1798
        %1832 = vmatprep.subr.mxu0 0.0
        %1833 = vmatpush2.msra.mxu0 0.0
        %1834 = vmatprep.subr.mxu0 0.0
        %1835 = vmatpush2.msra.mxu0 0.0
        %1836 = vmatprep.subr.mxu0 0.0
        %1837 = vmatpush2.msra.mxu0 0.0
        %1838 = vmatprep.subr.mxu0 0.0
        %1839 = vmatpush2.msra.mxu0 0.0
        %1840 = vmatprep.subr.mxu0 0.0
        %1841 = vmatpush2.msra.mxu0 0.0
        %1842 = vmatprep.subr.mxu0 0.0
        %1843 = vmatpush2.msra.mxu0 0.0
        %1844 = vmatprep.subr.mxu0 0.0
        %1845 = vmatpush2.msra.mxu0 0.0
        %1846 = vmatprep.subr.mxu0 0.0
        %1847 = vmatpush2.msra.mxu0 0.0
        %1848 = vmatprep.subr.mxu0 0.0
        %1849 = vmatpush2.msra.mxu0 0.0
        %1850 = vmatprep.subr.mxu0 0.0
        %1851 = vmatpush2.msra.mxu0 0.0
        %1852 = vmatprep.subr.mxu0 0.0
        %1853 = vmatpush2.msra.mxu0 0.0
        %1854 = vmatprep.subr.mxu0 0.0
        %1855 = vmatpush2.msra.mxu0 0.0
        %1856 = vmatprep.subr.mxu0 0.0
        %1857 = vmatpush2.msra.mxu0 0.0
        %1858 = vmatprep.subr.mxu0 0.0
        %1859 = vmatpush2.msra.mxu0 0.0
        %1860 = vmatprep.subr.mxu0 0.0
        %1861 = vmatpush2.msra.mxu0 0.0
        %1862 = vmatprep.subr.mxu0 0.0
        %1863 = vmatpush2.msra.mxu0 0.0
        %1864 = vmatprep.mubr.f32.mxu0 0.0
        %1865 = vmatmul.mubr.f32.gmra.mxu0 %v1794
        %v1866 = vpop.f32.mrf.mxu0
        %v1867 = vadd.f32 0.0, %v1866
        %v1868 = vpop.f32.mrf.mxu0
        %1869 = vdwg.mxu0
        %vm1870 = vcmp.eq.s32.totalorder %v560, %v1779
        %v1871 = vsel %vm1870, 1, 0
        %v1872 = vcvt.s32.f32 %v1871
        %v1873 = vld [vmem:[%s10 + $0x40] sm:$0xff]
        %v1874 = vld [vmem:[%s10 + $0x48] sm:$0xff]
        %v1875 = vld [vmem:[%s10 + $0x50] sm:$0xff]
        %v1876 = vld [vmem:[%s10 + $0x58] sm:$0xff]
        %v1877 = vld [vmem:[%s10 + $0x60] sm:$0xff]
        %v1878 = vld [vmem:[%s10 + $0x68] sm:$0xff]
        %v1879 = vld [vmem:[%s10 + $0x70] sm:$0xff]
        %v1880 = vld [vmem:[%s10 + $0x78] sm:$0xff]
        %v1882 = vsel %vm1792, %v1872, 0
        %1884 = vmatprep.subr.mxu0 0.0
        %1885 = vmatpush1.msra.mxu0 0.0
        %1886 = vmatprep.subr.mxu0 0.0
        %1887 = vmatpush1.msra.mxu0 0.0
        %1888 = vmatprep.subr.mxu0 0.0
        %1889 = vmatpush1.msra.mxu0 0.0
        %1890 = vmatprep.subr.mxu0 0.0
        %1891 = vmatpush1.msra.mxu0 0.0
        %1892 = vmatprep.subr.mxu0 0.0
        %1893 = vmatpush1.msra.mxu0 0.0
        %1894 = vmatprep.subr.mxu0 0.0
        %1895 = vmatpush1.msra.mxu0 0.0
        %1896 = vmatprep.subr.mxu0 0.0
        %1897 = vmatpush1.msra.mxu0 0.0
        %1898 = vmatprep.subr.mxu0 0.0
        %1899 = vmatpush1.msra.mxu0 0.0
        %1900 = vmatprep.subr.mxu0 0.0
        %1901 = vmatpush1.msra.mxu0 0.0
        %1902 = vmatprep.subr.mxu0 0.0
        %1903 = vmatpush1.msra.mxu0 0.0
        %1904 = vmatprep.subr.mxu0 0.0
        %1905 = vmatpush1.msra.mxu0 0.0
        %1906 = vmatprep.subr.mxu0 0.0
        %1907 = vmatpush1.msra.mxu0 0.0
        %1908 = vmatprep.subr.mxu0 0.0
        %1909 = vmatpush1.msra.mxu0 0.0
        %1910 = vmatprep.subr.mxu0 0.0
        %1911 = vmatpush1.msra.mxu0 0.0
        %1912 = vmatprep.subr.mxu0 0.0
        %1913 = vmatpush1.msra.mxu0 0.0
        %1914 = vmatprep.subr.mxu0 0.0
        %1915 = vmatpush1.msra.mxu0 %v1798
        %1916 = vmatprep.subr.mxu0 0.0
        %1917 = vmatpush2.msra.mxu0 0.0
        %1918 = vmatprep.subr.mxu0 0.0
        %1919 = vmatpush2.msra.mxu0 0.0
        %1920 = vmatprep.subr.mxu0 0.0
        %1921 = vmatpush2.msra.mxu0 0.0
        %1922 = vmatprep.subr.mxu0 0.0
        %1923 = vmatpush2.msra.mxu0 0.0
        %1924 = vmatprep.subr.mxu0 0.0
        %1925 = vmatpush2.msra.mxu0 0.0
        %1926 = vmatprep.subr.mxu0 0.0
        %1927 = vmatpush2.msra.mxu0 0.0
        %1928 = vmatprep.subr.mxu0 0.0
        %1929 = vmatpush2.msra.mxu0 0.0
        %1930 = vmatprep.subr.mxu0 0.0
        %1931 = vmatpush2.msra.mxu0 0.0
        %1932 = vmatprep.subr.mxu0 0.0
        %1933 = vmatpush2.msra.mxu0 0.0
        %1934 = vmatprep.subr.mxu0 0.0
        %1935 = vmatpush2.msra.mxu0 0.0
        %1936 = vmatprep.subr.mxu0 0.0
        %1937 = vmatpush2.msra.mxu0 0.0
        %1938 = vmatprep.subr.mxu0 0.0
        %1939 = vmatpush2.msra.mxu0 0.0
        %1940 = vmatprep.subr.mxu0 0.0
        %1941 = vmatpush2.msra.mxu0 0.0
        %1942 = vmatprep.subr.mxu0 0.0
        %1943 = vmatpush2.msra.mxu0 0.0
        %1944 = vmatprep.subr.mxu0 0.0
        %1945 = vmatpush2.msra.mxu0 0.0
        %1946 = vmatprep.subr.mxu0 0.0
        %1947 = vmatpush2.msra.mxu0 0.0
        %1948 = vmatprep.mubr.f32.mxu0 0.0
        %1949 = vmatmul.mubr.f32.gmra.mxu0 %v1882
        %v1950 = vpop.f32.mrf.mxu0
        %v1951 = vadd.f32 0.0, %v1950
        %v1952 = vpop.f32.mrf.mxu0
        %1953 = vdwg.mxu0
        %v1955 = vsel %vm1541, %v1951, 0
        %1957 = vmatprep.subr.mxu0 0.0
        %1958 = vmatpush1.msra.mxu0 0.0
        %1959 = vmatprep.subr.mxu0 0.0
        %1960 = vmatpush1.msra.mxu0 0.0
        %1961 = vmatprep.subr.mxu0 0.0
        %1962 = vmatpush1.msra.mxu0 0.0
        %1963 = vmatprep.subr.mxu0 0.0
        %1964 = vmatpush1.msra.mxu0 0.0
        %1965 = vmatprep.subr.mxu0 0.0
        %1966 = vmatpush1.msra.mxu0 0.0
        %1967 = vmatprep.subr.mxu0 0.0
        %1968 = vmatpush1.msra.mxu0 0.0
        %1969 = vmatprep.subr.mxu0 0.0
        %1970 = vmatpush1.msra.mxu0 0.0
        %1971 = vmatprep.subr.mxu0 0.0
        %1972 = vmatpush1.msra.mxu0 0.0
        %1973 = vmatprep.subr.mxu0 0.0
        %1974 = vmatpush1.msra.mxu0 %v1880
        %1975 = vmatprep.subr.mxu0 0.0
        %1976 = vmatpush1.msra.mxu0 %v1879
        %1977 = vmatprep.subr.mxu0 0.0
        %1978 = vmatpush1.msra.mxu0 %v1878
        %1979 = vmatprep.subr.mxu0 0.0
        %1980 = vmatpush1.msra.mxu0 %v1877
        %1981 = vmatprep.subr.mxu0 0.0
        %1982 = vmatpush1.msra.mxu0 %v1876
        %1983 = vmatprep.subr.mxu0 0.0
        %1984 = vmatpush1.msra.mxu0 %v1875
        %1985 = vmatprep.subr.mxu0 0.0
        %1986 = vmatpush1.msra.mxu0 %v1874
        %1987 = vmatprep.subr.mxu0 0.0
        %1988 = vmatpush1.msra.mxu0 %v1873
        %1989 = vmatprep.subr.mxu0 0.0
        %1990 = vmatpush2.msra.mxu0 0.0
        %1991 = vmatprep.subr.mxu0 0.0
        %1992 = vmatpush2.msra.mxu0 0.0
        %1993 = vmatprep.subr.mxu0 0.0
        %1994 = vmatpush2.msra.mxu0 0.0
        %1995 = vmatprep.subr.mxu0 0.0
        %1996 = vmatpush2.msra.mxu0 0.0
        %1997 = vmatprep.subr.mxu0 0.0
        %1998 = vmatpush2.msra.mxu0 0.0
        %1999 = vmatprep.subr.mxu0 0.0
        %2000 = vmatpush2.msra.mxu0 0.0
        %2001 = vmatprep.subr.mxu0 0.0
        %2002 = vmatpush2.msra.mxu0 0.0
        %2003 = vmatprep.subr.mxu0 0.0
        %2004 = vmatpush2.msra.mxu0 0.0
        %2005 = vmatprep.subr.mxu0 0.0
        %2006 = vmatpush2.msra.mxu0 0.0
        %2007 = vmatprep.subr.mxu0 0.0
        %2008 = vmatpush2.msra.mxu0 0.0
        %2009 = vmatprep.subr.mxu0 0.0
        %2010 = vmatpush2.msra.mxu0 0.0
        %2011 = vmatprep.subr.mxu0 0.0
        %2012 = vmatpush2.msra.mxu0 0.0
        %2013 = vmatprep.subr.mxu0 0.0
        %2014 = vmatpush2.msra.mxu0 0.0
        %2015 = vmatprep.subr.mxu0 0.0
        %2016 = vmatpush2.msra.mxu0 0.0
        %2017 = vmatprep.subr.mxu0 0.0
        %2018 = vmatpush2.msra.mxu0 0.0
        %2019 = vmatprep.subr.mxu0 0.0
        %2020 = vmatpush2.msra.mxu0 0.0
        %2021 = vmatprep.mubr.f32.mxu0 0.0
        %2022 = vmatmul.mubr.f32.gmra.mxu0 %v1955
        %v2023 = vpop.f32.mrf.mxu0
        %v2024 = vadd.f32 0.0, %v2023
        %v2025 = vpop.f32.mrf.mxu0
        %2026 = vdwg.mxu0
        %v2028 = vsel %vm1541, %v1867, 0
        %2030 = vmatprep.subr.mxu0 0.0
        %2031 = vmatpush1.msra.mxu0 0.0
        %2032 = vmatprep.subr.mxu0 0.0
        %2033 = vmatpush1.msra.mxu0 0.0
        %2034 = vmatprep.subr.mxu0 0.0
        %2035 = vmatpush1.msra.mxu0 0.0
        %2036 = vmatprep.subr.mxu0 0.0
        %2037 = vmatpush1.msra.mxu0 0.0
        %2038 = vmatprep.subr.mxu0 0.0
        %2039 = vmatpush1.msra.mxu0 0.0
        %2040 = vmatprep.subr.mxu0 0.0
        %2041 = vmatpush1.msra.mxu0 0.0
        %2042 = vmatprep.subr.mxu0 0.0
        %2043 = vmatpush1.msra.mxu0 0.0
        %2044 = vmatprep.subr.mxu0 0.0
        %2045 = vmatpush1.msra.mxu0 0.0
        %2046 = vmatprep.subr.mxu0 0.0
        %2047 = vmatpush1.msra.mxu0 %v1791
        %2048 = vmatprep.subr.mxu0 0.0
        %2049 = vmatpush1.msra.mxu0 %v1790
        %2050 = vmatprep.subr.mxu0 0.0
        %2051 = vmatpush1.msra.mxu0 %v1789
        %2052 = vmatprep.subr.mxu0 0.0
        %2053 = vmatpush1.msra.mxu0 %v1788
        %2054 = vmatprep.subr.mxu0 0.0
        %2055 = vmatpush1.msra.mxu0 %v1787
        %2056 = vmatprep.subr.mxu0 0.0
        %2057 = vmatpush1.msra.mxu0 %v1786
        %2058 = vmatprep.subr.mxu0 0.0
        %2059 = vmatpush1.msra.mxu0 %v1785
        %2060 = vmatprep.subr.mxu0 0.0
        %2061 = vmatpush1.msra.mxu0 %v1784
        %2062 = vmatprep.subr.mxu0 0.0
        %2063 = vmatpush2.msra.mxu0 0.0
        %2064 = vmatprep.subr.mxu0 0.0
        %2065 = vmatpush2.msra.mxu0 0.0
        %2066 = vmatprep.subr.mxu0 0.0
        %2067 = vmatpush2.msra.mxu0 0.0
        %2068 = vmatprep.subr.mxu0 0.0
        %2069 = vmatpush2.msra.mxu0 0.0
        %2070 = vmatprep.subr.mxu0 0.0
        %2071 = vmatpush2.msra.mxu0 0.0
        %2072 = vmatprep.subr.mxu0 0.0
        %2073 = vmatpush2.msra.mxu0 0.0
        %2074 = vmatprep.subr.mxu0 0.0
        %2075 = vmatpush2.msra.mxu0 0.0
        %2076 = vmatprep.subr.mxu0 0.0
        %2077 = vmatpush2.msra.mxu0 0.0
        %2078 = vmatprep.subr.mxu0 0.0
        %2079 = vmatpush2.msra.mxu0 0.0
        %2080 = vmatprep.subr.mxu0 0.0
        %2081 = vmatpush2.msra.mxu0 0.0
        %2082 = vmatprep.subr.mxu0 0.0
        %2083 = vmatpush2.msra.mxu0 0.0
        %2084 = vmatprep.subr.mxu0 0.0
        %2085 = vmatpush2.msra.mxu0 0.0
        %2086 = vmatprep.subr.mxu0 0.0
        %2087 = vmatpush2.msra.mxu0 0.0
        %2088 = vmatprep.subr.mxu0 0.0
        %2089 = vmatpush2.msra.mxu0 0.0
        %2090 = vmatprep.subr.mxu0 0.0
        %2091 = vmatpush2.msra.mxu0 0.0
        %2092 = vmatprep.subr.mxu0 0.0
        %2093 = vmatpush2.msra.mxu0 0.0
        %2094 = vmatprep.mubr.f32.mxu0 0.0
        %2095 = vmatmul.mubr.f32.gmra.mxu0 %v2028
        %v2096 = vpop.f32.mrf.mxu0
        %v2097 = vadd.f32 %v2024, %v2096
        %v2098 = vpop.f32.mrf.mxu0
        %2099 = vdwg.mxu0
        %v2100 = vadd.s32 %v1779, 1
        %vm2101 = vcmp.eq.s32.totalorder %v560, %v2100
        %v2102 = vsel %vm2101, 1, 0
        %v2103 = vcvt.s32.f32 %v2102
        %v2104 = vld [vmem:[%s10 + $0x80] sm:$0xff]
        %v2105 = vld [vmem:[%s10 + $0x88] sm:$0xff]
        %v2106 = vld [vmem:[%s10 + $0x90] sm:$0xff]
        %v2107 = vld [vmem:[%s10 + $0x98] sm:$0xff]
        %v2108 = vld [vmem:[%s10 + $0xa0] sm:$0xff]
        %v2109 = vld [vmem:[%s10 + $0xa8] sm:$0xff]
        %v2110 = vld [vmem:[%s10 + $0xb0] sm:$0xff]
        %v2111 = vld [vmem:[%s10 + $0xb8] sm:$0xff]
        %v2113 = vsel %vm1792, %v2103, 0
        %2115 = vmatprep.subr.mxu0 0.0
        %2116 = vmatpush1.msra.mxu0 0.0
        %2117 = vmatprep.subr.mxu0 0.0
        %2118 = vmatpush1.msra.mxu0 0.0
        %2119 = vmatprep.subr.mxu0 0.0
        %2120 = vmatpush1.msra.mxu0 0.0
        %2121 = vmatprep.subr.mxu0 0.0
        %2122 = vmatpush1.msra.mxu0 0.0
        %2123 = vmatprep.subr.mxu0 0.0
        %2124 = vmatpush1.msra.mxu0 0.0
        %2125 = vmatprep.subr.mxu0 0.0
        %2126 = vmatpush1.msra.mxu0 0.0
        %2127 = vmatprep.subr.mxu0 0.0
        %2128 = vmatpush1.msra.mxu0 0.0
        %2129 = vmatprep.subr.mxu0 0.0
        %2130 = vmatpush1.msra.mxu0 0.0
        %2131 = vmatprep.subr.mxu0 0.0
        %2132 = vmatpush1.msra.mxu0 0.0
        %2133 = vmatprep.subr.mxu0 0.0
        %2134 = vmatpush1.msra.mxu0 0.0
        %2135 = vmatprep.subr.mxu0 0.0
        %2136 = vmatpush1.msra.mxu0 0.0
        %2137 = vmatprep.subr.mxu0 0.0
        %2138 = vmatpush1.msra.mxu0 0.0
        %2139 = vmatprep.subr.mxu0 0.0
        %2140 = vmatpush1.msra.mxu0 0.0
        %2141 = vmatprep.subr.mxu0 0.0
        %2142 = vmatpush1.msra.mxu0 0.0
        %2143 = vmatprep.subr.mxu0 0.0
        %2144 = vmatpush1.msra.mxu0 0.0
        %2145 = vmatprep.subr.mxu0 0.0
        %2146 = vmatpush1.msra.mxu0 %v1798
        %2147 = vmatprep.subr.mxu0 0.0
        %2148 = vmatpush2.msra.mxu0 0.0
        %2149 = vmatprep.subr.mxu0 0.0
        %2150 = vmatpush2.msra.mxu0 0.0
        %2151 = vmatprep.subr.mxu0 0.0
        %2152 = vmatpush2.msra.mxu0 0.0
        %2153 = vmatprep.subr.mxu0 0.0
        %2154 = vmatpush2.msra.mxu0 0.0
        %2155 = vmatprep.subr.mxu0 0.0
        %2156 = vmatpush2.msra.mxu0 0.0
        %2157 = vmatprep.subr.mxu0 0.0
        %2158 = vmatpush2.msra.mxu0 0.0
        %2159 = vmatprep.subr.mxu0 0.0
        %2160 = vmatpush2.msra.mxu0 0.0
        %2161 = vmatprep.subr.mxu0 0.0
        %2162 = vmatpush2.msra.mxu0 0.0
        %2163 = vmatprep.subr.mxu0 0.0
        %2164 = vmatpush2.msra.mxu0 0.0
        %2165 = vmatprep.subr.mxu0 0.0
        %2166 = vmatpush2.msra.mxu0 0.0
        %2167 = vmatprep.subr.mxu0 0.0
        %2168 = vmatpush2.msra.mxu0 0.0
        %2169 = vmatprep.subr.mxu0 0.0
        %2170 = vmatpush2.msra.mxu0 0.0
        %2171 = vmatprep.subr.mxu0 0.0
        %2172 = vmatpush2.msra.mxu0 0.0
        %2173 = vmatprep.subr.mxu0 0.0
        %2174 = vmatpush2.msra.mxu0 0.0
        %2175 = vmatprep.subr.mxu0 0.0
        %2176 = vmatpush2.msra.mxu0 0.0
        %2177 = vmatprep.subr.mxu0 0.0
        %2178 = vmatpush2.msra.mxu0 0.0
        %2179 = vmatprep.mubr.f32.mxu0 0.0
        %2180 = vmatmul.mubr.f32.gmra.mxu0 %v2113
        %v2181 = vpop.f32.mrf.mxu0
        %v2182 = vadd.f32 0.0, %v2181
        %v2183 = vpop.f32.mrf.mxu0
        %2184 = vdwg.mxu0
        %v2186 = vsel %vm1541, %v2182, 0
        %2188 = vmatprep.subr.mxu0 0.0
        %2189 = vmatpush1.msra.mxu0 0.0
        %2190 = vmatprep.subr.mxu0 0.0
        %2191 = vmatpush1.msra.mxu0 0.0
        %2192 = vmatprep.subr.mxu0 0.0
        %2193 = vmatpush1.msra.mxu0 0.0
        %2194 = vmatprep.subr.mxu0 0.0
        %2195 = vmatpush1.msra.mxu0 0.0
        %2196 = vmatprep.subr.mxu0 0.0
        %2197 = vmatpush1.msra.mxu0 0.0
        %2198 = vmatprep.subr.mxu0 0.0
        %2199 = vmatpush1.msra.mxu0 0.0
        %2200 = vmatprep.subr.mxu0 0.0
        %2201 = vmatpush1.msra.mxu0 0.0
        %2202 = vmatprep.subr.mxu0 0.0
        %2203 = vmatpush1.msra.mxu0 0.0
        %2204 = vmatprep.subr.mxu0 0.0
        %2205 = vmatpush1.msra.mxu0 %v2111
        %2206 = vmatprep.subr.mxu0 0.0
        %2207 = vmatpush1.msra.mxu0 %v2110
        %2208 = vmatprep.subr.mxu0 0.0
        %2209 = vmatpush1.msra.mxu0 %v2109
        %2210 = vmatprep.subr.mxu0 0.0
        %2211 = vmatpush1.msra.mxu0 %v2108
        %2212 = vmatprep.subr.mxu0 0.0
        %2213 = vmatpush1.msra.mxu0 %v2107
        %2214 = vmatprep.subr.mxu0 0.0
        %2215 = vmatpush1.msra.mxu0 %v2106
        %2216 = vmatprep.subr.mxu0 0.0
        %2217 = vmatpush1.msra.mxu0 %v2105
        %2218 = vmatprep.subr.mxu0 0.0
        %2219 = vmatpush1.msra.mxu0 %v2104
        %2220 = vmatprep.subr.mxu0 0.0
        %2221 = vmatpush2.msra.mxu0 0.0
        %2222 = vmatprep.subr.mxu0 0.0
        %2223 = vmatpush2.msra.mxu0 0.0
        %2224 = vmatprep.subr.mxu0 0.0
        %2225 = vmatpush2.msra.mxu0 0.0
        %2226 = vmatprep.subr.mxu0 0.0
        %2227 = vmatpush2.msra.mxu0 0.0
        %2228 = vmatprep.subr.mxu0 0.0
        %2229 = vmatpush2.msra.mxu0 0.0
        %2230 = vmatprep.subr.mxu0 0.0
        %2231 = vmatpush2.msra.mxu0 0.0
        %2232 = vmatprep.subr.mxu0 0.0
        %2233 = vmatpush2.msra.mxu0 0.0
        %2234 = vmatprep.subr.mxu0 0.0
        %2235 = vmatpush2.msra.mxu0 0.0
        %2236 = vmatprep.subr.mxu0 0.0
        %2237 = vmatpush2.msra.mxu0 0.0
        %2238 = vmatprep.subr.mxu0 0.0
        %2239 = vmatpush2.msra.mxu0 0.0
        %2240 = vmatprep.subr.mxu0 0.0
        %2241 = vmatpush2.msra.mxu0 0.0
        %2242 = vmatprep.subr.mxu0 0.0
        %2243 = vmatpush2.msra.mxu0 0.0
        %2244 = vmatprep.subr.mxu0 0.0
        %2245 = vmatpush2.msra.mxu0 0.0
        %2246 = vmatprep.subr.mxu0 0.0
        %2247 = vmatpush2.msra.mxu0 0.0
        %2248 = vmatprep.subr.mxu0 0.0
        %2249 = vmatpush2.msra.mxu0 0.0
        %2250 = vmatprep.subr.mxu0 0.0
        %2251 = vmatpush2.msra.mxu0 0.0
        %2252 = vmatprep.mubr.f32.mxu0 0.0
        %2253 = vmatmul.mubr.f32.gmra.mxu0 %v2186
        %v2254 = vpop.f32.mrf.mxu0
        %v2255 = vadd.f32 0.0, %v2254
        %v2256 = vpop.f32.mrf.mxu0
        %2257 = vdwg.mxu0
        %v2258 = vadd.f32 %v2097, %v2255
        %v2259 = vadd.s32 %v1779, 2
        %vm2260 = vcmp.eq.s32.totalorder %v560, %v2259
        %v2261 = vsel %vm2260, 1, 0
        %v2262 = vcvt.s32.f32 %v2261
        %v2263 = vld [vmem:[%s10 + $0xc0] sm:$0xff]
        %v2264 = vld [vmem:[%s10 + $0xc8] sm:$0xff]
        %v2265 = vld [vmem:[%s10 + $0xd0] sm:$0xff]
        %v2266 = vld [vmem:[%s10 + $0xd8] sm:$0xff]
        %v2267 = vld [vmem:[%s10 + $0xe0] sm:$0xff]
        %v2268 = vld [vmem:[%s10 + $0xe8] sm:$0xff]
        %v2269 = vld [vmem:[%s10 + $0xf0] sm:$0xff]
        %v2270 = vld [vmem:[%s10 + $0xf8] sm:$0xff]
        %v2272 = vsel %vm1792, %v2262, 0
        %2274 = vmatprep.subr.mxu0 0.0
        %2275 = vmatpush1.msra.mxu0 0.0
        %2276 = vmatprep.subr.mxu0 0.0
        %2277 = vmatpush1.msra.mxu0 0.0
        %2278 = vmatprep.subr.mxu0 0.0
        %2279 = vmatpush1.msra.mxu0 0.0
        %2280 = vmatprep.subr.mxu0 0.0
        %2281 = vmatpush1.msra.mxu0 0.0
        %2282 = vmatprep.subr.mxu0 0.0
        %2283 = vmatpush1.msra.mxu0 0.0
        %2284 = vmatprep.subr.mxu0 0.0
        %2285 = vmatpush1.msra.mxu0 0.0
        %2286 = vmatprep.subr.mxu0 0.0
        %2287 = vmatpush1.msra.mxu0 0.0
        %2288 = vmatprep.subr.mxu0 0.0
        %2289 = vmatpush1.msra.mxu0 0.0
        %2290 = vmatprep.subr.mxu0 0.0
        %2291 = vmatpush1.msra.mxu0 0.0
        %2292 = vmatprep.subr.mxu0 0.0
        %2293 = vmatpush1.msra.mxu0 0.0
        %2294 = vmatprep.subr.mxu0 0.0
        %2295 = vmatpush1.msra.mxu0 0.0
        %2296 = vmatprep.subr.mxu0 0.0
        %2297 = vmatpush1.msra.mxu0 0.0
        %2298 = vmatprep.subr.mxu0 0.0
        %2299 = vmatpush1.msra.mxu0 0.0
        %2300 = vmatprep.subr.mxu0 0.0
        %2301 = vmatpush1.msra.mxu0 0.0
        %2302 = vmatprep.subr.mxu0 0.0
        %2303 = vmatpush1.msra.mxu0 0.0
        %2304 = vmatprep.subr.mxu0 0.0
        %2305 = vmatpush1.msra.mxu0 %v1798
        %2306 = vmatprep.subr.mxu0 0.0
        %2307 = vmatpush2.msra.mxu0 0.0
        %2308 = vmatprep.subr.mxu0 0.0
        %2309 = vmatpush2.msra.mxu0 0.0
        %2310 = vmatprep.subr.mxu0 0.0
        %2311 = vmatpush2.msra.mxu0 0.0
        %2312 = vmatprep.subr.mxu0 0.0
        %2313 = vmatpush2.msra.mxu0 0.0
        %2314 = vmatprep.subr.mxu0 0.0
        %2315 = vmatpush2.msra.mxu0 0.0
        %2316 = vmatprep.subr.mxu0 0.0
        %2317 = vmatpush2.msra.mxu0 0.0
        %2318 = vmatprep.subr.mxu0 0.0
        %2319 = vmatpush2.msra.mxu0 0.0
        %2320 = vmatprep.subr.mxu0 0.0
        %2321 = vmatpush2.msra.mxu0 0.0
        %2322 = vmatprep.subr.mxu0 0.0
        %2323 = vmatpush2.msra.mxu0 0.0
        %2324 = vmatprep.subr.mxu0 0.0
        %2325 = vmatpush2.msra.mxu0 0.0
        %2326 = vmatprep.subr.mxu0 0.0
        %2327 = vmatpush2.msra.mxu0 0.0
        %2328 = vmatprep.subr.mxu0 0.0
        %2329 = vmatpush2.msra.mxu0 0.0
        %2330 = vmatprep.subr.mxu0 0.0
        %2331 = vmatpush2.msra.mxu0 0.0
        %2332 = vmatprep.subr.mxu0 0.0
        %2333 = vmatpush2.msra.mxu0 0.0
        %2334 = vmatprep.subr.mxu0 0.0
        %2335 = vmatpush2.msra.mxu0 0.0
        %2336 = vmatprep.subr.mxu0 0.0
        %2337 = vmatpush2.msra.mxu0 0.0
        %2338 = vmatprep.mubr.f32.mxu0 0.0
        %2339 = vmatmul.mubr.f32.gmra.mxu0 %v2272
        %v2340 = vpop.f32.mrf.mxu0
        %v2341 = vadd.f32 0.0, %v2340
        %v2342 = vpop.f32.mrf.mxu0
        %2343 = vdwg.mxu0
        %v2345 = vsel %vm1541, %v2341, 0
        %2347 = vmatprep.subr.mxu0 0.0
        %2348 = vmatpush1.msra.mxu0 0.0
        %2349 = vmatprep.subr.mxu0 0.0
        %2350 = vmatpush1.msra.mxu0 0.0
        %2351 = vmatprep.subr.mxu0 0.0
        %2352 = vmatpush1.msra.mxu0 0.0
        %2353 = vmatprep.subr.mxu0 0.0
        %2354 = vmatpush1.msra.mxu0 0.0
        %2355 = vmatprep.subr.mxu0 0.0
        %2356 = vmatpush1.msra.mxu0 0.0
        %2357 = vmatprep.subr.mxu0 0.0
        %2358 = vmatpush1.msra.mxu0 0.0
        %2359 = vmatprep.subr.mxu0 0.0
        %2360 = vmatpush1.msra.mxu0 0.0
        %2361 = vmatprep.subr.mxu0 0.0
        %2362 = vmatpush1.msra.mxu0 0.0
        %2363 = vmatprep.subr.mxu0 0.0
        %2364 = vmatpush1.msra.mxu0 %v2270
        %2365 = vmatprep.subr.mxu0 0.0
        %2366 = vmatpush1.msra.mxu0 %v2269
        %2367 = vmatprep.subr.mxu0 0.0
        %2368 = vmatpush1.msra.mxu0 %v2268
        %2369 = vmatprep.subr.mxu0 0.0
        %2370 = vmatpush1.msra.mxu0 %v2267
        %2371 = vmatprep.subr.mxu0 0.0
        %2372 = vmatpush1.msra.mxu0 %v2266
        %2373 = vmatprep.subr.mxu0 0.0
        %2374 = vmatpush1.msra.mxu0 %v2265
        %2375 = vmatprep.subr.mxu0 0.0
        %2376 = vmatpush1.msra.mxu0 %v2264
        %2377 = vmatprep.subr.mxu0 0.0
        %2378 = vmatpush1.msra.mxu0 %v2263
        %2379 = vmatprep.subr.mxu0 0.0
        %2380 = vmatpush2.msra.mxu0 0.0
        %2381 = vmatprep.subr.mxu0 0.0
        %2382 = vmatpush2.msra.mxu0 0.0
        %2383 = vmatprep.subr.mxu0 0.0
        %2384 = vmatpush2.msra.mxu0 0.0
        %2385 = vmatprep.subr.mxu0 0.0
        %2386 = vmatpush2.msra.mxu0 0.0
        %2387 = vmatprep.subr.mxu0 0.0
        %2388 = vmatpush2.msra.mxu0 0.0
        %2389 = vmatprep.subr.mxu0 0.0
        %2390 = vmatpush2.msra.mxu0 0.0
        %2391 = vmatprep.subr.mxu0 0.0
        %2392 = vmatpush2.msra.mxu0 0.0
        %2393 = vmatprep.subr.mxu0 0.0
        %2394 = vmatpush2.msra.mxu0 0.0
        %2395 = vmatprep.subr.mxu0 0.0
        %2396 = vmatpush2.msra.mxu0 0.0
        %2397 = vmatprep.subr.mxu0 0.0
        %2398 = vmatpush2.msra.mxu0 0.0
        %2399 = vmatprep.subr.mxu0 0.0
        %2400 = vmatpush2.msra.mxu0 0.0
        %2401 = vmatprep.subr.mxu0 0.0
        %2402 = vmatpush2.msra.mxu0 0.0
        %2403 = vmatprep.subr.mxu0 0.0
        %2404 = vmatpush2.msra.mxu0 0.0
        %2405 = vmatprep.subr.mxu0 0.0
        %2406 = vmatpush2.msra.mxu0 0.0
        %2407 = vmatprep.subr.mxu0 0.0
        %2408 = vmatpush2.msra.mxu0 0.0
        %2409 = vmatprep.subr.mxu0 0.0
        %2410 = vmatpush2.msra.mxu0 0.0
        %2411 = vmatprep.mubr.f32.mxu0 0.0
        %2412 = vmatmul.mubr.f32.gmra.mxu0 %v2345
        %v2413 = vpop.f32.mrf.mxu0
        %v2414 = vadd.f32 0.0, %v2413
        %v2415 = vpop.f32.mrf.mxu0
        %2416 = vdwg.mxu0
        %v2417 = vadd.f32 %v2258, %v2414
        %v2418 = vld [vmem:[%s11] sm:$0x1]
        %v2420 = vlaneseq
        %v2421 = vshrl.u32 %v2420, 7
        %v2422 = vsub.s32 0, %v2421
        %v2423 = vrot.slane %v2418, %v2422
        %v2425 = vadd.f32 %v2417, %v2423
        %v2426 = vmax.f32 %v2425, 0.0
        %v2427 = vadd.s32 %v560, 8
        %vm2428 = vcmp.eq.s32.totalorder %v2427, %v1780
        %v2429 = vsel %vm2428, 1, 0
        %v2430 = vcvt.s32.f32 %v2429
        %v2431 = vld [vmem:[%s12] sm:$0xff]
        %v2432 = vld [vmem:[%s12 + $0x8] sm:$0xff]
        %v2433 = vld [vmem:[%s12 + $0x10] sm:$0xff]
        %v2434 = vld [vmem:[%s12 + $0x18] sm:$0xff]
        %v2435 = vsel %vm925, %v1783, 0
        %v2438 = vsel %vm925, %v2430, 0
        %2440 = vmatprep.subr.mxu0 0.0
        %2441 = vmatpush1.msra.mxu0 0.0
        %2442 = vmatprep.subr.mxu0 0.0
        %2443 = vmatpush1.msra.mxu0 0.0
        %2444 = vmatprep.subr.mxu0 0.0
        %2445 = vmatpush1.msra.mxu0 0.0
        %2446 = vmatprep.subr.mxu0 0.0
        %2447 = vmatpush1.msra.mxu0 0.0
        %2448 = vmatprep.subr.mxu0 0.0
        %2449 = vmatpush1.msra.mxu0 0.0
        %2450 = vmatprep.subr.mxu0 0.0
        %2451 = vmatpush1.msra.mxu0 0.0
        %2452 = vmatprep.subr.mxu0 0.0
        %2453 = vmatpush1.msra.mxu0 0.0
        %2454 = vmatprep.subr.mxu0 0.0
        %2455 = vmatpush1.msra.mxu0 0.0
        %2456 = vmatprep.subr.mxu0 0.0
        %2457 = vmatpush1.msra.mxu0 0.0
        %2458 = vmatprep.subr.mxu0 0.0
        %2459 = vmatpush1.msra.mxu0 0.0
        %2460 = vmatprep.subr.mxu0 0.0
        %2461 = vmatpush1.msra.mxu0 0.0
        %2462 = vmatprep.subr.mxu0 0.0
        %2463 = vmatpush1.msra.mxu0 0.0
        %2464 = vmatprep.subr.mxu0 0.0
        %2465 = vmatpush1.msra.mxu0 0.0
        %2466 = vmatprep.subr.mxu0 0.0
        %2467 = vmatpush1.msra.mxu0 0.0
        %2468 = vmatprep.subr.mxu0 0.0
        %2469 = vmatpush1.msra.mxu0 0.0
        %2470 = vmatprep.subr.mxu0 0.0
        %2471 = vmatpush1.msra.mxu0 %v2426
        %2472 = vmatprep.subr.mxu0 0.0
        %2473 = vmatpush2.msra.mxu0 0.0
        %2474 = vmatprep.subr.mxu0 0.0
        %2475 = vmatpush2.msra.mxu0 0.0
        %2476 = vmatprep.subr.mxu0 0.0
        %2477 = vmatpush2.msra.mxu0 0.0
        %2478 = vmatprep.subr.mxu0 0.0
        %2479 = vmatpush2.msra.mxu0 0.0
        %2480 = vmatprep.subr.mxu0 0.0
        %2481 = vmatpush2.msra.mxu0 0.0
        %2482 = vmatprep.subr.mxu0 0.0
        %2483 = vmatpush2.msra.mxu0 0.0
        %2484 = vmatprep.subr.mxu0 0.0
        %2485 = vmatpush2.msra.mxu0 0.0
        %2486 = vmatprep.subr.mxu0 0.0
        %2487 = vmatpush2.msra.mxu0 0.0
        %2488 = vmatprep.subr.mxu0 0.0
        %2489 = vmatpush2.msra.mxu0 0.0
        %2490 = vmatprep.subr.mxu0 0.0
        %2491 = vmatpush2.msra.mxu0 0.0
        %2492 = vmatprep.subr.mxu0 0.0
        %2493 = vmatpush2.msra.mxu0 0.0
        %2494 = vmatprep.subr.mxu0 0.0
        %2495 = vmatpush2.msra.mxu0 0.0
        %2496 = vmatprep.subr.mxu0 0.0
        %2497 = vmatpush2.msra.mxu0 0.0
        %2498 = vmatprep.subr.mxu0 0.0
        %2499 = vmatpush2.msra.mxu0 0.0
        %2500 = vmatprep.subr.mxu0 0.0
        %2501 = vmatpush2.msra.mxu0 0.0
        %2502 = vmatprep.subr.mxu0 0.0
        %2503 = vmatpush2.msra.mxu0 0.0
        %2504 = vmatprep.mubr.f32.mxu0 0.0
        %2505 = vmatmul.mubr.f32.gmra.mxu0 %v2435
        %v2506 = vpop.f32.mrf.mxu0
        %v2507 = vadd.f32 0.0, %v2506
        %v2508 = vpop.f32.mrf.mxu0
        %2509 = vmatprep.mubr.f32.mxu0 0.0
        %2510 = vmatmul.mubr.f32.gmra.mxu0 %v2438
        %v2511 = vpop.f32.mrf.mxu0
        %v2512 = vadd.f32 0.0, %v2511
        %v2513 = vpop.f32.mrf.mxu0
        %2514 = vdwg.mxu0
        %vm2515 = vcmp.eq.s32.totalorder %v2427, %v1779
        %v2516 = vsel %vm2515, 1, 0
        %v2517 = vcvt.s32.f32 %v2516
        %v2518 = vld [vmem:[%s12 + $0x20] sm:$0xff]
        %v2519 = vld [vmem:[%s12 + $0x28] sm:$0xff]
        %v2520 = vld [vmem:[%s12 + $0x30] sm:$0xff]
        %v2521 = vld [vmem:[%s12 + $0x38] sm:$0xff]
        %v2522 = vsel %vm925, %v1872, 0
        %v2525 = vsel %vm925, %v2517, 0
        %2527 = vmatprep.subr.mxu0 0.0
        %2528 = vmatpush1.msra.mxu0 0.0
        %2529 = vmatprep.subr.mxu0 0.0
        %2530 = vmatpush1.msra.mxu0 0.0
        %2531 = vmatprep.subr.mxu0 0.0
        %2532 = vmatpush1.msra.mxu0 0.0
        %2533 = vmatprep.subr.mxu0 0.0
        %2534 = vmatpush1.msra.mxu0 0.0
        %2535 = vmatprep.subr.mxu0 0.0
        %2536 = vmatpush1.msra.mxu0 0.0
        %2537 = vmatprep.subr.mxu0 0.0
        %2538 = vmatpush1.msra.mxu0 0.0
        %2539 = vmatprep.subr.mxu0 0.0
        %2540 = vmatpush1.msra.mxu0 0.0
        %2541 = vmatprep.subr.mxu0 0.0
        %2542 = vmatpush1.msra.mxu0 0.0
        %2543 = vmatprep.subr.mxu0 0.0
        %2544 = vmatpush1.msra.mxu0 0.0
        %2545 = vmatprep.subr.mxu0 0.0
        %2546 = vmatpush1.msra.mxu0 0.0
        %2547 = vmatprep.subr.mxu0 0.0
        %2548 = vmatpush1.msra.mxu0 0.0
        %2549 = vmatprep.subr.mxu0 0.0
        %2550 = vmatpush1.msra.mxu0 0.0
        %2551 = vmatprep.subr.mxu0 0.0
        %2552 = vmatpush1.msra.mxu0 0.0
        %2553 = vmatprep.subr.mxu0 0.0
        %2554 = vmatpush1.msra.mxu0 0.0
        %2555 = vmatprep.subr.mxu0 0.0
        %2556 = vmatpush1.msra.mxu0 0.0
        %2557 = vmatprep.subr.mxu0 0.0
        %2558 = vmatpush1.msra.mxu0 %v2426
        %2559 = vmatprep.subr.mxu0 0.0
        %2560 = vmatpush2.msra.mxu0 0.0
        %2561 = vmatprep.subr.mxu0 0.0
        %2562 = vmatpush2.msra.mxu0 0.0
        %2563 = vmatprep.subr.mxu0 0.0
        %2564 = vmatpush2.msra.mxu0 0.0
        %2565 = vmatprep.subr.mxu0 0.0
        %2566 = vmatpush2.msra.mxu0 0.0
        %2567 = vmatprep.subr.mxu0 0.0
        %2568 = vmatpush2.msra.mxu0 0.0
        %2569 = vmatprep.subr.mxu0 0.0
        %2570 = vmatpush2.msra.mxu0 0.0
        %2571 = vmatprep.subr.mxu0 0.0
        %2572 = vmatpush2.msra.mxu0 0.0
        %2573 = vmatprep.subr.mxu0 0.0
        %2574 = vmatpush2.msra.mxu0 0.0
        %2575 = vmatprep.subr.mxu0 0.0
        %2576 = vmatpush2.msra.mxu0 0.0
        %2577 = vmatprep.subr.mxu0 0.0
        %2578 = vmatpush2.msra.mxu0 0.0
        %2579 = vmatprep.subr.mxu0 0.0
        %2580 = vmatpush2.msra.mxu0 0.0
        %2581 = vmatprep.subr.mxu0 0.0
        %2582 = vmatpush2.msra.mxu0 0.0
        %2583 = vmatprep.subr.mxu0 0.0
        %2584 = vmatpush2.msra.mxu0 0.0
        %2585 = vmatprep.subr.mxu0 0.0
        %2586 = vmatpush2.msra.mxu0 0.0
        %2587 = vmatprep.subr.mxu0 0.0
        %2588 = vmatpush2.msra.mxu0 0.0
        %2589 = vmatprep.subr.mxu0 0.0
        %2590 = vmatpush2.msra.mxu0 0.0
        %2591 = vmatprep.mubr.f32.mxu0 0.0
        %2592 = vmatmul.mubr.f32.gmra.mxu0 %v2522
        %v2593 = vpop.f32.mrf.mxu0
        %v2594 = vadd.f32 0.0, %v2593
        %v2595 = vpop.f32.mrf.mxu0
        %2596 = vmatprep.mubr.f32.mxu0 0.0
        %2597 = vmatmul.mubr.f32.gmra.mxu0 %v2525
        %v2598 = vpop.f32.mrf.mxu0
        %v2599 = vadd.f32 0.0, %v2598
        %v2600 = vpop.f32.mrf.mxu0
        %2601 = vdwg.mxu0
        %v2603 = vsel %vm1074, %v2594, 0
        %v2606 = vsel %vm1074, %v2599, 0
        %2608 = vmatprep.subr.mxu0 0.0
        %2609 = vmatpush1.msra.mxu0 0.0
        %2610 = vmatprep.subr.mxu0 0.0
        %2611 = vmatpush1.msra.mxu0 0.0
        %2612 = vmatprep.subr.mxu0 0.0
        %2613 = vmatpush1.msra.mxu0 0.0
        %2614 = vmatprep.subr.mxu0 0.0
        %2615 = vmatpush1.msra.mxu0 0.0
        %2616 = vmatprep.subr.mxu0 0.0
        %2617 = vmatpush1.msra.mxu0 0.0
        %2618 = vmatprep.subr.mxu0 0.0
        %2619 = vmatpush1.msra.mxu0 0.0
        %2620 = vmatprep.subr.mxu0 0.0
        %2621 = vmatpush1.msra.mxu0 0.0
        %2622 = vmatprep.subr.mxu0 0.0
        %2623 = vmatpush1.msra.mxu0 0.0
        %2624 = vmatprep.subr.mxu0 0.0
        %2625 = vmatpush1.msra.mxu0 0.0
        %2626 = vmatprep.subr.mxu0 0.0
        %2627 = vmatpush1.msra.mxu0 0.0
        %2628 = vmatprep.subr.mxu0 0.0
        %2629 = vmatpush1.msra.mxu0 0.0
        %2630 = vmatprep.subr.mxu0 0.0
        %2631 = vmatpush1.msra.mxu0 0.0
        %2632 = vmatprep.subr.mxu0 0.0
        %2633 = vmatpush1.msra.mxu0 %v2521
        %2634 = vmatprep.subr.mxu0 0.0
        %2635 = vmatpush1.msra.mxu0 %v2520
        %2636 = vmatprep.subr.mxu0 0.0
        %2637 = vmatpush1.msra.mxu0 %v2519
        %2638 = vmatprep.subr.mxu0 0.0
        %2639 = vmatpush1.msra.mxu0 %v2518
        %2640 = vmatprep.subr.mxu0 0.0
        %2641 = vmatpush2.msra.mxu0 0.0
        %2642 = vmatprep.subr.mxu0 0.0
        %2643 = vmatpush2.msra.mxu0 0.0
        %2644 = vmatprep.subr.mxu0 0.0
        %2645 = vmatpush2.msra.mxu0 0.0
        %2646 = vmatprep.subr.mxu0 0.0
        %2647 = vmatpush2.msra.mxu0 0.0
        %2648 = vmatprep.subr.mxu0 0.0
        %2649 = vmatpush2.msra.mxu0 0.0
        %2650 = vmatprep.subr.mxu0 0.0
        %2651 = vmatpush2.msra.mxu0 0.0
        %2652 = vmatprep.subr.mxu0 0.0
        %2653 = vmatpush2.msra.mxu0 0.0
        %2654 = vmatprep.subr.mxu0 0.0
        %2655 = vmatpush2.msra.mxu0 0.0
        %2656 = vmatprep.subr.mxu0 0.0
        %2657 = vmatpush2.msra.mxu0 0.0
        %2658 = vmatprep.subr.mxu0 0.0
        %2659 = vmatpush2.msra.mxu0 0.0
        %2660 = vmatprep.subr.mxu0 0.0
        %2661 = vmatpush2.msra.mxu0 0.0
        %2662 = vmatprep.subr.mxu0 0.0
        %2663 = vmatpush2.msra.mxu0 0.0
        %2664 = vmatprep.subr.mxu0 0.0
        %2665 = vmatpush2.msra.mxu0 0.0
        %2666 = vmatprep.subr.mxu0 0.0
        %2667 = vmatpush2.msra.mxu0 0.0
        %2668 = vmatprep.subr.mxu0 0.0
        %2669 = vmatpush2.msra.mxu0 0.0
        %2670 = vmatprep.subr.mxu0 0.0
        %2671 = vmatpush2.msra.mxu0 0.0
        %2672 = vmatprep.mubr.f32.mxu0 0.0
        %2673 = vmatmul.mubr.f32.gmra.mxu0 %v2603
        %v2674 = vpop.f32.mrf.mxu0
        %v2675 = vadd.f32 0.0, %v2674
        %v2676 = vpop.f32.mrf.mxu0
        %2677 = vmatprep.mubr.f32.mxu0 0.0
        %2678 = vmatmul.mubr.f32.gmra.mxu0 %v2606
        %v2679 = vpop.f32.mrf.mxu0
        %v2680 = vadd.f32 0.0, %v2679
        %v2681 = vpop.f32.mrf.mxu0
        %2682 = vdwg.mxu0
        %v2684 = vsel %vm1074, %v2507, 0
        %v2687 = vsel %vm1074, %v2512, 0
        %2689 = vmatprep.subr.mxu0 0.0
        %2690 = vmatpush1.msra.mxu0 0.0
        %2691 = vmatprep.subr.mxu0 0.0
        %2692 = vmatpush1.msra.mxu0 0.0
        %2693 = vmatprep.subr.mxu0 0.0
        %2694 = vmatpush1.msra.mxu0 0.0
        %2695 = vmatprep.subr.mxu0 0.0
        %2696 = vmatpush1.msra.mxu0 0.0
        %2697 = vmatprep.subr.mxu0 0.0
        %2698 = vmatpush1.msra.mxu0 0.0
        %2699 = vmatprep.subr.mxu0 0.0
        %2700 = vmatpush1.msra.mxu0 0.0
        %2701 = vmatprep.subr.mxu0 0.0
        %2702 = vmatpush1.msra.mxu0 0.0
        %2703 = vmatprep.subr.mxu0 0.0
        %2704 = vmatpush1.msra.mxu0 0.0
        %2705 = vmatprep.subr.mxu0 0.0
        %2706 = vmatpush1.msra.mxu0 0.0
        %2707 = vmatprep.subr.mxu0 0.0
        %2708 = vmatpush1.msra.mxu0 0.0
        %2709 = vmatprep.subr.mxu0 0.0
        %2710 = vmatpush1.msra.mxu0 0.0
        %2711 = vmatprep.subr.mxu0 0.0
        %2712 = vmatpush1.msra.mxu0 0.0
        %2713 = vmatprep.subr.mxu0 0.0
        %2714 = vmatpush1.msra.mxu0 %v2434
        %2715 = vmatprep.subr.mxu0 0.0
        %2716 = vmatpush1.msra.mxu0 %v2433
        %2717 = vmatprep.subr.mxu0 0.0
        %2718 = vmatpush1.msra.mxu0 %v2432
        %2719 = vmatprep.subr.mxu0 0.0
        %2720 = vmatpush1.msra.mxu0 %v2431
        %2721 = vmatprep.subr.mxu0 0.0
        %2722 = vmatpush2.msra.mxu0 0.0
        %2723 = vmatprep.subr.mxu0 0.0
        %2724 = vmatpush2.msra.mxu0 0.0
        %2725 = vmatprep.subr.mxu0 0.0
        %2726 = vmatpush2.msra.mxu0 0.0
        %2727 = vmatprep.subr.mxu0 0.0
        %2728 = vmatpush2.msra.mxu0 0.0
        %2729 = vmatprep.subr.mxu0 0.0
        %2730 = vmatpush2.msra.mxu0 0.0
        %2731 = vmatprep.subr.mxu0 0.0
        %2732 = vmatpush2.msra.mxu0 0.0
        %2733 = vmatprep.subr.mxu0 0.0
        %2734 = vmatpush2.msra.mxu0 0.0
        %2735 = vmatprep.subr.mxu0 0.0
        %2736 = vmatpush2.msra.mxu0 0.0
        %2737 = vmatprep.subr.mxu0 0.0
        %2738 = vmatpush2.msra.mxu0 0.0
        %2739 = vmatprep.subr.mxu0 0.0
        %2740 = vmatpush2.msra.mxu0 0.0
        %2741 = vmatprep.subr.mxu0 0.0
        %2742 = vmatpush2.msra.mxu0 0.0
        %2743 = vmatprep.subr.mxu0 0.0
        %2744 = vmatpush2.msra.mxu0 0.0
        %2745 = vmatprep.subr.mxu0 0.0
        %2746 = vmatpush2.msra.mxu0 0.0
        %2747 = vmatprep.subr.mxu0 0.0
        %2748 = vmatpush2.msra.mxu0 0.0
        %2749 = vmatprep.subr.mxu0 0.0
        %2750 = vmatpush2.msra.mxu0 0.0
        %2751 = vmatprep.subr.mxu0 0.0
        %2752 = vmatpush2.msra.mxu0 0.0
        %2753 = vmatprep.mubr.f32.mxu0 0.0
        %2754 = vmatmul.mubr.f32.gmra.mxu0 %v2684
        %v2755 = vpop.f32.mrf.mxu0
        %v2756 = vadd.f32 %v2675, %v2755
        %v2757 = vpop.f32.mrf.mxu0
        %2758 = vmatprep.mubr.f32.mxu0 0.0
        %2759 = vmatmul.mubr.f32.gmra.mxu0 %v2687
        %v2760 = vpop.f32.mrf.mxu0
        %v2761 = vadd.f32 %v2680, %v2760
        %v2762 = vpop.f32.mrf.mxu0
        %2763 = vdwg.mxu0
        %vm2764 = vcmp.eq.s32.totalorder %v2427, %v2100
        %v2765 = vsel %vm2764, 1, 0
        %v2766 = vcvt.s32.f32 %v2765
        %v2767 = vld [vmem:[%s12 + $0x40] sm:$0xff]
        %v2768 = vld [vmem:[%s12 + $0x48] sm:$0xff]
        %v2769 = vld [vmem:[%s12 + $0x50] sm:$0xff]
        %v2770 = vld [vmem:[%s12 + $0x58] sm:$0xff]
        %v2771 = vsel %vm925, %v2103, 0
        %v2774 = vsel %vm925, %v2766, 0
        %2776 = vmatprep.subr.mxu0 0.0
        %2777 = vmatpush1.msra.mxu0 0.0
        %2778 = vmatprep.subr.mxu0 0.0
        %2779 = vmatpush1.msra.mxu0 0.0
        %2780 = vmatprep.subr.mxu0 0.0
        %2781 = vmatpush1.msra.mxu0 0.0
        %2782 = vmatprep.subr.mxu0 0.0
        %2783 = vmatpush1.msra.mxu0 0.0
        %2784 = vmatprep.subr.mxu0 0.0
        %2785 = vmatpush1.msra.mxu0 0.0
        %2786 = vmatprep.subr.mxu0 0.0
        %2787 = vmatpush1.msra.mxu0 0.0
        %2788 = vmatprep.subr.mxu0 0.0
        %2789 = vmatpush1.msra.mxu0 0.0
        %2790 = vmatprep.subr.mxu0 0.0
        %2791 = vmatpush1.msra.mxu0 0.0
        %2792 = vmatprep.subr.mxu0 0.0
        %2793 = vmatpush1.msra.mxu0 0.0
        %2794 = vmatprep.subr.mxu0 0.0
        %2795 = vmatpush1.msra.mxu0 0.0
        %2796 = vmatprep.subr.mxu0 0.0
        %2797 = vmatpush1.msra.mxu0 0.0
        %2798 = vmatprep.subr.mxu0 0.0
        %2799 = vmatpush1.msra.mxu0 0.0
        %2800 = vmatprep.subr.mxu0 0.0
        %2801 = vmatpush1.msra.mxu0 0.0
        %2802 = vmatprep.subr.mxu0 0.0
        %2803 = vmatpush1.msra.mxu0 0.0
        %2804 = vmatprep.subr.mxu0 0.0
        %2805 = vmatpush1.msra.mxu0 0.0
        %2806 = vmatprep.subr.mxu0 0.0
        %2807 = vmatpush1.msra.mxu0 %v2426
        %2808 = vmatprep.subr.mxu0 0.0
        %2809 = vmatpush2.msra.mxu0 0.0
        %2810 = vmatprep.subr.mxu0 0.0
        %2811 = vmatpush2.msra.mxu0 0.0
        %2812 = vmatprep.subr.mxu0 0.0
        %2813 = vmatpush2.msra.mxu0 0.0
        %2814 = vmatprep.subr.mxu0 0.0
        %2815 = vmatpush2.msra.mxu0 0.0
        %2816 = vmatprep.subr.mxu0 0.0
        %2817 = vmatpush2.msra.mxu0 0.0
        %2818 = vmatprep.subr.mxu0 0.0
        %2819 = vmatpush2.msra.mxu0 0.0
        %2820 = vmatprep.subr.mxu0 0.0
        %2821 = vmatpush2.msra.mxu0 0.0
        %2822 = vmatprep.subr.mxu0 0.0
        %2823 = vmatpush2.msra.mxu0 0.0
        %2824 = vmatprep.subr.mxu0 0.0
        %2825 = vmatpush2.msra.mxu0 0.0
        %2826 = vmatprep.subr.mxu0 0.0
        %2827 = vmatpush2.msra.mxu0 0.0
        %2828 = vmatprep.subr.mxu0 0.0
        %2829 = vmatpush2.msra.mxu0 0.0
        %2830 = vmatprep.subr.mxu0 0.0
        %2831 = vmatpush2.msra.mxu0 0.0
        %2832 = vmatprep.subr.mxu0 0.0
        %2833 = vmatpush2.msra.mxu0 0.0
        %2834 = vmatprep.subr.mxu0 0.0
        %2835 = vmatpush2.msra.mxu0 0.0
        %2836 = vmatprep.subr.mxu0 0.0
        %2837 = vmatpush2.msra.mxu0 0.0
        %2838 = vmatprep.subr.mxu0 0.0
        %2839 = vmatpush2.msra.mxu0 0.0
        %2840 = vmatprep.mubr.f32.mxu0 0.0
        %2841 = vmatmul.mubr.f32.gmra.mxu0 %v2771
        %v2842 = vpop.f32.mrf.mxu0
        %v2843 = vadd.f32 0.0, %v2842
        %v2844 = vpop.f32.mrf.mxu0
        %2845 = vmatprep.mubr.f32.mxu0 0.0
        %2846 = vmatmul.mubr.f32.gmra.mxu0 %v2774
        %v2847 = vpop.f32.mrf.mxu0
        %v2848 = vadd.f32 0.0, %v2847
        %v2849 = vpop.f32.mrf.mxu0
        %2850 = vdwg.mxu0
        %v2852 = vsel %vm1074, %v2843, 0
        %v2855 = vsel %vm1074, %v2848, 0
        %2857 = vmatprep.subr.mxu0 0.0
        %2858 = vmatpush1.msra.mxu0 0.0
        %2859 = vmatprep.subr.mxu0 0.0
        %2860 = vmatpush1.msra.mxu0 0.0
        %2861 = vmatprep.subr.mxu0 0.0
        %2862 = vmatpush1.msra.mxu0 0.0
        %2863 = vmatprep.subr.mxu0 0.0
        %2864 = vmatpush1.msra.mxu0 0.0
        %2865 = vmatprep.subr.mxu0 0.0
        %2866 = vmatpush1.msra.mxu0 0.0
        %2867 = vmatprep.subr.mxu0 0.0
        %2868 = vmatpush1.msra.mxu0 0.0
        %2869 = vmatprep.subr.mxu0 0.0
        %2870 = vmatpush1.msra.mxu0 0.0
        %2871 = vmatprep.subr.mxu0 0.0
        %2872 = vmatpush1.msra.mxu0 0.0
        %2873 = vmatprep.subr.mxu0 0.0
        %2874 = vmatpush1.msra.mxu0 0.0
        %2875 = vmatprep.subr.mxu0 0.0
        %2876 = vmatpush1.msra.mxu0 0.0
        %2877 = vmatprep.subr.mxu0 0.0
        %2878 = vmatpush1.msra.mxu0 0.0
        %2879 = vmatprep.subr.mxu0 0.0
        %2880 = vmatpush1.msra.mxu0 0.0
        %2881 = vmatprep.subr.mxu0 0.0
        %2882 = vmatpush1.msra.mxu0 %v2770
        %2883 = vmatprep.subr.mxu0 0.0
        %2884 = vmatpush1.msra.mxu0 %v2769
        %2885 = vmatprep.subr.mxu0 0.0
        %2886 = vmatpush1.msra.mxu0 %v2768
        %2887 = vmatprep.subr.mxu0 0.0
        %2888 = vmatpush1.msra.mxu0 %v2767
        %2889 = vmatprep.subr.mxu0 0.0
        %2890 = vmatpush2.msra.mxu0 0.0
        %2891 = vmatprep.subr.mxu0 0.0
        %2892 = vmatpush2.msra.mxu0 0.0
        %2893 = vmatprep.subr.mxu0 0.0
        %2894 = vmatpush2.msra.mxu0 0.0
        %2895 = vmatprep.subr.mxu0 0.0
        %2896 = vmatpush2.msra.mxu0 0.0
        %2897 = vmatprep.subr.mxu0 0.0
        %2898 = vmatpush2.msra.mxu0 0.0
        %2899 = vmatprep.subr.mxu0 0.0
        %2900 = vmatpush2.msra.mxu0 0.0
        %2901 = vmatprep.subr.mxu0 0.0
        %2902 = vmatpush2.msra.mxu0 0.0
        %2903 = vmatprep.subr.mxu0 0.0
        %2904 = vmatpush2.msra.mxu0 0.0
        %2905 = vmatprep.subr.mxu0 0.0
        %2906 = vmatpush2.msra.mxu0 0.0
        %2907 = vmatprep.subr.mxu0 0.0
        %2908 = vmatpush2.msra.mxu0 0.0
        %2909 = vmatprep.subr.mxu0 0.0
        %2910 = vmatpush2.msra.mxu0 0.0
        %2911 = vmatprep.subr.mxu0 0.0
        %2912 = vmatpush2.msra.mxu0 0.0
        %2913 = vmatprep.subr.mxu0 0.0
        %2914 = vmatpush2.msra.mxu0 0.0
        %2915 = vmatprep.subr.mxu0 0.0
        %2916 = vmatpush2.msra.mxu0 0.0
        %2917 = vmatprep.subr.mxu0 0.0
        %2918 = vmatpush2.msra.mxu0 0.0
        %2919 = vmatprep.subr.mxu0 0.0
        %2920 = vmatpush2.msra.mxu0 0.0
        %2921 = vmatprep.mubr.f32.mxu0 0.0
        %2922 = vmatmul.mubr.f32.gmra.mxu0 %v2852
        %v2923 = vpop.f32.mrf.mxu0
        %v2924 = vadd.f32 0.0, %v2923
        %v2925 = vpop.f32.mrf.mxu0
        %2926 = vmatprep.mubr.f32.mxu0 0.0
        %2927 = vmatmul.mubr.f32.gmra.mxu0 %v2855
        %v2928 = vpop.f32.mrf.mxu0
        %v2929 = vadd.f32 0.0, %v2928
        %v2930 = vpop.f32.mrf.mxu0
        %2931 = vdwg.mxu0
        %v2932 = vadd.f32 %v2756, %v2924
        %v2933 = vadd.f32 %v2761, %v2929
        %vm2934 = vcmp.eq.s32.totalorder %v2427, %v2259
        %v2935 = vsel %vm2934, 1, 0
        %v2936 = vcvt.s32.f32 %v2935
        %v2937 = vld [vmem:[%s12 + $0x60] sm:$0xff]
        %v2938 = vld [vmem:[%s12 + $0x68] sm:$0xff]
        %v2939 = vld [vmem:[%s12 + $0x70] sm:$0xff]
        %v2940 = vld [vmem:[%s12 + $0x78] sm:$0xff]
        %v2941 = vsel %vm925, %v2262, 0
        %v2944 = vsel %vm925, %v2936, 0
        %2946 = vmatprep.subr.mxu0 0.0
        %2947 = vmatpush1.msra.mxu0 0.0
        %2948 = vmatprep.subr.mxu0 0.0
        %2949 = vmatpush1.msra.mxu0 0.0
        %2950 = vmatprep.subr.mxu0 0.0
        %2951 = vmatpush1.msra.mxu0 0.0
        %2952 = vmatprep.subr.mxu0 0.0
        %2953 = vmatpush1.msra.mxu0 0.0
        %2954 = vmatprep.subr.mxu0 0.0
        %2955 = vmatpush1.msra.mxu0 0.0
        %2956 = vmatprep.subr.mxu0 0.0
        %2957 = vmatpush1.msra.mxu0 0.0
        %2958 = vmatprep.subr.mxu0 0.0
        %2959 = vmatpush1.msra.mxu0 0.0
        %2960 = vmatprep.subr.mxu0 0.0
        %2961 = vmatpush1.msra.mxu0 0.0
        %2962 = vmatprep.subr.mxu0 0.0
        %2963 = vmatpush1.msra.mxu0 0.0
        %2964 = vmatprep.subr.mxu0 0.0
        %2965 = vmatpush1.msra.mxu0 0.0
        %2966 = vmatprep.subr.mxu0 0.0
        %2967 = vmatpush1.msra.mxu0 0.0
        %2968 = vmatprep.subr.mxu0 0.0
        %2969 = vmatpush1.msra.mxu0 0.0
        %2970 = vmatprep.subr.mxu0 0.0
        %2971 = vmatpush1.msra.mxu0 0.0
        %2972 = vmatprep.subr.mxu0 0.0
        %2973 = vmatpush1.msra.mxu0 0.0
        %2974 = vmatprep.subr.mxu0 0.0
        %2975 = vmatpush1.msra.mxu0 0.0
        %2976 = vmatprep.subr.mxu0 0.0
        %2977 = vmatpush1.msra.mxu0 %v2426
        %2978 = vmatprep.subr.mxu0 0.0
        %2979 = vmatpush2.msra.mxu0 0.0
        %2980 = vmatprep.subr.mxu0 0.0
        %2981 = vmatpush2.msra.mxu0 0.0
        %2982 = vmatprep.subr.mxu0 0.0
        %2983 = vmatpush2.msra.mxu0 0.0
        %2984 = vmatprep.subr.mxu0 0.0
        %2985 = vmatpush2.msra.mxu0 0.0
        %2986 = vmatprep.subr.mxu0 0.0
        %2987 = vmatpush2.msra.mxu0 0.0
        %2988 = vmatprep.subr.mxu0 0.0
        %2989 = vmatpush2.msra.mxu0 0.0
        %2990 = vmatprep.subr.mxu0 0.0
        %2991 = vmatpush2.msra.mxu0 0.0
        %2992 = vmatprep.subr.mxu0 0.0
        %2993 = vmatpush2.msra.mxu0 0.0
        %2994 = vmatprep.subr.mxu0 0.0
        %2995 = vmatpush2.msra.mxu0 0.0
        %2996 = vmatprep.subr.mxu0 0.0
        %2997 = vmatpush2.msra.mxu0 0.0
        %2998 = vmatprep.subr.mxu0 0.0
        %2999 = vmatpush2.msra.mxu0 0.0
        %3000 = vmatprep.subr.mxu0 0.0
        %3001 = vmatpush2.msra.mxu0 0.0
        %3002 = vmatprep.subr.mxu0 0.0
        %3003 = vmatpush2.msra.mxu0 0.0
        %3004 = vmatprep.subr.mxu0 0.0
        %3005 = vmatpush2.msra.mxu0 0.0
        %3006 = vmatprep.subr.mxu0 0.0
        %3007 = vmatpush2.msra.mxu0 0.0
        %3008 = vmatprep.subr.mxu0 0.0
        %3009 = vmatpush2.msra.mxu0 0.0
        %3010 = vmatprep.mubr.f32.mxu0 0.0
        %3011 = vmatmul.mubr.f32.gmra.mxu0 %v2941
        %v3012 = vpop.f32.mrf.mxu0
        %v3013 = vadd.f32 0.0, %v3012
        %v3014 = vpop.f32.mrf.mxu0
        %3015 = vmatprep.mubr.f32.mxu0 0.0
        %3016 = vmatmul.mubr.f32.gmra.mxu0 %v2944
        %v3017 = vpop.f32.mrf.mxu0
        %v3018 = vadd.f32 0.0, %v3017
        %v3019 = vpop.f32.mrf.mxu0
        %3020 = vdwg.mxu0
        %v3022 = vsel %vm1074, %v3013, 0
        %v3025 = vsel %vm1074, %v3018, 0
        %3027 = vmatprep.subr.mxu0 0.0
        %3028 = vmatpush1.msra.mxu0 0.0
        %3029 = vmatprep.subr.mxu0 0.0
        %3030 = vmatpush1.msra.mxu0 0.0
        %3031 = vmatprep.subr.mxu0 0.0
        %3032 = vmatpush1.msra.mxu0 0.0
        %3033 = vmatprep.subr.mxu0 0.0
        %3034 = vmatpush1.msra.mxu0 0.0
        %3035 = vmatprep.subr.mxu0 0.0
        %3036 = vmatpush1.msra.mxu0 0.0
        %3037 = vmatprep.subr.mxu0 0.0
        %3038 = vmatpush1.msra.mxu0 0.0
        %3039 = vmatprep.subr.mxu0 0.0
        %3040 = vmatpush1.msra.mxu0 0.0
        %3041 = vmatprep.subr.mxu0 0.0
        %3042 = vmatpush1.msra.mxu0 0.0
        %3043 = vmatprep.subr.mxu0 0.0
        %3044 = vmatpush1.msra.mxu0 0.0
        %3045 = vmatprep.subr.mxu0 0.0
        %3046 = vmatpush1.msra.mxu0 0.0
        %3047 = vmatprep.subr.mxu0 0.0
        %3048 = vmatpush1.msra.mxu0 0.0
        %3049 = vmatprep.subr.mxu0 0.0
        %3050 = vmatpush1.msra.mxu0 0.0
        %3051 = vmatprep.subr.mxu0 0.0
        %3052 = vmatpush1.msra.mxu0 %v2940
        %3053 = vmatprep.subr.mxu0 0.0
        %3054 = vmatpush1.msra.mxu0 %v2939
        %3055 = vmatprep.subr.mxu0 0.0
        %3056 = vmatpush1.msra.mxu0 %v2938
        %3057 = vmatprep.subr.mxu0 0.0
        %3058 = vmatpush1.msra.mxu0 %v2937
        %3059 = vmatprep.subr.mxu0 0.0
        %3060 = vmatpush2.msra.mxu0 0.0
        %3061 = vmatprep.subr.mxu0 0.0
        %3062 = vmatpush2.msra.mxu0 0.0
        %3063 = vmatprep.subr.mxu0 0.0
        %3064 = vmatpush2.msra.mxu0 0.0
        %3065 = vmatprep.subr.mxu0 0.0
        %3066 = vmatpush2.msra.mxu0 0.0
        %3067 = vmatprep.subr.mxu0 0.0
        %3068 = vmatpush2.msra.mxu0 0.0
        %3069 = vmatprep.subr.mxu0 0.0
        %3070 = vmatpush2.msra.mxu0 0.0
        %3071 = vmatprep.subr.mxu0 0.0
        %3072 = vmatpush2.msra.mxu0 0.0
        %3073 = vmatprep.subr.mxu0 0.0
        %3074 = vmatpush2.msra.mxu0 0.0
        %3075 = vmatprep.subr.mxu0 0.0
        %3076 = vmatpush2.msra.mxu0 0.0
        %3077 = vmatprep.subr.mxu0 0.0
        %3078 = vmatpush2.msra.mxu0 0.0
        %3079 = vmatprep.subr.mxu0 0.0
        %3080 = vmatpush2.msra.mxu0 0.0
        %3081 = vmatprep.subr.mxu0 0.0
        %3082 = vmatpush2.msra.mxu0 0.0
        %3083 = vmatprep.subr.mxu0 0.0
        %3084 = vmatpush2.msra.mxu0 0.0
        %3085 = vmatprep.subr.mxu0 0.0
        %3086 = vmatpush2.msra.mxu0 0.0
        %3087 = vmatprep.subr.mxu0 0.0
        %3088 = vmatpush2.msra.mxu0 0.0
        %3089 = vmatprep.subr.mxu0 0.0
        %3090 = vmatpush2.msra.mxu0 0.0
        %3091 = vmatprep.mubr.f32.mxu0 0.0
        %3092 = vmatmul.mubr.f32.gmra.mxu0 %v3022
        %v3093 = vpop.f32.mrf.mxu0
        %v3094 = vadd.f32 0.0, %v3093
        %v3095 = vpop.f32.mrf.mxu0
        %3096 = vmatprep.mubr.f32.mxu0 0.0
        %3097 = vmatmul.mubr.f32.gmra.mxu0 %v3025
        %v3098 = vpop.f32.mrf.mxu0
        %v3099 = vadd.f32 0.0, %v3098
        %v3100 = vpop.f32.mrf.mxu0
        %3101 = vdwg.mxu0
        %v3102 = vadd.f32 %v2932, %v3094
        %v3103 = vadd.f32 %v2933, %v3099
        %v3104 = vld [vmem:[#allocation2] sm:$0x1]
        %v3106 = vlaneseq
        %v3107 = vshrl.u32 %v3106, 7
        %v3108 = vsub.s32 0, %v3107
        %v3109 = vrot.slane %v3104, %v3108
        %v3111 = vadd.f32 %v3102, %v3109
        %v3112 = vadd.f32 %v3103, %v3109
        %v3113 = vtanh.pop %v3111
        %v3114 = vtanh.pop %v3112
        %vm3115 = vcmask 7168
        %3116 = vst.msk [vmem:[%s556] sm:$0xff] %vm3115, %v3113
        %3117 = vst.msk [vmem:[%s556 + $0x8] sm:$0xff] %vm3115, %v3114
        %vm3118 = vcmask 122880
        %3119 = vst.msk [vmem:[%s537] sm:$0x1] %vm3118, %v1644
        %3121 = vrot.lane.b32.xlu0 %v1644, 112
        %v3122 = vpop.permute.xlu0 %3121
        %3124 = vst.msk [vmem:[%s543] sm:$0x1] %vm3118, %v3122
        %p3125 = scmp.lt.s32.totalorder %s36, 1
        %s3126 = scalar_select %p3125, %s36, 1
        %s3127 = smul.addr %s3126, 2
        %s3128 = smul.addr %s3127, 8
        %s3129 = scalar_lea.vmem %s14, %s3128
        %s3130 = sand.u32 %s374, 1
        %s3131 = scalar_lea.sflag [#allocation4], %s3130
        %s3132 = sand.u32 %s374, 1
        %s3133 = scalar_lea.vmem [#allocation3], %s3132
        %s3134 = sand.u32 %s400, 1
        %s3135 = scalar_lea.sflag [#allocation6], %s3134
        %s3136 = sand.u32 %s400, 1
        %s3137 = scalar_lea.vmem [#allocation5], %s3136
        // Predicated region
        $region77: #{vae_forward.1} parent=75 // pred_check
          %p3138 = pneg %p358
        $region78: #{vae_forward.1} parent=75 // pred_check_branch
          %3140 = sbr.rel (%p3138) target = $region80
        $region79: #{vae_forward.1} parent=75 // pred_region
          _
        $region80: #{vae_forward.1} parent=75 // pred_fallthru
          _
        // Predicated region
        $region81: #{vae_forward.1} parent=75 // pred_check
          %p3141 = pneg %p384
        $region82: #{vae_forward.1} parent=75 // pred_check_branch
          %3143 = sbr.rel (%p3141) target = $region84
        $region83: #{vae_forward.1} parent=75 // pred_region
          %s3145 = ssub.s32 16, 16
          %3146 = vsyncadd %s3131, %s3145
          %s3147 = smul.addr %s36, 16
          %s3148 = scalar_lea.hbm %s15, %s3147
          %s3150 = sshll.u32 %s3133, 4
          %s3151 = int_to_ptr.vmem [resolvable:$true] %s3150
          %3153 = dma.vmem_to_hbm [thread:$0]  %s3151, 16, %s3148, %s3131
        $region84: #{vae_forward.1} parent=75 // pred_fallthru
          _
        // Predicated region
        $region85: #{vae_forward.1} parent=75 // pred_check
          %p3154 = pneg %p410
        $region86: #{vae_forward.1} parent=75 // pred_check_branch
          %3156 = sbr.rel (%p3154) target = $region88
        $region87: #{vae_forward.1} parent=75 // pred_region
          %s3158 = ssub.s32 16, 16
          %3159 = vsyncadd %s3135, %s3158
          %s3160 = smul.addr %s36, 16
          %s3161 = scalar_lea.hbm %s16, %s3160
          %s3163 = sshll.u32 %s3137, 4
          %s3164 = int_to_ptr.vmem [resolvable:$true] %s3163
          %3166 = dma.vmem_to_hbm [thread:$0]  %s3164, 16, %s3161, %s3135
        $region88: #{vae_forward.1} parent=75 // pred_fallthru
          _
      $region76: #{vae_forward.1} parent=5 // pred_fallthru
        _
      %p3167 = scmp.le.s32.totalorder 2, %s31
      // Predicated region
      $region89: #{vae_forward.1} parent=5 // pred_check
        %p3168 = pneg %p3167
      $region90: #{vae_forward.1} parent=5 // pred_check_branch
        %3170 = sbr.rel (%p3168) target = $region92
      $region91: #{vae_forward.1} parent=5 // pred_region
        %s3171 = ssub.s32 %s31, 2
        // Predicated region
        $region93: #{vae_forward.1} parent=91 // pred_check
          %p3172 = pneg %p364
        $region94: #{vae_forward.1} parent=91 // pred_check_branch
          %3174 = sbr.rel (%p3172) target = $region96
        $region95: #{vae_forward.1} parent=91 // pred_region
          %p3175 = scmp.lt.s32.totalorder %s37, 1
          %s3176 = scalar_select %p3175, %s37, 1
          %s3177 = smul.addr %s3176, 2
          %s3178 = smul.addr %s3177, 8
          %s3179 = scalar_lea.vmem %s14, %s3178
        $region96: #{vae_forward.1} parent=91 // pred_fallthru
          _
        // Predicated region
        $region97: #{vae_forward.1} parent=91 // pred_check
          %p3180 = pneg %p390
        $region98: #{vae_forward.1} parent=91 // pred_check_branch
          %3182 = sbr.rel (%p3180) target = $region100
        $region99: #{vae_forward.1} parent=91 // pred_region
          %s3183 = sand.u32 %s375, 1
          %s3184 = scalar_lea.sflag [#allocation4], %s3183
          %s3185 = sand.u32 %s375, 1
          %s3186 = scalar_lea.vmem [#allocation3], %s3185
          %3187 = dma.done %s3184, 16
        $region100: #{vae_forward.1} parent=91 // pred_fallthru
          _
        // Predicated region
        $region101: #{vae_forward.1} parent=91 // pred_check
          %p3188 = pneg %p416
        $region102: #{vae_forward.1} parent=91 // pred_check_branch
          %3190 = sbr.rel (%p3188) target = $region104
        $region103: #{vae_forward.1} parent=91 // pred_region
          %s3191 = sand.u32 %s401, 1
          %s3192 = scalar_lea.sflag [#allocation6], %s3191
          %s3193 = sand.u32 %s401, 1
          %s3194 = scalar_lea.vmem [#allocation5], %s3193
          %3195 = dma.done %s3192, 16
        $region104: #{vae_forward.1} parent=91 // pred_fallthru
          _
      $region92: #{vae_forward.1} parent=5 // pred_fallthru
        _
    $region6: #{vae_forward.1} parent=1 // loop_footer
      %s35 = sadd.s32 1, %s31
    $region7: #{vae_forward.1} parent=1 // loop_footer_branch
      %30 = sbr.rel target = $region3
    $region8: #{vae_forward.1} parent=1 // loop_exit
      _
    %3196 = vsyncpa [#allocation4], 1
    %s3197 = scalar_lea.sflag [#allocation4], 1
    %3198 = vsyncpa %s3197, 1
    %3199 = vsyncpa [#allocation6], 1
    %s3200 = scalar_lea.sflag [#allocation6], 1
    %3201 = vsyncpa %s3200, 1

</llo_original>
